<compile_context>
chip_gen: v7x
topology: tpu7x:2x2x1
jax: 0.10.0
libtpu: 0.0.40
codegen_flags: <defaults>
</compile_context>

<pallas_src>
import jax
import jax.numpy as jnp
from jax import lax
from jax.experimental import pallas as pl
from jax.experimental.pallas import tpu as pltpu

# ----------------------------- tiny RoBERTa config -----------------------------
VOCAB_SIZE   = 100
MAX_POS      = 24            # must stay >= SEQ_LEN + PAD_IDX + 1
HIDDEN       = 32
NUM_HEADS    = 2
HEAD_DIM     = HIDDEN // NUM_HEADS
INTERMEDIATE = 64
NUM_LAYERS   = 2
NUM_CLASSES  = 3
PAD_IDX      = 1
LN_EPS       = 1e-5


# ----------------------------- in-kernel helpers -------------------------------
def _layernorm(x, g, b):
    mu = jnp.mean(x, axis=-1, keepdims=True)
    var = jnp.mean(jnp.square(x - mu), axis=-1, keepdims=True)
    return (x - mu) * lax.rsqrt(var + LN_EPS) * g + b


def _gelu(x):
    # TODO(synk): HF RoBERTa uses exact erf-GELU; tanh approximation used here (EUP-friendly).
    return 0.5 * x * (1.0 + jnp.tanh(0.7978845608028654 * (x + 0.044715 * x * x * x)))


# -------------------------------- fused kernel ----------------------------------
def _make_fused_kernel(B, S):
    BS = B * S
    scale = 1.0 / (HEAD_DIM ** 0.5)
    bf16 = jnp.bfloat16

    def kernel(ids_ref, pos_ref, mask_ref,
               wemb_ref, pemb_ref, temb_ref, eg_ref, eb_ref,
               wq_ref, bq_ref, wk_ref, bk_ref, wv_ref, bv_ref,
               wo_ref, bo_ref, ln1g_ref, ln1b_ref,
               w1_ref, b1_ref, w2_ref, b2_ref, ln2g_ref, ln2b_ref,
               fcw_ref, fcb_ref, logits_ref):
        # ---- embeddings: in-VMEM "gather" via bf16 one-hot matmuls (f32 accumulate) ----
        # TODO(synk): at real vocab sizes (50265) keep word_emb in HBM (memory_space=pl.ANY)
        # and gather rows via scalar-prefetched ids / make_async_copy instead of one-hots.
        word_oh = (ids_ref[...] ==
                   lax.broadcasted_iota(jnp.int32, (BS, VOCAB_SIZE), 1)).astype(bf16)
        pos_oh = (pos_ref[...] ==
                  lax.broadcasted_iota(jnp.int32, (BS, MAX_POS), 1)).astype(bf16)
        x = (jnp.dot(word_oh, wemb_ref[...], preferred_element_type=jnp.float32)
             + jnp.dot(pos_oh, pemb_ref[...], preferred_element_type=jnp.float32)
             + temb_ref[...])                               # token_type_ids are all zero
        x = _layernorm(x, eg_ref[...], eb_ref[...])         # (BS, H) f32

        # ---- additive attention bias, built ONCE, kept (B*NH, 1, S): the broadcast
        # along the query axis happens inside the add (no (B, S, S) materialization). ----
        neg = ((1.0 - mask_ref[...]) * (-1e9))[:, None, :]   # (B, 1, S) f32
        bias = jnp.concatenate([neg] * NUM_HEADS, axis=0)    # (B*NH, 1, S), head-major

        # ---- transformer encoder layers (static unroll over layer-stacked weights) ----
        # TODO(synk): at real sizes convert the layer loop into an "arbitrary" grid axis
        # with per-layer weight BlockSpecs (streams layer l+1 weights under layer l
        # compute; required on v7x where all-resident weights exceed 64 MiB VMEM) and add
        # a "parallel" batch/seq-tile axis so both v7x TensorCores are used; size tiles
        # to 128-wide (v5e) / 256-wide (v6e, v7x) MXU shapes and raise vmem_limit_bytes.
        for l in range(NUM_LAYERS):
            xb = x.astype(bf16)

            # Head-major Q/K/V projections from per-head pre-split weights -> no
            # non-128-aligned lane slicing of the projection output (the relayout
            # source flagged in review).  At real H (multiple of 128) use one fused
            # (BS, 3H) projection with aligned splits instead.
            q_l, k_l, v_l = [], [], []
            for h in range(NUM_HEADS):
                q_h = (jnp.dot(xb, wq_ref[l, h], preferred_element_type=jnp.float32)
                       + bq_ref[l, h]) * scale
                k_h = (jnp.dot(xb, wk_ref[l, h], preferred_element_type=jnp.float32)
                       + bk_ref[l, h])
                v_h = (jnp.dot(xb, wv_ref[l, h], preferred_element_type=jnp.float32)
                       + bv_ref[l, h])
                q_l.append(q_h.reshape(B, S, HEAD_DIM).astype(bf16))
                k_l.append(k_h.reshape(B, S, HEAD_DIM).astype(bf16))
                v_l.append(v_h.reshape(B, S, HEAD_DIM).astype(bf16))

            # heads folded into the batch dim -> ONE scores einsum, ONE softmax,
            # ONE context einsum for all heads (no per-head attention loop).
            qs = jnp.concatenate(q_l, axis=0)                # (B*NH, S, HD) bf16
            ks = jnp.concatenate(k_l, axis=0)
            vs = jnp.concatenate(v_l, axis=0)

            scores = jnp.einsum('bqd,bkd->bqk', qs, ks,
                                preferred_element_type=jnp.float32) + bias
            scores = scores - jnp.max(scores, axis=-1, keepdims=True)
            p = jnp.exp(scores)
            # approx reciprocal -> EUP slot; swap for an exact divide if bit-parity
            # with torch softmax is required.
            p = p * pl.reciprocal(jnp.sum(p, axis=-1, keepdims=True), approx=True)
            ctx = jnp.einsum('bqk,bkd->bqd', p.astype(bf16), vs,
                             preferred_element_type=jnp.float32)   # (B*NH, S, HD)

            # output projection: per-head partials against pre-split wo rows.  The
            # ctx slices are cheap major-dim slices; this avoids a (B,S,NH,HD)->(B,S,H)
            # transpose which would force a relayout at this non-128-aligned head width.
            attn = bo_ref[l]                                  # (1, H) f32
            for h in range(NUM_HEADS):
                ctx_h = ctx[h * B:(h + 1) * B].reshape(BS, HEAD_DIM).astype(bf16)
                attn = attn + jnp.dot(ctx_h, wo_ref[l, h],
                                      preferred_element_type=jnp.float32)

            h1 = _layernorm(x + attn, ln1g_ref[l], ln1b_ref[l])       # post-LN (RoBERTa)
            ff = _gelu(jnp.dot(h1.astype(bf16), w1_ref[l],
                               preferred_element_type=jnp.float32) + b1_ref[l])
            ff = jnp.dot(ff.astype(bf16), w2_ref[l],
                         preferred_element_type=jnp.float32) + b2_ref[l]
            x = _layernorm(h1 + ff, ln2g_ref[l], ln2b_ref[l])

        # ---- mean-pool over ALL positions (matches torch .mean(dim=1), padding
        # included) as a plain sublane reduction: no iotas / where / extra MXU call. ----
        pooled = jnp.sum(x.reshape(B, S, HIDDEN), axis=1) * (1.0 / S)   # (B, H) f32
        # dropout(0.1) is identity at inference
        logits_ref[...] = (jnp.dot(pooled.astype(bf16), fcw_ref[...],
                                   preferred_element_type=jnp.float32) + fcb_ref[...])

    return kernel


# ------------------------------ parameters / model ------------------------------
def init_params(key):
    def normal(k, shape, dtype=jnp.bfloat16):
        # matmul weights stored bf16 (native MXU input); biases / LN params stay f32.
        return (0.02 * jax.random.normal(k, shape)).astype(dtype)

    ks = jax.random.split(key, 10)
    L, H, I, NH, HD = NUM_LAYERS, HIDDEN, INTERMEDIATE, NUM_HEADS, HEAD_DIM
    return {
        "word_emb": normal(ks[0], (VOCAB_SIZE, H)),
        "pos_emb":  normal(ks[1], (MAX_POS, H)),
        "type_emb": normal(ks[2], (1, H), jnp.float32),
        "emb_ln_g": jnp.ones((1, H), jnp.float32),
        "emb_ln_b": jnp.zeros((1, H), jnp.float32),
        # layer-stacked, head-pre-split attention weights (zero-cost layout prep)
        "wq": normal(ks[3], (L, NH, H, HD)),
        "bq": jnp.zeros((L, NH, 1, HD), jnp.float32),
        "wk": normal(ks[4], (L, NH, H, HD)),
        "bk": jnp.zeros((L, NH, 1, HD), jnp.float32),
        "wv": normal(ks[5], (L, NH, H, HD)),
        "bv": jnp.zeros((L, NH, 1, HD), jnp.float32),
        "wo": normal(ks[6], (L, NH, HD, H)),
        "bo": jnp.zeros((L, 1, H), jnp.float32),
        "ln1_g": jnp.ones((L, 1, H), jnp.float32),
        "ln1_b": jnp.zeros((L, 1, H), jnp.float32),
        "w1": normal(ks[7], (L, H, I)),
        "b1": jnp.zeros((L, 1, I), jnp.float32),
        "w2": normal(ks[8], (L, I, H)),
        "b2": jnp.zeros((L, 1, H), jnp.float32),
        "ln2_g": jnp.ones((L, 1, H), jnp.float32),
        "ln2_b": jnp.zeros((L, 1, H), jnp.float32),
        "fc_w": normal(ks[9], (H, NUM_CLASSES)),
        "fc_b": jnp.zeros((1, NUM_CLASSES), jnp.float32),
    }


def roberta_classifier_forward(params, input_ids, attention_mask):
    B, S = input_ids.shape
    # RoBERTa padding-aware position ids (cheap int glue in the wrapper).
    # NOTE: MAX_POS must stay >= S + PAD_IDX + 1 if S is scaled up.
    mask_ids = (input_ids != PAD_IDX).astype(jnp.int32)
    position_ids = jnp.cumsum(mask_ids, axis=1) * mask_ids + PAD_IDX

    ids_flat = input_ids.reshape(B * S, 1).astype(jnp.int32)
    pos_flat = position_ids.reshape(B * S, 1).astype(jnp.int32)
    amask = attention_mask.astype(jnp.float32)

    args = (ids_flat, pos_flat, amask,
            params["word_emb"], params["pos_emb"], params["type_emb"],
            params["emb_ln_g"], params["emb_ln_b"],
            params["wq"], params["bq"], params["wk"], params["bk"],
            params["wv"], params["bv"], params["wo"], params["bo"],
            params["ln1_g"], params["ln1_b"],
            params["w1"], params["b1"], params["w2"], params["b2"],
            params["ln2_g"], params["ln2_b"],
            params["fc_w"], params["fc_b"])

    # Everything (bf16 weights ~40 KB + activations ~few KB) fits in VMEM on every
    # generation, so a single grid-less pallas_call keeps all intermediates resident.
    # At real RoBERTa sizes: layer grid axis ("arbitrary") with streamed weights,
    # "parallel" batch axis for v7x megacore, and pltpu.CompilerParams(vmem_limit_bytes).
    return pl.pallas_call(
        _make_fused_kernel(B, S),
        out_shape=jax.ShapeDtypeStruct((B, NUM_CLASSES), jnp.float32),
        in_specs=[pl.BlockSpec(memory_space=pltpu.MemorySpace.VMEM)] * len(args),
        out_specs=pl.BlockSpec(memory_space=pltpu.MemorySpace.VMEM),
    )(*args)


# ------------------------------------- main -------------------------------------
if __name__ == "__main__":
    B, S = 2, 8
    key = jax.random.PRNGKey(0)
    k_ids, k_par = jax.random.split(key)

    input_ids = jax.random.randint(k_ids, (B, S), 2, VOCAB_SIZE).astype(jnp.int32)
    attention_mask = jnp.array([[1] * S, [1] * (S - 3) + [0] * 3], dtype=jnp.float32)
    input_ids = jnp.where(attention_mask > 0, input_ids, PAD_IDX).astype(jnp.int32)

    params = init_params(k_par)
    fwd = jax.jit(roberta_classifier_forward)
    logits = fwd(params, input_ids, attention_mask)
    logits = jax.block_until_ready(logits)

    assert logits.shape == (B, NUM_CLASSES)
    assert bool(jnp.all(jnp.isfinite(logits)))
    print("KERNEL_OK")
</pallas_src>

<mosaic_0001>
module attributes {stable_mosaic.version = 11 : i64} {
  func.func @kernel(%arg0: memref<16x1xi32, #tpu.memory_space<vmem>>, %arg1: memref<16x1xi32, #tpu.memory_space<vmem>>, %arg2: memref<2x8xf32, #tpu.memory_space<vmem>>, %arg3: memref<100x32xbf16, #tpu.memory_space<vmem>>, %arg4: memref<24x32xbf16, #tpu.memory_space<vmem>>, %arg5: memref<1x32xf32, #tpu.memory_space<vmem>>, %arg6: memref<1x32xf32, #tpu.memory_space<vmem>>, %arg7: memref<1x32xf32, #tpu.memory_space<vmem>>, %arg8: memref<2x2x32x16xbf16, #tpu.memory_space<vmem>>, %arg9: memref<2x2x1x16xf32, #tpu.memory_space<vmem>>, %arg10: memref<2x2x32x16xbf16, #tpu.memory_space<vmem>>, %arg11: memref<2x2x1x16xf32, #tpu.memory_space<vmem>>, %arg12: memref<2x2x32x16xbf16, #tpu.memory_space<vmem>>, %arg13: memref<2x2x1x16xf32, #tpu.memory_space<vmem>>, %arg14: memref<2x2x16x32xbf16, #tpu.memory_space<vmem>>, %arg15: memref<2x1x32xf32, #tpu.memory_space<vmem>>, %arg16: memref<2x1x32xf32, #tpu.memory_space<vmem>>, %arg17: memref<2x1x32xf32, #tpu.memory_space<vmem>>, %arg18: memref<2x32x64xbf16, #tpu.memory_space<vmem>>, %arg19: memref<2x1x64xf32, #tpu.memory_space<vmem>>, %arg20: memref<2x64x32xbf16, #tpu.memory_space<vmem>>, %arg21: memref<2x1x32xf32, #tpu.memory_space<vmem>>, %arg22: memref<2x1x32xf32, #tpu.memory_space<vmem>>, %arg23: memref<2x1x32xf32, #tpu.memory_space<vmem>>, %arg24: memref<32x3xbf16, #tpu.memory_space<vmem>>, %arg25: memref<1x3xf32, #tpu.memory_space<vmem>>, %arg26: memref<2x3xf32, #tpu.memory_space<vmem>>) attributes {dimension_semantics = [], scalar_prefetch = 0 : i64, scratch_operands = 0 : i64, tpu.core_type = #tpu.core_type<tc>} {
    %c0 = arith.constant 0 : index
    %c0_0 = arith.constant 0 : index
    %0 = vector.load %arg0[%c0, %c0_0] : memref<16x1xi32, #tpu.memory_space<vmem>>, vector<16x1xi32>
    %1 = tpu.iota {dimensions = array<i32: 1>} : vector<16x100xi32>
    %2 = vector.broadcast %0 : vector<16x1xi32> to vector<16x100xi32>
    %3 = arith.cmpi eq, %2, %1 : vector<16x100xi32>
    %4 = arith.extui %3 : vector<16x100xi1> to vector<16x100xi32>
    %5 = arith.sitofp %4 : vector<16x100xi32> to vector<16x100xf32>
    %6 = arith.truncf %5 : vector<16x100xf32> to vector<16x100xbf16>
    %c0_1 = arith.constant 0 : index
    %c0_2 = arith.constant 0 : index
    %7 = vector.load %arg1[%c0_1, %c0_2] : memref<16x1xi32, #tpu.memory_space<vmem>>, vector<16x1xi32>
    %8 = tpu.iota {dimensions = array<i32: 1>} : vector<16x24xi32>
    %9 = vector.broadcast %7 : vector<16x1xi32> to vector<16x24xi32>
    %10 = arith.cmpi eq, %9, %8 : vector<16x24xi32>
    %11 = arith.extui %10 : vector<16x24xi1> to vector<16x24xi32>
    %12 = arith.sitofp %11 : vector<16x24xi32> to vector<16x24xf32>
    %13 = arith.truncf %12 : vector<16x24xf32> to vector<16x24xbf16>
    %c0_3 = arith.constant 0 : index
    %c0_4 = arith.constant 0 : index
    %14 = vector.load %arg3[%c0_3, %c0_4] : memref<100x32xbf16, #tpu.memory_space<vmem>>, vector<100x32xbf16>
    %cst = arith.constant dense<0.000000e+00> : vector<16x32xf32>
    %15 = tpu.matmul %6, %14, %cst {dimension_numbers = #tpu.dot_dimension_numbers<[1], [0], [0], [1], [0, 0, 1, 1], [], []>} : vector<16x100xbf16>, vector<100x32xbf16>, vector<16x32xf32> -> vector<16x32xf32>
    %c0_5 = arith.constant 0 : index
    %c0_6 = arith.constant 0 : index
    %16 = vector.load %arg4[%c0_5, %c0_6] : memref<24x32xbf16, #tpu.memory_space<vmem>>, vector<24x32xbf16>
    %cst_7 = arith.constant dense<0.000000e+00> : vector<16x32xf32>
    %17 = tpu.matmul %13, %16, %cst_7 {dimension_numbers = #tpu.dot_dimension_numbers<[1], [0], [0], [1], [0, 0, 1, 1], [], []>} : vector<16x24xbf16>, vector<24x32xbf16>, vector<16x32xf32> -> vector<16x32xf32>
    %18 = arith.addf %15, %17 : vector<16x32xf32>
    %c0_8 = arith.constant 0 : index
    %c0_9 = arith.constant 0 : index
    %19 = vector.load %arg5[%c0_8, %c0_9] : memref<1x32xf32, #tpu.memory_space<vmem>>, vector<1x32xf32>
    %20 = vector.broadcast %19 : vector<1x32xf32> to vector<16x32xf32>
    %21 = arith.addf %18, %20 : vector<16x32xf32>
    %c0_10 = arith.constant 0 : index
    %c0_11 = arith.constant 0 : index
    %22 = vector.load %arg6[%c0_10, %c0_11] : memref<1x32xf32, #tpu.memory_space<vmem>>, vector<1x32xf32>
    %c0_12 = arith.constant 0 : index
    %c0_13 = arith.constant 0 : index
    %23 = vector.load %arg7[%c0_12, %c0_13] : memref<1x32xf32, #tpu.memory_space<vmem>>, vector<1x32xf32>
    %cst_14 = arith.constant dense<0.000000e+00> : vector<16xf32>
    %24 = vector.multi_reduction <add>, %21, %cst_14 [1] : vector<16x32xf32> to vector<16xf32>
    %25 = vector.shape_cast %24 : vector<16xf32> to vector<16x1xf32>
    %cst_15 = arith.constant 3.200000e+01 : f32
    %26 = vector.broadcast %cst_15 : f32 to vector<16x1xf32>
    %27 = arith.divf %25, %26 : vector<16x1xf32>
    %28 = vector.broadcast %27 : vector<16x1xf32> to vector<16x32xf32>
    %29 = arith.subf %21, %28 : vector<16x32xf32>
    %30 = arith.mulf %29, %29 : vector<16x32xf32>
    %cst_16 = arith.constant dense<0.000000e+00> : vector<16xf32>
    %31 = vector.multi_reduction <add>, %30, %cst_16 [1] : vector<16x32xf32> to vector<16xf32>
    %32 = vector.shape_cast %31 : vector<16xf32> to vector<16x1xf32>
    %cst_17 = arith.constant 3.200000e+01 : f32
    %33 = vector.broadcast %cst_17 : f32 to vector<16x1xf32>
    %34 = arith.divf %32, %33 : vector<16x1xf32>
    %35 = vector.broadcast %27 : vector<16x1xf32> to vector<16x32xf32>
    %36 = arith.subf %21, %35 : vector<16x32xf32>
    %cst_18 = arith.constant 9.99999974E-6 : f32
    %37 = vector.broadcast %cst_18 : f32 to vector<16x1xf32>
    %38 = arith.addf %34, %37 : vector<16x1xf32>
    %39 = math.rsqrt %38 : vector<16x1xf32>
    %40 = vector.broadcast %39 : vector<16x1xf32> to vector<16x32xf32>
    %41 = arith.mulf %36, %40 : vector<16x32xf32>
    %42 = vector.broadcast %22 : vector<1x32xf32> to vector<16x32xf32>
    %43 = arith.mulf %41, %42 : vector<16x32xf32>
    %44 = vector.broadcast %23 : vector<1x32xf32> to vector<16x32xf32>
    %45 = arith.addf %43, %44 : vector<16x32xf32>
    %c0_19 = arith.constant 0 : index
    %c0_20 = arith.constant 0 : index
    %46 = vector.load %arg2[%c0_19, %c0_20] : memref<2x8xf32, #tpu.memory_space<vmem>>, vector<2x8xf32>
    %cst_21 = arith.constant 1.000000e+00 : f32
    %47 = vector.broadcast %cst_21 : f32 to vector<2x8xf32>
    %48 = arith.subf %47, %46 : vector<2x8xf32>
    %cst_22 = arith.constant -1.000000e+09 : f32
    %49 = vector.broadcast %cst_22 : f32 to vector<2x8xf32>
    %50 = arith.mulf %48, %49 : vector<2x8xf32>
    %51 = vector.shape_cast %50 : vector<2x8xf32> to vector<2x1x8xf32>
    %52 = tpu.concatenate %51, %51 in 0 : vector<2x1x8xf32>, vector<2x1x8xf32> -> vector<4x1x8xf32>
    %53 = arith.truncf %45 : vector<16x32xf32> to vector<16x32xbf16>
    %c0_23 = arith.constant 0 : index
    %c0_24 = arith.constant 0 : index
    %c0_25 = arith.constant 0 : index
    %c0_26 = arith.constant 0 : index
    %54 = vector.load %arg8[%c0_23, %c0_24, %c0_25, %c0_26] : memref<2x2x32x16xbf16, #tpu.memory_space<vmem>>, vector<1x1x32x16xbf16>
    %55 = vector.shape_cast %54 : vector<1x1x32x16xbf16> to vector<32x16xbf16>
    %cst_27 = arith.constant dense<0.000000e+00> : vector<16x16xf32>
    %56 = tpu.matmul %53, %55, %cst_27 {dimension_numbers = #tpu.dot_dimension_numbers<[1], [0], [0], [1], [0, 0, 1, 1], [], []>} : vector<16x32xbf16>, vector<32x16xbf16>, vector<16x16xf32> -> vector<16x16xf32>
    %c0_28 = arith.constant 0 : index
    %c0_29 = arith.constant 0 : index
    %c0_30 = arith.constant 0 : index
    %c0_31 = arith.constant 0 : index
    %57 = vector.load %arg9[%c0_28, %c0_29, %c0_30, %c0_31] : memref<2x2x1x16xf32, #tpu.memory_space<vmem>>, vector<1x1x1x16xf32>
    %58 = vector.shape_cast %57 : vector<1x1x1x16xf32> to vector<1x16xf32>
    %59 = vector.broadcast %58 : vector<1x16xf32> to vector<16x16xf32>
    %60 = arith.addf %56, %59 : vector<16x16xf32>
    %cst_32 = arith.constant 2.500000e-01 : f32
    %61 = vector.broadcast %cst_32 : f32 to vector<16x16xf32>
    %62 = arith.mulf %60, %61 : vector<16x16xf32>
    %c0_33 = arith.constant 0 : index
    %c0_34 = arith.constant 0 : index
    %c0_35 = arith.constant 0 : index
    %c0_36 = arith.constant 0 : index
    %63 = vector.load %arg10[%c0_33, %c0_34, %c0_35, %c0_36] : memref<2x2x32x16xbf16, #tpu.memory_space<vmem>>, vector<1x1x32x16xbf16>
    %64 = vector.shape_cast %63 : vector<1x1x32x16xbf16> to vector<32x16xbf16>
    %cst_37 = arith.constant dense<0.000000e+00> : vector<16x16xf32>
    %65 = tpu.matmul %53, %64, %cst_37 {dimension_numbers = #tpu.dot_dimension_numbers<[1], [0], [0], [1], [0, 0, 1, 1], [], []>} : vector<16x32xbf16>, vector<32x16xbf16>, vector<16x16xf32> -> vector<16x16xf32>
    %c0_38 = arith.constant 0 : index
    %c0_39 = arith.constant 0 : index
    %c0_40 = arith.constant 0 : index
    %c0_41 = arith.constant 0 : index
    %66 = vector.load %arg11[%c0_38, %c0_39, %c0_40, %c0_41] : memref<2x2x1x16xf32, #tpu.memory_space<vmem>>, vector<1x1x1x16xf32>
    %67 = vector.shape_cast %66 : vector<1x1x1x16xf32> to vector<1x16xf32>
    %68 = vector.broadcast %67 : vector<1x16xf32> to vector<16x16xf32>
    %69 = arith.addf %65, %68 : vector<16x16xf32>
    %c0_42 = arith.constant 0 : index
    %c0_43 = arith.constant 0 : index
    %c0_44 = arith.constant 0 : index
    %c0_45 = arith.constant 0 : index
    %70 = vector.load %arg12[%c0_42, %c0_43, %c0_44, %c0_45] : memref<2x2x32x16xbf16, #tpu.memory_space<vmem>>, vector<1x1x32x16xbf16>
    %71 = vector.shape_cast %70 : vector<1x1x32x16xbf16> to vector<32x16xbf16>
    %cst_46 = arith.constant dense<0.000000e+00> : vector<16x16xf32>
    %72 = tpu.matmul %53, %71, %cst_46 {dimension_numbers = #tpu.dot_dimension_numbers<[1], [0], [0], [1], [0, 0, 1, 1], [], []>} : vector<16x32xbf16>, vector<32x16xbf16>, vector<16x16xf32> -> vector<16x16xf32>
    %c0_47 = arith.constant 0 : index
    %c0_48 = arith.constant 0 : index
    %c0_49 = arith.constant 0 : index
    %c0_50 = arith.constant 0 : index
    %73 = vector.load %arg13[%c0_47, %c0_48, %c0_49, %c0_50] : memref<2x2x1x16xf32, #tpu.memory_space<vmem>>, vector<1x1x1x16xf32>
    %74 = vector.shape_cast %73 : vector<1x1x1x16xf32> to vector<1x16xf32>
    %75 = vector.broadcast %74 : vector<1x16xf32> to vector<16x16xf32>
    %76 = arith.addf %72, %75 : vector<16x16xf32>
    %77 = vector.shape_cast %62 : vector<16x16xf32> to vector<2x8x16xf32>
    %78 = arith.truncf %77 : vector<2x8x16xf32> to vector<2x8x16xbf16>
    %79 = vector.shape_cast %69 : vector<16x16xf32> to vector<2x8x16xf32>
    %80 = arith.truncf %79 : vector<2x8x16xf32> to vector<2x8x16xbf16>
    %81 = vector.shape_cast %76 : vector<16x16xf32> to vector<2x8x16xf32>
    %82 = arith.truncf %81 : vector<2x8x16xf32> to vector<2x8x16xbf16>
    %c0_51 = arith.constant 0 : index
    %c1 = arith.constant 1 : index
    %c0_52 = arith.constant 0 : index
    %c0_53 = arith.constant 0 : index
    %83 = vector.load %arg8[%c0_51, %c1, %c0_52, %c0_53] : memref<2x2x32x16xbf16, #tpu.memory_space<vmem>>, vector<1x1x32x16xbf16>
    %84 = vector.shape_cast %83 : vector<1x1x32x16xbf16> to vector<32x16xbf16>
    %cst_54 = arith.constant dense<0.000000e+00> : vector<16x16xf32>
    %85 = tpu.matmul %53, %84, %cst_54 {dimension_numbers = #tpu.dot_dimension_numbers<[1], [0], [0], [1], [0, 0, 1, 1], [], []>} : vector<16x32xbf16>, vector<32x16xbf16>, vector<16x16xf32> -> vector<16x16xf32>
    %c0_55 = arith.constant 0 : index
    %c1_56 = arith.constant 1 : index
    %c0_57 = arith.constant 0 : index
    %c0_58 = arith.constant 0 : index
    %86 = vector.load %arg9[%c0_55, %c1_56, %c0_57, %c0_58] : memref<2x2x1x16xf32, #tpu.memory_space<vmem>>, vector<1x1x1x16xf32>
    %87 = vector.shape_cast %86 : vector<1x1x1x16xf32> to vector<1x16xf32>
    %88 = vector.broadcast %87 : vector<1x16xf32> to vector<16x16xf32>
    %89 = arith.addf %85, %88 : vector<16x16xf32>
    %cst_59 = arith.constant 2.500000e-01 : f32
    %90 = vector.broadcast %cst_59 : f32 to vector<16x16xf32>
    %91 = arith.mulf %89, %90 : vector<16x16xf32>
    %c0_60 = arith.constant 0 : index
    %c1_61 = arith.constant 1 : index
    %c0_62 = arith.constant 0 : index
    %c0_63 = arith.constant 0 : index
    %92 = vector.load %arg10[%c0_60, %c1_61, %c0_62, %c0_63] : memref<2x2x32x16xbf16, #tpu.memory_space<vmem>>, vector<1x1x32x16xbf16>
    %93 = vector.shape_cast %92 : vector<1x1x32x16xbf16> to vector<32x16xbf16>
    %cst_64 = arith.constant dense<0.000000e+00> : vector<16x16xf32>
    %94 = tpu.matmul %53, %93, %cst_64 {dimension_numbers = #tpu.dot_dimension_numbers<[1], [0], [0], [1], [0, 0, 1, 1], [], []>} : vector<16x32xbf16>, vector<32x16xbf16>, vector<16x16xf32> -> vector<16x16xf32>
    %c0_65 = arith.constant 0 : index
    %c1_66 = arith.constant 1 : index
    %c0_67 = arith.constant 0 : index
    %c0_68 = arith.constant 0 : index
    %95 = vector.load %arg11[%c0_65, %c1_66, %c0_67, %c0_68] : memref<2x2x1x16xf32, #tpu.memory_space<vmem>>, vector<1x1x1x16xf32>
    %96 = vector.shape_cast %95 : vector<1x1x1x16xf32> to vector<1x16xf32>
    %97 = vector.broadcast %96 : vector<1x16xf32> to vector<16x16xf32>
    %98 = arith.addf %94, %97 : vector<16x16xf32>
    %c0_69 = arith.constant 0 : index
    %c1_70 = arith.constant 1 : index
    %c0_71 = arith.constant 0 : index
    %c0_72 = arith.constant 0 : index
    %99 = vector.load %arg12[%c0_69, %c1_70, %c0_71, %c0_72] : memref<2x2x32x16xbf16, #tpu.memory_space<vmem>>, vector<1x1x32x16xbf16>
    %100 = vector.shape_cast %99 : vector<1x1x32x16xbf16> to vector<32x16xbf16>
    %cst_73 = arith.constant dense<0.000000e+00> : vector<16x16xf32>
    %101 = tpu.matmul %53, %100, %cst_73 {dimension_numbers = #tpu.dot_dimension_numbers<[1], [0], [0], [1], [0, 0, 1, 1], [], []>} : vector<16x32xbf16>, vector<32x16xbf16>, vector<16x16xf32> -> vector<16x16xf32>
    %c0_74 = arith.constant 0 : index
    %c1_75 = arith.constant 1 : index
    %c0_76 = arith.constant 0 : index
    %c0_77 = arith.constant 0 : index
    %102 = vector.load %arg13[%c0_74, %c1_75, %c0_76, %c0_77] : memref<2x2x1x16xf32, #tpu.memory_space<vmem>>, vector<1x1x1x16xf32>
    %103 = vector.shape_cast %102 : vector<1x1x1x16xf32> to vector<1x16xf32>
    %104 = vector.broadcast %103 : vector<1x16xf32> to vector<16x16xf32>
    %105 = arith.addf %101, %104 : vector<16x16xf32>
    %106 = vector.shape_cast %91 : vector<16x16xf32> to vector<2x8x16xf32>
    %107 = arith.truncf %106 : vector<2x8x16xf32> to vector<2x8x16xbf16>
    %108 = vector.shape_cast %98 : vector<16x16xf32> to vector<2x8x16xf32>
    %109 = arith.truncf %108 : vector<2x8x16xf32> to vector<2x8x16xbf16>
    %110 = vector.shape_cast %105 : vector<16x16xf32> to vector<2x8x16xf32>
    %111 = arith.truncf %110 : vector<2x8x16xf32> to vector<2x8x16xbf16>
    %112 = tpu.concatenate %78, %107 in 0 : vector<2x8x16xbf16>, vector<2x8x16xbf16> -> vector<4x8x16xbf16>
    %113 = tpu.concatenate %80, %109 in 0 : vector<2x8x16xbf16>, vector<2x8x16xbf16> -> vector<4x8x16xbf16>
    %114 = tpu.concatenate %82, %111 in 0 : vector<2x8x16xbf16>, vector<2x8x16xbf16> -> vector<4x8x16xbf16>
    "tpu.trace_start"() <{level = 10 : i32, message = "bqd,bkd->bqk"}> : () -> ()
    %cst_78 = arith.constant dense<0.000000e+00> : vector<4x8x8xf32>
    %115 = tpu.matmul %112, %113, %cst_78 {dimension_numbers = #tpu.dot_dimension_numbers<[2], [2], [1], [1], [0, 0, 0, 1, 1, 1], [0], [0]>} : vector<4x8x16xbf16>, vector<4x8x16xbf16>, vector<4x8x8xf32> -> vector<4x8x8xf32>
    "tpu.trace_stop"() : () -> ()
    %116 = vector.broadcast %52 : vector<4x1x8xf32> to vector<4x8x8xf32>
    %117 = arith.addf %115, %116 : vector<4x8x8xf32>
    %cst_79 = arith.constant dense<0xFF800000> : vector<4x8xf32>
    %118 = vector.multi_reduction <maximumf>, %117, %cst_79 [2] : vector<4x8x8xf32> to vector<4x8xf32>
    %119 = vector.shape_cast %118 : vector<4x8xf32> to vector<4x8x1xf32>
    %120 = vector.broadcast %119 : vector<4x8x1xf32> to vector<4x8x8xf32>
    %121 = arith.subf %117, %120 : vector<4x8x8xf32>
    %122 = math.exp %121 : vector<4x8x8xf32>
    %cst_80 = arith.constant dense<0.000000e+00> : vector<4x8xf32>
    %123 = vector.multi_reduction <add>, %122, %cst_80 [2] : vector<4x8x8xf32> to vector<4x8xf32>
    %124 = vector.shape_cast %123 : vector<4x8xf32> to vector<4x8x1xf32>
    %125 = tpu.reciprocal %124 {approx = true} : vector<4x8x1xf32> -> vector<4x8x1xf32>
    %126 = vector.broadcast %125 : vector<4x8x1xf32> to vector<4x8x8xf32>
    %127 = arith.mulf %122, %126 : vector<4x8x8xf32>
    %128 = arith.truncf %127 : vector<4x8x8xf32> to vector<4x8x8xbf16>
    "tpu.trace_start"() <{level = 10 : i32, message = "bqk,bkd->bqd"}> : () -> ()
    %cst_81 = arith.constant dense<0.000000e+00> : vector<4x8x16xf32>
    %129 = tpu.matmul %128, %114, %cst_81 {dimension_numbers = #tpu.dot_dimension_numbers<[2], [1], [1], [2], [0, 0, 0, 1, 1, 2], [0], [0]>} : vector<4x8x8xbf16>, vector<4x8x16xbf16>, vector<4x8x16xf32> -> vector<4x8x16xf32>
    "tpu.trace_stop"() : () -> ()
    %c0_82 = arith.constant 0 : index
    %c0_83 = arith.constant 0 : index
    %c0_84 = arith.constant 0 : index
    %130 = vector.load %arg15[%c0_82, %c0_83, %c0_84] : memref<2x1x32xf32, #tpu.memory_space<vmem>>, vector<1x1x32xf32>
    %131 = vector.shape_cast %130 : vector<1x1x32xf32> to vector<1x32xf32>
    %132 = vector.extract_strided_slice %129 {offsets = [0, 0, 0], sizes = [2, 8, 16], strides = [1, 1, 1]} : vector<4x8x16xf32> to vector<2x8x16xf32>
    %133 = vector.shape_cast %132 : vector<2x8x16xf32> to vector<16x16xf32>
    %134 = arith.truncf %133 : vector<16x16xf32> to vector<16x16xbf16>
    %c0_85 = arith.constant 0 : index
    %c0_86 = arith.constant 0 : index
    %c0_87 = arith.constant 0 : index
    %c0_88 = arith.constant 0 : index
    %135 = vector.load %arg14[%c0_85, %c0_86, %c0_87, %c0_88] : memref<2x2x16x32xbf16, #tpu.memory_space<vmem>>, vector<1x1x16x32xbf16>
    %136 = vector.shape_cast %135 : vector<1x1x16x32xbf16> to vector<16x32xbf16>
    %cst_89 = arith.constant dense<0.000000e+00> : vector<16x32xf32>
    %137 = tpu.matmul %134, %136, %cst_89 {dimension_numbers = #tpu.dot_dimension_numbers<[1], [0], [0], [1], [0, 0, 1, 1], [], []>} : vector<16x16xbf16>, vector<16x32xbf16>, vector<16x32xf32> -> vector<16x32xf32>
    %138 = vector.broadcast %131 : vector<1x32xf32> to vector<16x32xf32>
    %139 = arith.addf %138, %137 : vector<16x32xf32>
    %140 = vector.extract_strided_slice %129 {offsets = [2, 0, 0], sizes = [2, 8, 16], strides = [1, 1, 1]} : vector<4x8x16xf32> to vector<2x8x16xf32>
    %141 = vector.shape_cast %140 : vector<2x8x16xf32> to vector<16x16xf32>
    %142 = arith.truncf %141 : vector<16x16xf32> to vector<16x16xbf16>
    %c0_90 = arith.constant 0 : index
    %c1_91 = arith.constant 1 : index
    %c0_92 = arith.constant 0 : index
    %c0_93 = arith.constant 0 : index
    %143 = vector.load %arg14[%c0_90, %c1_91, %c0_92, %c0_93] : memref<2x2x16x32xbf16, #tpu.memory_space<vmem>>, vector<1x1x16x32xbf16>
    %144 = vector.shape_cast %143 : vector<1x1x16x32xbf16> to vector<16x32xbf16>
    %cst_94 = arith.constant dense<0.000000e+00> : vector<16x32xf32>
    %145 = tpu.matmul %142, %144, %cst_94 {dimension_numbers = #tpu.dot_dimension_numbers<[1], [0], [0], [1], [0, 0, 1, 1], [], []>} : vector<16x16xbf16>, vector<16x32xbf16>, vector<16x32xf32> -> vector<16x32xf32>
    %146 = arith.addf %139, %145 : vector<16x32xf32>
    %147 = arith.addf %45, %146 : vector<16x32xf32>
    %c0_95 = arith.constant 0 : index
    %c0_96 = arith.constant 0 : index
    %c0_97 = arith.constant 0 : index
    %148 = vector.load %arg16[%c0_95, %c0_96, %c0_97] : memref<2x1x32xf32, #tpu.memory_space<vmem>>, vector<1x1x32xf32>
    %149 = vector.shape_cast %148 : vector<1x1x32xf32> to vector<1x32xf32>
    %c0_98 = arith.constant 0 : index
    %c0_99 = arith.constant 0 : index
    %c0_100 = arith.constant 0 : index
    %150 = vector.load %arg17[%c0_98, %c0_99, %c0_100] : memref<2x1x32xf32, #tpu.memory_space<vmem>>, vector<1x1x32xf32>
    %151 = vector.shape_cast %150 : vector<1x1x32xf32> to vector<1x32xf32>
    %cst_101 = arith.constant dense<0.000000e+00> : vector<16xf32>
    %152 = vector.multi_reduction <add>, %147, %cst_101 [1] : vector<16x32xf32> to vector<16xf32>
    %153 = vector.shape_cast %152 : vector<16xf32> to vector<16x1xf32>
    %cst_102 = arith.constant 3.200000e+01 : f32
    %154 = vector.broadcast %cst_102 : f32 to vector<16x1xf32>
    %155 = arith.divf %153, %154 : vector<16x1xf32>
    %156 = vector.broadcast %155 : vector<16x1xf32> to vector<16x32xf32>
    %157 = arith.subf %147, %156 : vector<16x32xf32>
    %158 = arith.mulf %157, %157 : vector<16x32xf32>
    %cst_103 = arith.constant dense<0.000000e+00> : vector<16xf32>
    %159 = vector.multi_reduction <add>, %158, %cst_103 [1] : vector<16x32xf32> to vector<16xf32>
    %160 = vector.shape_cast %159 : vector<16xf32> to vector<16x1xf32>
    %cst_104 = arith.constant 3.200000e+01 : f32
    %161 = vector.broadcast %cst_104 : f32 to vector<16x1xf32>
    %162 = arith.divf %160, %161 : vector<16x1xf32>
    %163 = vector.broadcast %155 : vector<16x1xf32> to vector<16x32xf32>
    %164 = arith.subf %147, %163 : vector<16x32xf32>
    %cst_105 = arith.constant 9.99999974E-6 : f32
    %165 = vector.broadcast %cst_105 : f32 to vector<16x1xf32>
    %166 = arith.addf %162, %165 : vector<16x1xf32>
    %167 = math.rsqrt %166 : vector<16x1xf32>
    %168 = vector.broadcast %167 : vector<16x1xf32> to vector<16x32xf32>
    %169 = arith.mulf %164, %168 : vector<16x32xf32>
    %170 = vector.broadcast %149 : vector<1x32xf32> to vector<16x32xf32>
    %171 = arith.mulf %169, %170 : vector<16x32xf32>
    %172 = vector.broadcast %151 : vector<1x32xf32> to vector<16x32xf32>
    %173 = arith.addf %171, %172 : vector<16x32xf32>
    %174 = arith.truncf %173 : vector<16x32xf32> to vector<16x32xbf16>
    %c0_106 = arith.constant 0 : index
    %c0_107 = arith.constant 0 : index
    %c0_108 = arith.constant 0 : index
    %175 = vector.load %arg18[%c0_106, %c0_107, %c0_108] : memref<2x32x64xbf16, #tpu.memory_space<vmem>>, vector<1x32x64xbf16>
    %176 = vector.shape_cast %175 : vector<1x32x64xbf16> to vector<32x64xbf16>
    %cst_109 = arith.constant dense<0.000000e+00> : vector<16x64xf32>
    %177 = tpu.matmul %174, %176, %cst_109 {dimension_numbers = #tpu.dot_dimension_numbers<[1], [0], [0], [1], [0, 0, 1, 1], [], []>} : vector<16x32xbf16>, vector<32x64xbf16>, vector<16x64xf32> -> vector<16x64xf32>
    %c0_110 = arith.constant 0 : index
    %c0_111 = arith.constant 0 : index
    %c0_112 = arith.constant 0 : index
    %178 = vector.load %arg19[%c0_110, %c0_111, %c0_112] : memref<2x1x64xf32, #tpu.memory_space<vmem>>, vector<1x1x64xf32>
    %179 = vector.shape_cast %178 : vector<1x1x64xf32> to vector<1x64xf32>
    %180 = vector.broadcast %179 : vector<1x64xf32> to vector<16x64xf32>
    %181 = arith.addf %177, %180 : vector<16x64xf32>
    %cst_113 = arith.constant 5.000000e-01 : f32
    %182 = vector.broadcast %cst_113 : f32 to vector<16x64xf32>
    %183 = arith.mulf %182, %181 : vector<16x64xf32>
    %cst_114 = arith.constant 4.471500e-02 : f32
    %184 = vector.broadcast %cst_114 : f32 to vector<16x64xf32>
    %185 = arith.mulf %184, %181 : vector<16x64xf32>
    %186 = arith.mulf %185, %181 : vector<16x64xf32>
    %187 = arith.mulf %186, %181 : vector<16x64xf32>
    %188 = arith.addf %181, %187 : vector<16x64xf32>
    %cst_115 = arith.constant 0.797884583 : f32
    %189 = vector.broadcast %cst_115 : f32 to vector<16x64xf32>
    %190 = arith.mulf %189, %188 : vector<16x64xf32>
    %191 = math.tanh %190 : vector<16x64xf32>
    %cst_116 = arith.constant 1.000000e+00 : f32
    %192 = vector.broadcast %cst_116 : f32 to vector<16x64xf32>
    %193 = arith.addf %192, %191 : vector<16x64xf32>
    %194 = arith.mulf %183, %193 : vector<16x64xf32>
    %195 = arith.truncf %194 : vector<16x64xf32> to vector<16x64xbf16>
    %c0_117 = arith.constant 0 : index
    %c0_118 = arith.constant 0 : index
    %c0_119 = arith.constant 0 : index
    %196 = vector.load %arg20[%c0_117, %c0_118, %c0_119] : memref<2x64x32xbf16, #tpu.memory_space<vmem>>, vector<1x64x32xbf16>
    %197 = vector.shape_cast %196 : vector<1x64x32xbf16> to vector<64x32xbf16>
    %cst_120 = arith.constant dense<0.000000e+00> : vector<16x32xf32>
    %198 = tpu.matmul %195, %197, %cst_120 {dimension_numbers = #tpu.dot_dimension_numbers<[1], [0], [0], [1], [0, 0, 1, 1], [], []>} : vector<16x64xbf16>, vector<64x32xbf16>, vector<16x32xf32> -> vector<16x32xf32>
    %c0_121 = arith.constant 0 : index
    %c0_122 = arith.constant 0 : index
    %c0_123 = arith.constant 0 : index
    %199 = vector.load %arg21[%c0_121, %c0_122, %c0_123] : memref<2x1x32xf32, #tpu.memory_space<vmem>>, vector<1x1x32xf32>
    %200 = vector.shape_cast %199 : vector<1x1x32xf32> to vector<1x32xf32>
    %201 = vector.broadcast %200 : vector<1x32xf32> to vector<16x32xf32>
    %202 = arith.addf %198, %201 : vector<16x32xf32>
    %203 = arith.addf %173, %202 : vector<16x32xf32>
    %c0_124 = arith.constant 0 : index
    %c0_125 = arith.constant 0 : index
    %c0_126 = arith.constant 0 : index
    %204 = vector.load %arg22[%c0_124, %c0_125, %c0_126] : memref<2x1x32xf32, #tpu.memory_space<vmem>>, vector<1x1x32xf32>
    %205 = vector.shape_cast %204 : vector<1x1x32xf32> to vector<1x32xf32>
    %c0_127 = arith.constant 0 : index
    %c0_128 = arith.constant 0 : index
    %c0_129 = arith.constant 0 : index
    %206 = vector.load %arg23[%c0_127, %c0_128, %c0_129] : memref<2x1x32xf32, #tpu.memory_space<vmem>>, vector<1x1x32xf32>
    %207 = vector.shape_cast %206 : vector<1x1x32xf32> to vector<1x32xf32>
    %cst_130 = arith.constant dense<0.000000e+00> : vector<16xf32>
    %208 = vector.multi_reduction <add>, %203, %cst_130 [1] : vector<16x32xf32> to vector<16xf32>
    %209 = vector.shape_cast %208 : vector<16xf32> to vector<16x1xf32>
    %cst_131 = arith.constant 3.200000e+01 : f32
    %210 = vector.broadcast %cst_131 : f32 to vector<16x1xf32>
    %211 = arith.divf %209, %210 : vector<16x1xf32>
    %212 = vector.broadcast %211 : vector<16x1xf32> to vector<16x32xf32>
    %213 = arith.subf %203, %212 : vector<16x32xf32>
    %214 = arith.mulf %213, %213 : vector<16x32xf32>
    %cst_132 = arith.constant dense<0.000000e+00> : vector<16xf32>
    %215 = vector.multi_reduction <add>, %214, %cst_132 [1] : vector<16x32xf32> to vector<16xf32>
    %216 = vector.shape_cast %215 : vector<16xf32> to vector<16x1xf32>
    %cst_133 = arith.constant 3.200000e+01 : f32
    %217 = vector.broadcast %cst_133 : f32 to vector<16x1xf32>
    %218 = arith.divf %216, %217 : vector<16x1xf32>
    %219 = vector.broadcast %211 : vector<16x1xf32> to vector<16x32xf32>
    %220 = arith.subf %203, %219 : vector<16x32xf32>
    %cst_134 = arith.constant 9.99999974E-6 : f32
    %221 = vector.broadcast %cst_134 : f32 to vector<16x1xf32>
    %222 = arith.addf %218, %221 : vector<16x1xf32>
    %223 = math.rsqrt %222 : vector<16x1xf32>
    %224 = vector.broadcast %223 : vector<16x1xf32> to vector<16x32xf32>
    %225 = arith.mulf %220, %224 : vector<16x32xf32>
    %226 = vector.broadcast %205 : vector<1x32xf32> to vector<16x32xf32>
    %227 = arith.mulf %225, %226 : vector<16x32xf32>
    %228 = vector.broadcast %207 : vector<1x32xf32> to vector<16x32xf32>
    %229 = arith.addf %227, %228 : vector<16x32xf32>
    %230 = arith.truncf %229 : vector<16x32xf32> to vector<16x32xbf16>
    %c1_135 = arith.constant 1 : index
    %c0_136 = arith.constant 0 : index
    %c0_137 = arith.constant 0 : index
    %c0_138 = arith.constant 0 : index
    %231 = vector.load %arg8[%c1_135, %c0_136, %c0_137, %c0_138] : memref<2x2x32x16xbf16, #tpu.memory_space<vmem>>, vector<1x1x32x16xbf16>
    %232 = vector.shape_cast %231 : vector<1x1x32x16xbf16> to vector<32x16xbf16>
    %cst_139 = arith.constant dense<0.000000e+00> : vector<16x16xf32>
    %233 = tpu.matmul %230, %232, %cst_139 {dimension_numbers = #tpu.dot_dimension_numbers<[1], [0], [0], [1], [0, 0, 1, 1], [], []>} : vector<16x32xbf16>, vector<32x16xbf16>, vector<16x16xf32> -> vector<16x16xf32>
    %c1_140 = arith.constant 1 : index
    %c0_141 = arith.constant 0 : index
    %c0_142 = arith.constant 0 : index
    %c0_143 = arith.constant 0 : index
    %234 = vector.load %arg9[%c1_140, %c0_141, %c0_142, %c0_143] : memref<2x2x1x16xf32, #tpu.memory_space<vmem>>, vector<1x1x1x16xf32>
    %235 = vector.shape_cast %234 : vector<1x1x1x16xf32> to vector<1x16xf32>
    %236 = vector.broadcast %235 : vector<1x16xf32> to vector<16x16xf32>
    %237 = arith.addf %233, %236 : vector<16x16xf32>
    %cst_144 = arith.constant 2.500000e-01 : f32
    %238 = vector.broadcast %cst_144 : f32 to vector<16x16xf32>
    %239 = arith.mulf %237, %238 : vector<16x16xf32>
    %c1_145 = arith.constant 1 : index
    %c0_146 = arith.constant 0 : index
    %c0_147 = arith.constant 0 : index
    %c0_148 = arith.constant 0 : index
    %240 = vector.load %arg10[%c1_145, %c0_146, %c0_147, %c0_148] : memref<2x2x32x16xbf16, #tpu.memory_space<vmem>>, vector<1x1x32x16xbf16>
    %241 = vector.shape_cast %240 : vector<1x1x32x16xbf16> to vector<32x16xbf16>
    %cst_149 = arith.constant dense<0.000000e+00> : vector<16x16xf32>
    %242 = tpu.matmul %230, %241, %cst_149 {dimension_numbers = #tpu.dot_dimension_numbers<[1], [0], [0], [1], [0, 0, 1, 1], [], []>} : vector<16x32xbf16>, vector<32x16xbf16>, vector<16x16xf32> -> vector<16x16xf32>
    %c1_150 = arith.constant 1 : index
    %c0_151 = arith.constant 0 : index
    %c0_152 = arith.constant 0 : index
    %c0_153 = arith.constant 0 : index
    %243 = vector.load %arg11[%c1_150, %c0_151, %c0_152, %c0_153] : memref<2x2x1x16xf32, #tpu.memory_space<vmem>>, vector<1x1x1x16xf32>
    %244 = vector.shape_cast %243 : vector<1x1x1x16xf32> to vector<1x16xf32>
    %245 = vector.broadcast %244 : vector<1x16xf32> to vector<16x16xf32>
    %246 = arith.addf %242, %245 : vector<16x16xf32>
    %c1_154 = arith.constant 1 : index
    %c0_155 = arith.constant 0 : index
    %c0_156 = arith.constant 0 : index
    %c0_157 = arith.constant 0 : index
    %247 = vector.load %arg12[%c1_154, %c0_155, %c0_156, %c0_157] : memref<2x2x32x16xbf16, #tpu.memory_space<vmem>>, vector<1x1x32x16xbf16>
    %248 = vector.shape_cast %247 : vector<1x1x32x16xbf16> to vector<32x16xbf16>
    %cst_158 = arith.constant dense<0.000000e+00> : vector<16x16xf32>
    %249 = tpu.matmul %230, %248, %cst_158 {dimension_numbers = #tpu.dot_dimension_numbers<[1], [0], [0], [1], [0, 0, 1, 1], [], []>} : vector<16x32xbf16>, vector<32x16xbf16>, vector<16x16xf32> -> vector<16x16xf32>
    %c1_159 = arith.constant 1 : index
    %c0_160 = arith.constant 0 : index
    %c0_161 = arith.constant 0 : index
    %c0_162 = arith.constant 0 : index
    %250 = vector.load %arg13[%c1_159, %c0_160, %c0_161, %c0_162] : memref<2x2x1x16xf32, #tpu.memory_space<vmem>>, vector<1x1x1x16xf32>
    %251 = vector.shape_cast %250 : vector<1x1x1x16xf32> to vector<1x16xf32>
    %252 = vector.broadcast %251 : vector<1x16xf32> to vector<16x16xf32>
    %253 = arith.addf %249, %252 : vector<16x16xf32>
    %254 = vector.shape_cast %239 : vector<16x16xf32> to vector<2x8x16xf32>
    %255 = arith.truncf %254 : vector<2x8x16xf32> to vector<2x8x16xbf16>
    %256 = vector.shape_cast %246 : vector<16x16xf32> to vector<2x8x16xf32>
    %257 = arith.truncf %256 : vector<2x8x16xf32> to vector<2x8x16xbf16>
    %258 = vector.shape_cast %253 : vector<16x16xf32> to vector<2x8x16xf32>
    %259 = arith.truncf %258 : vector<2x8x16xf32> to vector<2x8x16xbf16>
    %c1_163 = arith.constant 1 : index
    %c1_164 = arith.constant 1 : index
    %c0_165 = arith.constant 0 : index
    %c0_166 = arith.constant 0 : index
    %260 = vector.load %arg8[%c1_163, %c1_164, %c0_165, %c0_166] : memref<2x2x32x16xbf16, #tpu.memory_space<vmem>>, vector<1x1x32x16xbf16>
    %261 = vector.shape_cast %260 : vector<1x1x32x16xbf16> to vector<32x16xbf16>
    %cst_167 = arith.constant dense<0.000000e+00> : vector<16x16xf32>
    %262 = tpu.matmul %230, %261, %cst_167 {dimension_numbers = #tpu.dot_dimension_numbers<[1], [0], [0], [1], [0, 0, 1, 1], [], []>} : vector<16x32xbf16>, vector<32x16xbf16>, vector<16x16xf32> -> vector<16x16xf32>
    %c1_168 = arith.constant 1 : index
    %c1_169 = arith.constant 1 : index
    %c0_170 = arith.constant 0 : index
    %c0_171 = arith.constant 0 : index
    %263 = vector.load %arg9[%c1_168, %c1_169, %c0_170, %c0_171] : memref<2x2x1x16xf32, #tpu.memory_space<vmem>>, vector<1x1x1x16xf32>
    %264 = vector.shape_cast %263 : vector<1x1x1x16xf32> to vector<1x16xf32>
    %265 = vector.broadcast %264 : vector<1x16xf32> to vector<16x16xf32>
    %266 = arith.addf %262, %265 : vector<16x16xf32>
    %cst_172 = arith.constant 2.500000e-01 : f32
    %267 = vector.broadcast %cst_172 : f32 to vector<16x16xf32>
    %268 = arith.mulf %266, %267 : vector<16x16xf32>
    %c1_173 = arith.constant 1 : index
    %c1_174 = arith.constant 1 : index
    %c0_175 = arith.constant 0 : index
    %c0_176 = arith.constant 0 : index
    %269 = vector.load %arg10[%c1_173, %c1_174, %c0_175, %c0_176] : memref<2x2x32x16xbf16, #tpu.memory_space<vmem>>, vector<1x1x32x16xbf16>
    %270 = vector.shape_cast %269 : vector<1x1x32x16xbf16> to vector<32x16xbf16>
    %cst_177 = arith.constant dense<0.000000e+00> : vector<16x16xf32>
    %271 = tpu.matmul %230, %270, %cst_177 {dimension_numbers = #tpu.dot_dimension_numbers<[1], [0], [0], [1], [0, 0, 1, 1], [], []>} : vector<16x32xbf16>, vector<32x16xbf16>, vector<16x16xf32> -> vector<16x16xf32>
    %c1_178 = arith.constant 1 : index
    %c1_179 = arith.constant 1 : index
    %c0_180 = arith.constant 0 : index
    %c0_181 = arith.constant 0 : index
    %272 = vector.load %arg11[%c1_178, %c1_179, %c0_180, %c0_181] : memref<2x2x1x16xf32, #tpu.memory_space<vmem>>, vector<1x1x1x16xf32>
    %273 = vector.shape_cast %272 : vector<1x1x1x16xf32> to vector<1x16xf32>
    %274 = vector.broadcast %273 : vector<1x16xf32> to vector<16x16xf32>
    %275 = arith.addf %271, %274 : vector<16x16xf32>
    %c1_182 = arith.constant 1 : index
    %c1_183 = arith.constant 1 : index
    %c0_184 = arith.constant 0 : index
    %c0_185 = arith.constant 0 : index
    %276 = vector.load %arg12[%c1_182, %c1_183, %c0_184, %c0_185] : memref<2x2x32x16xbf16, #tpu.memory_space<vmem>>, vector<1x1x32x16xbf16>
    %277 = vector.shape_cast %276 : vector<1x1x32x16xbf16> to vector<32x16xbf16>
    %cst_186 = arith.constant dense<0.000000e+00> : vector<16x16xf32>
    %278 = tpu.matmul %230, %277, %cst_186 {dimension_numbers = #tpu.dot_dimension_numbers<[1], [0], [0], [1], [0, 0, 1, 1], [], []>} : vector<16x32xbf16>, vector<32x16xbf16>, vector<16x16xf32> -> vector<16x16xf32>
    %c1_187 = arith.constant 1 : index
    %c1_188 = arith.constant 1 : index
    %c0_189 = arith.constant 0 : index
    %c0_190 = arith.constant 0 : index
    %279 = vector.load %arg13[%c1_187, %c1_188, %c0_189, %c0_190] : memref<2x2x1x16xf32, #tpu.memory_space<vmem>>, vector<1x1x1x16xf32>
    %280 = vector.shape_cast %279 : vector<1x1x1x16xf32> to vector<1x16xf32>
    %281 = vector.broadcast %280 : vector<1x16xf32> to vector<16x16xf32>
    %282 = arith.addf %278, %281 : vector<16x16xf32>
    %283 = vector.shape_cast %268 : vector<16x16xf32> to vector<2x8x16xf32>
    %284 = arith.truncf %283 : vector<2x8x16xf32> to vector<2x8x16xbf16>
    %285 = vector.shape_cast %275 : vector<16x16xf32> to vector<2x8x16xf32>
    %286 = arith.truncf %285 : vector<2x8x16xf32> to vector<2x8x16xbf16>
    %287 = vector.shape_cast %282 : vector<16x16xf32> to vector<2x8x16xf32>
    %288 = arith.truncf %287 : vector<2x8x16xf32> to vector<2x8x16xbf16>
    %289 = tpu.concatenate %255, %284 in 0 : vector<2x8x16xbf16>, vector<2x8x16xbf16> -> vector<4x8x16xbf16>
    %290 = tpu.concatenate %257, %286 in 0 : vector<2x8x16xbf16>, vector<2x8x16xbf16> -> vector<4x8x16xbf16>
    %291 = tpu.concatenate %259, %288 in 0 : vector<2x8x16xbf16>, vector<2x8x16xbf16> -> vector<4x8x16xbf16>
    "tpu.trace_start"() <{level = 10 : i32, message = "bqd,bkd->bqk"}> : () -> ()
    %cst_191 = arith.constant dense<0.000000e+00> : vector<4x8x8xf32>
    %292 = tpu.matmul %289, %290, %cst_191 {dimension_numbers = #tpu.dot_dimension_numbers<[2], [2], [1], [1], [0, 0, 0, 1, 1, 1], [0], [0]>} : vector<4x8x16xbf16>, vector<4x8x16xbf16>, vector<4x8x8xf32> -> vector<4x8x8xf32>
    "tpu.trace_stop"() : () -> ()
    %293 = vector.broadcast %52 : vector<4x1x8xf32> to vector<4x8x8xf32>
    %294 = arith.addf %292, %293 : vector<4x8x8xf32>
    %cst_192 = arith.constant dense<0xFF800000> : vector<4x8xf32>
    %295 = vector.multi_reduction <maximumf>, %294, %cst_192 [2] : vector<4x8x8xf32> to vector<4x8xf32>
    %296 = vector.shape_cast %295 : vector<4x8xf32> to vector<4x8x1xf32>
    %297 = vector.broadcast %296 : vector<4x8x1xf32> to vector<4x8x8xf32>
    %298 = arith.subf %294, %297 : vector<4x8x8xf32>
    %299 = math.exp %298 : vector<4x8x8xf32>
    %cst_193 = arith.constant dense<0.000000e+00> : vector<4x8xf32>
    %300 = vector.multi_reduction <add>, %299, %cst_193 [2] : vector<4x8x8xf32> to vector<4x8xf32>
    %301 = vector.shape_cast %300 : vector<4x8xf32> to vector<4x8x1xf32>
    %302 = tpu.reciprocal %301 {approx = true} : vector<4x8x1xf32> -> vector<4x8x1xf32>
    %303 = vector.broadcast %302 : vector<4x8x1xf32> to vector<4x8x8xf32>
    %304 = arith.mulf %299, %303 : vector<4x8x8xf32>
    %305 = arith.truncf %304 : vector<4x8x8xf32> to vector<4x8x8xbf16>
    "tpu.trace_start"() <{level = 10 : i32, message = "bqk,bkd->bqd"}> : () -> ()
    %cst_194 = arith.constant dense<0.000000e+00> : vector<4x8x16xf32>
    %306 = tpu.matmul %305, %291, %cst_194 {dimension_numbers = #tpu.dot_dimension_numbers<[2], [1], [1], [2], [0, 0, 0, 1, 1, 2], [0], [0]>} : vector<4x8x8xbf16>, vector<4x8x16xbf16>, vector<4x8x16xf32> -> vector<4x8x16xf32>
    "tpu.trace_stop"() : () -> ()
    %c1_195 = arith.constant 1 : index
    %c0_196 = arith.constant 0 : index
    %c0_197 = arith.constant 0 : index
    %307 = vector.load %arg15[%c1_195, %c0_196, %c0_197] : memref<2x1x32xf32, #tpu.memory_space<vmem>>, vector<1x1x32xf32>
    %308 = vector.shape_cast %307 : vector<1x1x32xf32> to vector<1x32xf32>
    %309 = vector.extract_strided_slice %306 {offsets = [0, 0, 0], sizes = [2, 8, 16], strides = [1, 1, 1]} : vector<4x8x16xf32> to vector<2x8x16xf32>
    %310 = vector.shape_cast %309 : vector<2x8x16xf32> to vector<16x16xf32>
    %311 = arith.truncf %310 : vector<16x16xf32> to vector<16x16xbf16>
    %c1_198 = arith.constant 1 : index
    %c0_199 = arith.constant 0 : index
    %c0_200 = arith.constant 0 : index
    %c0_201 = arith.constant 0 : index
    %312 = vector.load %arg14[%c1_198, %c0_199, %c0_200, %c0_201] : memref<2x2x16x32xbf16, #tpu.memory_space<vmem>>, vector<1x1x16x32xbf16>
    %313 = vector.shape_cast %312 : vector<1x1x16x32xbf16> to vector<16x32xbf16>
    %cst_202 = arith.constant dense<0.000000e+00> : vector<16x32xf32>
    %314 = tpu.matmul %311, %313, %cst_202 {dimension_numbers = #tpu.dot_dimension_numbers<[1], [0], [0], [1], [0, 0, 1, 1], [], []>} : vector<16x16xbf16>, vector<16x32xbf16>, vector<16x32xf32> -> vector<16x32xf32>
    %315 = vector.broadcast %308 : vector<1x32xf32> to vector<16x32xf32>
    %316 = arith.addf %315, %314 : vector<16x32xf32>
    %317 = vector.extract_strided_slice %306 {offsets = [2, 0, 0], sizes = [2, 8, 16], strides = [1, 1, 1]} : vector<4x8x16xf32> to vector<2x8x16xf32>
    %318 = vector.shape_cast %317 : vector<2x8x16xf32> to vector<16x16xf32>
    %319 = arith.truncf %318 : vector<16x16xf32> to vector<16x16xbf16>
    %c1_203 = arith.constant 1 : index
    %c1_204 = arith.constant 1 : index
    %c0_205 = arith.constant 0 : index
    %c0_206 = arith.constant 0 : index
    %320 = vector.load %arg14[%c1_203, %c1_204, %c0_205, %c0_206] : memref<2x2x16x32xbf16, #tpu.memory_space<vmem>>, vector<1x1x16x32xbf16>
    %321 = vector.shape_cast %320 : vector<1x1x16x32xbf16> to vector<16x32xbf16>
    %cst_207 = arith.constant dense<0.000000e+00> : vector<16x32xf32>
    %322 = tpu.matmul %319, %321, %cst_207 {dimension_numbers = #tpu.dot_dimension_numbers<[1], [0], [0], [1], [0, 0, 1, 1], [], []>} : vector<16x16xbf16>, vector<16x32xbf16>, vector<16x32xf32> -> vector<16x32xf32>
    %323 = arith.addf %316, %322 : vector<16x32xf32>
    %324 = arith.addf %229, %323 : vector<16x32xf32>
    %c1_208 = arith.constant 1 : index
    %c0_209 = arith.constant 0 : index
    %c0_210 = arith.constant 0 : index
    %325 = vector.load %arg16[%c1_208, %c0_209, %c0_210] : memref<2x1x32xf32, #tpu.memory_space<vmem>>, vector<1x1x32xf32>
    %326 = vector.shape_cast %325 : vector<1x1x32xf32> to vector<1x32xf32>
    %c1_211 = arith.constant 1 : index
    %c0_212 = arith.constant 0 : index
    %c0_213 = arith.constant 0 : index
    %327 = vector.load %arg17[%c1_211, %c0_212, %c0_213] : memref<2x1x32xf32, #tpu.memory_space<vmem>>, vector<1x1x32xf32>
    %328 = vector.shape_cast %327 : vector<1x1x32xf32> to vector<1x32xf32>
    %cst_214 = arith.constant dense<0.000000e+00> : vector<16xf32>
    %329 = vector.multi_reduction <add>, %324, %cst_214 [1] : vector<16x32xf32> to vector<16xf32>
    %330 = vector.shape_cast %329 : vector<16xf32> to vector<16x1xf32>
    %cst_215 = arith.constant 3.200000e+01 : f32
    %331 = vector.broadcast %cst_215 : f32 to vector<16x1xf32>
    %332 = arith.divf %330, %331 : vector<16x1xf32>
    %333 = vector.broadcast %332 : vector<16x1xf32> to vector<16x32xf32>
    %334 = arith.subf %324, %333 : vector<16x32xf32>
    %335 = arith.mulf %334, %334 : vector<16x32xf32>
    %cst_216 = arith.constant dense<0.000000e+00> : vector<16xf32>
    %336 = vector.multi_reduction <add>, %335, %cst_216 [1] : vector<16x32xf32> to vector<16xf32>
    %337 = vector.shape_cast %336 : vector<16xf32> to vector<16x1xf32>
    %cst_217 = arith.constant 3.200000e+01 : f32
    %338 = vector.broadcast %cst_217 : f32 to vector<16x1xf32>
    %339 = arith.divf %337, %338 : vector<16x1xf32>
    %340 = vector.broadcast %332 : vector<16x1xf32> to vector<16x32xf32>
    %341 = arith.subf %324, %340 : vector<16x32xf32>
    %cst_218 = arith.constant 9.99999974E-6 : f32
    %342 = vector.broadcast %cst_218 : f32 to vector<16x1xf32>
    %343 = arith.addf %339, %342 : vector<16x1xf32>
    %344 = math.rsqrt %343 : vector<16x1xf32>
    %345 = vector.broadcast %344 : vector<16x1xf32> to vector<16x32xf32>
    %346 = arith.mulf %341, %345 : vector<16x32xf32>
    %347 = vector.broadcast %326 : vector<1x32xf32> to vector<16x32xf32>
    %348 = arith.mulf %346, %347 : vector<16x32xf32>
    %349 = vector.broadcast %328 : vector<1x32xf32> to vector<16x32xf32>
    %350 = arith.addf %348, %349 : vector<16x32xf32>
    %351 = arith.truncf %350 : vector<16x32xf32> to vector<16x32xbf16>
    %c1_219 = arith.constant 1 : index
    %c0_220 = arith.constant 0 : index
    %c0_221 = arith.constant 0 : index
    %352 = vector.load %arg18[%c1_219, %c0_220, %c0_221] : memref<2x32x64xbf16, #tpu.memory_space<vmem>>, vector<1x32x64xbf16>
    %353 = vector.shape_cast %352 : vector<1x32x64xbf16> to vector<32x64xbf16>
    %cst_222 = arith.constant dense<0.000000e+00> : vector<16x64xf32>
    %354 = tpu.matmul %351, %353, %cst_222 {dimension_numbers = #tpu.dot_dimension_numbers<[1], [0], [0], [1], [0, 0, 1, 1], [], []>} : vector<16x32xbf16>, vector<32x64xbf16>, vector<16x64xf32> -> vector<16x64xf32>
    %c1_223 = arith.constant 1 : index
    %c0_224 = arith.constant 0 : index
    %c0_225 = arith.constant 0 : index
    %355 = vector.load %arg19[%c1_223, %c0_224, %c0_225] : memref<2x1x64xf32, #tpu.memory_space<vmem>>, vector<1x1x64xf32>
    %356 = vector.shape_cast %355 : vector<1x1x64xf32> to vector<1x64xf32>
    %357 = vector.broadcast %356 : vector<1x64xf32> to vector<16x64xf32>
    %358 = arith.addf %354, %357 : vector<16x64xf32>
    %cst_226 = arith.constant 5.000000e-01 : f32
    %359 = vector.broadcast %cst_226 : f32 to vector<16x64xf32>
    %360 = arith.mulf %359, %358 : vector<16x64xf32>
    %cst_227 = arith.constant 4.471500e-02 : f32
    %361 = vector.broadcast %cst_227 : f32 to vector<16x64xf32>
    %362 = arith.mulf %361, %358 : vector<16x64xf32>
    %363 = arith.mulf %362, %358 : vector<16x64xf32>
    %364 = arith.mulf %363, %358 : vector<16x64xf32>
    %365 = arith.addf %358, %364 : vector<16x64xf32>
    %cst_228 = arith.constant 0.797884583 : f32
    %366 = vector.broadcast %cst_228 : f32 to vector<16x64xf32>
    %367 = arith.mulf %366, %365 : vector<16x64xf32>
    %368 = math.tanh %367 : vector<16x64xf32>
    %cst_229 = arith.constant 1.000000e+00 : f32
    %369 = vector.broadcast %cst_229 : f32 to vector<16x64xf32>
    %370 = arith.addf %369, %368 : vector<16x64xf32>
    %371 = arith.mulf %360, %370 : vector<16x64xf32>
    %372 = arith.truncf %371 : vector<16x64xf32> to vector<16x64xbf16>
    %c1_230 = arith.constant 1 : index
    %c0_231 = arith.constant 0 : index
    %c0_232 = arith.constant 0 : index
    %373 = vector.load %arg20[%c1_230, %c0_231, %c0_232] : memref<2x64x32xbf16, #tpu.memory_space<vmem>>, vector<1x64x32xbf16>
    %374 = vector.shape_cast %373 : vector<1x64x32xbf16> to vector<64x32xbf16>
    %cst_233 = arith.constant dense<0.000000e+00> : vector<16x32xf32>
    %375 = tpu.matmul %372, %374, %cst_233 {dimension_numbers = #tpu.dot_dimension_numbers<[1], [0], [0], [1], [0, 0, 1, 1], [], []>} : vector<16x64xbf16>, vector<64x32xbf16>, vector<16x32xf32> -> vector<16x32xf32>
    %c1_234 = arith.constant 1 : index
    %c0_235 = arith.constant 0 : index
    %c0_236 = arith.constant 0 : index
    %376 = vector.load %arg21[%c1_234, %c0_235, %c0_236] : memref<2x1x32xf32, #tpu.memory_space<vmem>>, vector<1x1x32xf32>
    %377 = vector.shape_cast %376 : vector<1x1x32xf32> to vector<1x32xf32>
    %378 = vector.broadcast %377 : vector<1x32xf32> to vector<16x32xf32>
    %379 = arith.addf %375, %378 : vector<16x32xf32>
    %380 = arith.addf %350, %379 : vector<16x32xf32>
    %c1_237 = arith.constant 1 : index
    %c0_238 = arith.constant 0 : index
    %c0_239 = arith.constant 0 : index
    %381 = vector.load %arg22[%c1_237, %c0_238, %c0_239] : memref<2x1x32xf32, #tpu.memory_space<vmem>>, vector<1x1x32xf32>
    %382 = vector.shape_cast %381 : vector<1x1x32xf32> to vector<1x32xf32>
    %c1_240 = arith.constant 1 : index
    %c0_241 = arith.constant 0 : index
    %c0_242 = arith.constant 0 : index
    %383 = vector.load %arg23[%c1_240, %c0_241, %c0_242] : memref<2x1x32xf32, #tpu.memory_space<vmem>>, vector<1x1x32xf32>
    %384 = vector.shape_cast %383 : vector<1x1x32xf32> to vector<1x32xf32>
    %cst_243 = arith.constant dense<0.000000e+00> : vector<16xf32>
    %385 = vector.multi_reduction <add>, %380, %cst_243 [1] : vector<16x32xf32> to vector<16xf32>
    %386 = vector.shape_cast %385 : vector<16xf32> to vector<16x1xf32>
    %cst_244 = arith.constant 3.200000e+01 : f32
    %387 = vector.broadcast %cst_244 : f32 to vector<16x1xf32>
    %388 = arith.divf %386, %387 : vector<16x1xf32>
    %389 = vector.broadcast %388 : vector<16x1xf32> to vector<16x32xf32>
    %390 = arith.subf %380, %389 : vector<16x32xf32>
    %391 = arith.mulf %390, %390 : vector<16x32xf32>
    %cst_245 = arith.constant dense<0.000000e+00> : vector<16xf32>
    %392 = vector.multi_reduction <add>, %391, %cst_245 [1] : vector<16x32xf32> to vector<16xf32>
    %393 = vector.shape_cast %392 : vector<16xf32> to vector<16x1xf32>
    %cst_246 = arith.constant 3.200000e+01 : f32
    %394 = vector.broadcast %cst_246 : f32 to vector<16x1xf32>
    %395 = arith.divf %393, %394 : vector<16x1xf32>
    %396 = vector.broadcast %388 : vector<16x1xf32> to vector<16x32xf32>
    %397 = arith.subf %380, %396 : vector<16x32xf32>
    %cst_247 = arith.constant 9.99999974E-6 : f32
    %398 = vector.broadcast %cst_247 : f32 to vector<16x1xf32>
    %399 = arith.addf %395, %398 : vector<16x1xf32>
    %400 = math.rsqrt %399 : vector<16x1xf32>
    %401 = vector.broadcast %400 : vector<16x1xf32> to vector<16x32xf32>
    %402 = arith.mulf %397, %401 : vector<16x32xf32>
    %403 = vector.broadcast %382 : vector<1x32xf32> to vector<16x32xf32>
    %404 = arith.mulf %402, %403 : vector<16x32xf32>
    %405 = vector.broadcast %384 : vector<1x32xf32> to vector<16x32xf32>
    %406 = arith.addf %404, %405 : vector<16x32xf32>
    %407 = vector.shape_cast %406 : vector<16x32xf32> to vector<2x8x32xf32>
    %cst_248 = arith.constant dense<0.000000e+00> : vector<2x32xf32>
    %408 = vector.multi_reduction <add>, %407, %cst_248 [1] : vector<2x8x32xf32> to vector<2x32xf32>
    %cst_249 = arith.constant 1.250000e-01 : f32
    %409 = vector.broadcast %cst_249 : f32 to vector<2x32xf32>
    %410 = arith.mulf %408, %409 : vector<2x32xf32>
    %411 = arith.truncf %410 : vector<2x32xf32> to vector<2x32xbf16>
    %c0_250 = arith.constant 0 : index
    %c0_251 = arith.constant 0 : index
    %412 = vector.load %arg24[%c0_250, %c0_251] : memref<32x3xbf16, #tpu.memory_space<vmem>>, vector<32x3xbf16>
    %cst_252 = arith.constant dense<0.000000e+00> : vector<2x3xf32>
    %413 = tpu.matmul %411, %412, %cst_252 {dimension_numbers = #tpu.dot_dimension_numbers<[1], [0], [0], [1], [0, 0, 1, 1], [], []>} : vector<2x32xbf16>, vector<32x3xbf16>, vector<2x3xf32> -> vector<2x3xf32>
    %c0_253 = arith.constant 0 : index
    %c0_254 = arith.constant 0 : index
    %414 = vector.load %arg25[%c0_253, %c0_254] : memref<1x3xf32, #tpu.memory_space<vmem>>, vector<1x3xf32>
    %415 = vector.broadcast %414 : vector<1x3xf32> to vector<2x3xf32>
    %416 = arith.addf %413, %415 : vector<2x3xf32>
    %c0_255 = arith.constant 0 : index
    %c0_256 = arith.constant 0 : index
    %417 = vector.load %arg26[%c0_255, %c0_256] : memref<2x3xf32, #tpu.memory_space<vmem>>, vector<2x3xf32>
    tpu.vector_store %arg26[%c0_255, %c0_256], %416 {strides = array<i32>} : memref<2x3xf32, #tpu.memory_space<vmem>>, vector<2x3xf32>,
    return
  }
}

</mosaic_0001>

<llo_original>
// kernel: roberta_classifier_forward.1
$region0: #{roberta_classifier_forward.1}
  #allocation0 [shape = 'u32[]', space=smem, size = 0x4, offset = 0x4, fixed_abs, tag = 'smem constant byte address 0x4 - core index']
  #allocation1 [shape = 'u32[144,128]{1,0:T(1,128)}', space=vmem, size = 0x12000, scoped, tag = 'internal scratch']
  %s0 = inlined_call_operand.vmem [shape: s32[16,1], index: 0, kind: input, shape index: {}]
  %s1 = inlined_call_operand.vmem [shape: s32[16,1], index: 1, kind: input, shape index: {}]
  %s2 = inlined_call_operand.vmem [shape: f32[2,8], index: 2, kind: input, shape index: {}]
  %s3 = inlined_call_operand.vmem [shape: bf16[100,32], index: 3, kind: input, shape index: {}]
  %s4 = inlined_call_operand.vmem [shape: bf16[24,32], index: 4, kind: input, shape index: {}]
  %s5 = inlined_call_operand.vmem [shape: f32[1,32], index: 5, kind: input, shape index: {}]
  %s6 = inlined_call_operand.vmem [shape: f32[1,32], index: 6, kind: input, shape index: {}]
  %s7 = inlined_call_operand.vmem [shape: f32[1,32], index: 7, kind: input, shape index: {}]
  %s8 = inlined_call_operand.vmem [shape: bf16[2,2,32,16], index: 8, kind: input, shape index: {}]
  %s9 = inlined_call_operand.vmem [shape: f32[2,2,1,16], index: 9, kind: input, shape index: {}]
  %s10 = inlined_call_operand.vmem [shape: bf16[2,2,32,16], index: 10, kind: input, shape index: {}]
  %s11 = inlined_call_operand.vmem [shape: f32[2,2,1,16], index: 11, kind: input, shape index: {}]
  %s12 = inlined_call_operand.vmem [shape: bf16[2,2,32,16], index: 12, kind: input, shape index: {}]
  %s13 = inlined_call_operand.vmem [shape: f32[2,2,1,16], index: 13, kind: input, shape index: {}]
  %s14 = inlined_call_operand.vmem [shape: bf16[2,2,16,32], index: 14, kind: input, shape index: {}]
  %s15 = inlined_call_operand.vmem [shape: f32[2,1,32], index: 15, kind: input, shape index: {}]
  %s16 = inlined_call_operand.vmem [shape: f32[2,1,32], index: 16, kind: input, shape index: {}]
  %s17 = inlined_call_operand.vmem [shape: f32[2,1,32], index: 17, kind: input, shape index: {}]
  %s18 = inlined_call_operand.vmem [shape: bf16[2,32,64], index: 18, kind: input, shape index: {}]
  %s19 = inlined_call_operand.vmem [shape: f32[2,1,64], index: 19, kind: input, shape index: {}]
  %s20 = inlined_call_operand.vmem [shape: bf16[2,64,32], index: 20, kind: input, shape index: {}]
  %s21 = inlined_call_operand.vmem [shape: f32[2,1,32], index: 21, kind: input, shape index: {}]
  %s22 = inlined_call_operand.vmem [shape: f32[2,1,32], index: 22, kind: input, shape index: {}]
  %s23 = inlined_call_operand.vmem [shape: f32[2,1,32], index: 23, kind: input, shape index: {}]
  %s24 = inlined_call_operand.vmem [shape: bf16[32,3], index: 24, kind: input, shape index: {}]
  %s25 = inlined_call_operand.vmem [shape: f32[1,3], index: 25, kind: input, shape index: {}]
  %s26 = inlined_call_operand.hbm [shape: f32[2,3], index: 26, kind: output, shape index: {}]
  %s27 = sld [smem:[#allocation0]]
  $region114: #{roberta_classifier_forward.1} parent=0
    _
  %s29 = ssub.s32 1, %s27
  %s30 = scalar_select 0, %s29, %s27
  $region1: #{roberta_classifier_forward.1} parent=0
    #allocation2 [shape = 'u8[1024]{0}', space=vmem, size = 0x400, scoped, tag = 'output window, operand 0, single buffered']
    #allocation3 [shape = 's32[1]{0}', space=sflag, size = 0x4, scoped, tag = 'scoped memory for roberta_classifier_forward.1']
    %31 = vsyncpa [#allocation3], 0
    // Predicated region
    $region2: #{roberta_classifier_forward.1} parent=1 // pred_check
      _
    $region3: #{roberta_classifier_forward.1} parent=1 // pred_check_branch
      %33 = sbr.rel (0) target = $region5
    $region4: #{roberta_classifier_forward.1} parent=1 // pred_region
      _
    $region5: #{roberta_classifier_forward.1} parent=1 // pred_fallthru
      _
    // Predicated region
    $region6: #{roberta_classifier_forward.1} parent=1 // pred_check
      _
    $region7: #{roberta_classifier_forward.1} parent=1 // pred_check_branch
      %35 = sbr.rel (0) target = $region9
    $region8: #{roberta_classifier_forward.1} parent=1 // pred_region
      _
    $region9: #{roberta_classifier_forward.1} parent=1 // pred_fallthru
      _
    // Predicated region
    $region10: #{roberta_classifier_forward.1} parent=1 // pred_check
      _
    $region11: #{roberta_classifier_forward.1} parent=1 // pred_check_branch
      %37 = sbr.rel (0) target = $region13
    $region12: #{roberta_classifier_forward.1} parent=1 // pred_region
      _
    $region13: #{roberta_classifier_forward.1} parent=1 // pred_fallthru
      _
    // Predicated region
    $region14: #{roberta_classifier_forward.1} parent=1 // pred_check
      _
    $region15: #{roberta_classifier_forward.1} parent=1 // pred_check_branch
      %39 = sbr.rel (0) target = $region17
    $region16: #{roberta_classifier_forward.1} parent=1 // pred_region
      _
    $region17: #{roberta_classifier_forward.1} parent=1 // pred_fallthru
      _
    // Predicated region
    $region18: #{roberta_classifier_forward.1} parent=1 // pred_check
      _
    $region19: #{roberta_classifier_forward.1} parent=1 // pred_check_branch
      %41 = sbr.rel (0) target = $region21
    $region20: #{roberta_classifier_forward.1} parent=1 // pred_region
      _
    $region21: #{roberta_classifier_forward.1} parent=1 // pred_fallthru
      _
    // Predicated region
    $region22: #{roberta_classifier_forward.1} parent=1 // pred_check
      _
    $region23: #{roberta_classifier_forward.1} parent=1 // pred_check_branch
      %43 = sbr.rel (0) target = $region25
    $region24: #{roberta_classifier_forward.1} parent=1 // pred_region
      _
    $region25: #{roberta_classifier_forward.1} parent=1 // pred_fallthru
      _
    // Predicated region
    $region26: #{roberta_classifier_forward.1} parent=1 // pred_check
      _
    $region27: #{roberta_classifier_forward.1} parent=1 // pred_check_branch
      %45 = sbr.rel (0) target = $region29
    $region28: #{roberta_classifier_forward.1} parent=1 // pred_region
      _
    $region29: #{roberta_classifier_forward.1} parent=1 // pred_fallthru
      _
    // Predicated region
    $region30: #{roberta_classifier_forward.1} parent=1 // pred_check
      _
    $region31: #{roberta_classifier_forward.1} parent=1 // pred_check_branch
      %47 = sbr.rel (0) target = $region33
    $region32: #{roberta_classifier_forward.1} parent=1 // pred_region
      _
    $region33: #{roberta_classifier_forward.1} parent=1 // pred_fallthru
      _
    // Predicated region
    $region34: #{roberta_classifier_forward.1} parent=1 // pred_check
      _
    $region35: #{roberta_classifier_forward.1} parent=1 // pred_check_branch
      %49 = sbr.rel (0) target = $region37
    $region36: #{roberta_classifier_forward.1} parent=1 // pred_region
      _
    $region37: #{roberta_classifier_forward.1} parent=1 // pred_fallthru
      _
    // Predicated region
    $region38: #{roberta_classifier_forward.1} parent=1 // pred_check
      _
    $region39: #{roberta_classifier_forward.1} parent=1 // pred_check_branch
      %51 = sbr.rel (0) target = $region41
    $region40: #{roberta_classifier_forward.1} parent=1 // pred_region
      _
    $region41: #{roberta_classifier_forward.1} parent=1 // pred_fallthru
      _
    // Predicated region
    $region42: #{roberta_classifier_forward.1} parent=1 // pred_check
      _
    $region43: #{roberta_classifier_forward.1} parent=1 // pred_check_branch
      %53 = sbr.rel (0) target = $region45
    $region44: #{roberta_classifier_forward.1} parent=1 // pred_region
      _
    $region45: #{roberta_classifier_forward.1} parent=1 // pred_fallthru
      _
    // Predicated region
    $region46: #{roberta_classifier_forward.1} parent=1 // pred_check
      _
    $region47: #{roberta_classifier_forward.1} parent=1 // pred_check_branch
      %55 = sbr.rel (0) target = $region49
    $region48: #{roberta_classifier_forward.1} parent=1 // pred_region
      _
    $region49: #{roberta_classifier_forward.1} parent=1 // pred_fallthru
      _
    // Predicated region
    $region50: #{roberta_classifier_forward.1} parent=1 // pred_check
      _
    $region51: #{roberta_classifier_forward.1} parent=1 // pred_check_branch
      %57 = sbr.rel (0) target = $region53
    $region52: #{roberta_classifier_forward.1} parent=1 // pred_region
      _
    $region53: #{roberta_classifier_forward.1} parent=1 // pred_fallthru
      _
    // Predicated region
    $region54: #{roberta_classifier_forward.1} parent=1 // pred_check
      _
    $region55: #{roberta_classifier_forward.1} parent=1 // pred_check_branch
      %59 = sbr.rel (0) target = $region57
    $region56: #{roberta_classifier_forward.1} parent=1 // pred_region
      _
    $region57: #{roberta_classifier_forward.1} parent=1 // pred_fallthru
      _
    // Predicated region
    $region58: #{roberta_classifier_forward.1} parent=1 // pred_check
      _
    $region59: #{roberta_classifier_forward.1} parent=1 // pred_check_branch
      %61 = sbr.rel (0) target = $region61
    $region60: #{roberta_classifier_forward.1} parent=1 // pred_region
      _
    $region61: #{roberta_classifier_forward.1} parent=1 // pred_fallthru
      _
    // Predicated region
    $region62: #{roberta_classifier_forward.1} parent=1 // pred_check
      _
    $region63: #{roberta_classifier_forward.1} parent=1 // pred_check_branch
      %63 = sbr.rel (0) target = $region65
    $region64: #{roberta_classifier_forward.1} parent=1 // pred_region
      _
    $region65: #{roberta_classifier_forward.1} parent=1 // pred_fallthru
      _
    // Predicated region
    $region66: #{roberta_classifier_forward.1} parent=1 // pred_check
      _
    $region67: #{roberta_classifier_forward.1} parent=1 // pred_check_branch
      %65 = sbr.rel (0) target = $region69
    $region68: #{roberta_classifier_forward.1} parent=1 // pred_region
      _
    $region69: #{roberta_classifier_forward.1} parent=1 // pred_fallthru
      _
    // Predicated region
    $region70: #{roberta_classifier_forward.1} parent=1 // pred_check
      _
    $region71: #{roberta_classifier_forward.1} parent=1 // pred_check_branch
      %67 = sbr.rel (0) target = $region73
    $region72: #{roberta_classifier_forward.1} parent=1 // pred_region
      _
    $region73: #{roberta_classifier_forward.1} parent=1 // pred_fallthru
      _
    // Predicated region
    $region74: #{roberta_classifier_forward.1} parent=1 // pred_check
      _
    $region75: #{roberta_classifier_forward.1} parent=1 // pred_check_branch
      %69 = sbr.rel (0) target = $region77
    $region76: #{roberta_classifier_forward.1} parent=1 // pred_region
      _
    $region77: #{roberta_classifier_forward.1} parent=1 // pred_fallthru
      _
    // Predicated region
    $region78: #{roberta_classifier_forward.1} parent=1 // pred_check
      _
    $region79: #{roberta_classifier_forward.1} parent=1 // pred_check_branch
      %71 = sbr.rel (0) target = $region81
    $region80: #{roberta_classifier_forward.1} parent=1 // pred_region
      _
    $region81: #{roberta_classifier_forward.1} parent=1 // pred_fallthru
      _
    // Predicated region
    $region82: #{roberta_classifier_forward.1} parent=1 // pred_check
      _
    $region83: #{roberta_classifier_forward.1} parent=1 // pred_check_branch
      %73 = sbr.rel (0) target = $region85
    $region84: #{roberta_classifier_forward.1} parent=1 // pred_region
      _
    $region85: #{roberta_classifier_forward.1} parent=1 // pred_fallthru
      _
    // Predicated region
    $region86: #{roberta_classifier_forward.1} parent=1 // pred_check
      _
    $region87: #{roberta_classifier_forward.1} parent=1 // pred_check_branch
      %75 = sbr.rel (0) target = $region89
    $region88: #{roberta_classifier_forward.1} parent=1 // pred_region
      _
    $region89: #{roberta_classifier_forward.1} parent=1 // pred_fallthru
      _
    // Predicated region
    $region90: #{roberta_classifier_forward.1} parent=1 // pred_check
      _
    $region91: #{roberta_classifier_forward.1} parent=1 // pred_check_branch
      %77 = sbr.rel (0) target = $region93
    $region92: #{roberta_classifier_forward.1} parent=1 // pred_region
      _
    $region93: #{roberta_classifier_forward.1} parent=1 // pred_fallthru
      _
    // Predicated region
    $region94: #{roberta_classifier_forward.1} parent=1 // pred_check
      _
    $region95: #{roberta_classifier_forward.1} parent=1 // pred_check_branch
      %79 = sbr.rel (0) target = $region97
    $region96: #{roberta_classifier_forward.1} parent=1 // pred_region
      _
    $region97: #{roberta_classifier_forward.1} parent=1 // pred_fallthru
      _
    // Predicated region
    $region98: #{roberta_classifier_forward.1} parent=1 // pred_check
      _
    $region99: #{roberta_classifier_forward.1} parent=1 // pred_check_branch
      %81 = sbr.rel (0) target = $region101
    $region100: #{roberta_classifier_forward.1} parent=1 // pred_region
      _
    $region101: #{roberta_classifier_forward.1} parent=1 // pred_fallthru
      _
    // Predicated region
    $region102: #{roberta_classifier_forward.1} parent=1 // pred_check
      _
    $region103: #{roberta_classifier_forward.1} parent=1 // pred_check_branch
      %83 = sbr.rel (0) target = $region105
    $region104: #{roberta_classifier_forward.1} parent=1 // pred_region
      _
    $region105: #{roberta_classifier_forward.1} parent=1 // pred_fallthru
      _
    %v85 = vld [vmem:[%s0] sm:$0xff]
    %v86 = vld [vmem:[%s0 + $0x8] sm:$0xff]
    %v87 = vlaneseq
    %v88 = vand.u32 %v87, 127
    %89 = vset.pattern.permute.xlu0 0
    %90 = vperm.xlu0 %89, %v85
    %v91 = vpop.permute.xlu0 %90
    %92 = vset.pattern.permute.xlu0 0
    %93 = vperm.xlu0 %92, %v86
    %v94 = vpop.permute.xlu0 %93
    %vm95 = vcmp.eq.s32.totalorder %v91, %v88
    %vm96 = vcmp.eq.s32.totalorder %v94, %v88
    %v97 = vsel %vm95, 1, 0
    %v98 = vsel %vm96, 1, 0
    %v99 = vcvt.s32.f32 %v97
    %v100 = vcvt.s32.f32 %v98
    %v101 = vpack.c.bf16 %v100, %v99
    %v102 = vld [vmem:[%s1] sm:$0xff]
    %v103 = vld [vmem:[%s1 + $0x8] sm:$0xff]
    %104 = vset.pattern.permute.xlu0 0
    %105 = vperm.xlu0 %104, %v102
    %v106 = vpop.permute.xlu0 %105
    %107 = vset.pattern.permute.xlu0 0
    %108 = vperm.xlu0 %107, %v103
    %v109 = vpop.permute.xlu0 %108
    %vm110 = vcmp.eq.s32.totalorder %v106, %v88
    %vm111 = vcmp.eq.s32.totalorder %v109, %v88
    %v112 = vsel %vm110, 1, 0
    %v113 = vsel %vm111, 1, 0
    %v114 = vcvt.s32.f32 %v112
    %v115 = vcvt.s32.f32 %v113
    %v116 = vpack.c.bf16 %v115, %v114
    %v117 = vld [vmem:[%s3] sm:$0xf]
    %v118 = vld [vmem:[%s3 + $0x4] sm:$0xf]
    %v119 = vld [vmem:[%s3 + $0x8] sm:$0xf]
    %v120 = vld [vmem:[%s3 + $0xc] sm:$0xf]
    %v121 = vld [vmem:[%s3 + $0x10] sm:$0xf]
    %v122 = vld [vmem:[%s3 + $0x14] sm:$0xf]
    %v123 = vld [vmem:[%s3 + $0x18] sm:$0xf]
    %v124 = vld [vmem:[%s3 + $0x1c] sm:$0xf]
    %v125 = vld [vmem:[%s3 + $0x20] sm:$0xf]
    %v126 = vld [vmem:[%s3 + $0x24] sm:$0xf]
    %v127 = vld [vmem:[%s3 + $0x28] sm:$0xf]
    %v128 = vld [vmem:[%s3 + $0x2c] sm:$0xf]
    %v129 = vld [vmem:[%s3 + $0x30] sm:$0x3]
    %v130 = vld [vmem:[%s4] sm:$0xf]
    %v131 = vld [vmem:[%s4 + $0x4] sm:$0xf]
    %v132 = vld [vmem:[%s4 + $0x8] sm:$0xf]
    %v136 = vunpack.c.l.b16 %v130
    %v137 = vunpack.c.l.b16 %v131
    %v138 = vunpack.c.l.b16 %v132
    %v139 = vpack.c.b16 %v137, %v136
    %v140 = vpack.c.b16 %v138, %v138
    %vm142 = vcmask 195584
    %v144 = vsel %vm142, %v116, 0
    %vm146 = vcmask 1043456
    %v148 = vsel %vm146, %v140, 0
    %150 = vmatprep.subr.bf16.mxu0 0
    %151 = vmatpush1.bf16.msra.mxu0 %v139
    %152 = vmatprep.subr.bf16.mxu0 0
    %153 = vmatpush1.bf16.msra.mxu0 %v148
    %154 = vmatprep.subr.bf16.mxu0 0
    %155 = vmatpush1.bf16.msra.mxu0 0
    %156 = vmatprep.subr.bf16.mxu0 0
    %157 = vmatpush1.bf16.msra.mxu0 0
    %158 = vmatprep.subr.bf16.mxu0 0
    %159 = vmatpush1.bf16.msra.mxu0 0
    %160 = vmatprep.subr.bf16.mxu0 0
    %161 = vmatpush1.bf16.msra.mxu0 0
    %162 = vmatprep.subr.bf16.mxu0 0
    %163 = vmatpush1.bf16.msra.mxu0 0
    %164 = vmatprep.subr.bf16.mxu0 0
    %165 = vmatpush1.bf16.msra.mxu0 0
    %166 = vmatprep.subr.bf16.mxu0 0
    %167 = vmatpush1.bf16.msra.mxu0 0
    %168 = vmatprep.subr.bf16.mxu0 0
    %169 = vmatpush1.bf16.msra.mxu0 0
    %170 = vmatprep.subr.bf16.mxu0 0
    %171 = vmatpush1.bf16.msra.mxu0 0
    %172 = vmatprep.subr.bf16.mxu0 0
    %173 = vmatpush1.bf16.msra.mxu0 0
    %174 = vmatprep.subr.bf16.mxu0 0
    %175 = vmatpush1.bf16.msra.mxu0 0
    %176 = vmatprep.subr.bf16.mxu0 0
    %177 = vmatpush1.bf16.msra.mxu0 0
    %178 = vmatprep.subr.bf16.mxu0 0
    %179 = vmatpush1.bf16.msra.mxu0 0
    %180 = vmatprep.subr.bf16.mxu0 0
    %181 = vmatpush1.bf16.msra.mxu0 0
    %182 = vmatprep.mubr.bf16.mxu0 0
    %183 = vmatmul.mubr.bf16.gmra.mrb[0].mxu0 %v144
    %v184 = vpop.f32.mrb[0].mxu0
    %v185 = vadd.f32 0.0, %v184
    %v186 = vpop.f32.mrb[0].mxu0
    %v187 = vpop.f32.mrb[0].mxu0
    %v188 = vadd.f32 0.0, %v187
    %v189 = vpop.f32.mrb[0].mxu0
    %190 = vdwg.mxu0
    %v204 = vunpack.c.l.b16 %v117
    %v205 = vunpack.c.l.b16 %v118
    %v206 = vunpack.c.l.b16 %v119
    %v207 = vunpack.c.l.b16 %v120
    %v208 = vunpack.c.l.b16 %v121
    %v209 = vunpack.c.l.b16 %v122
    %v210 = vunpack.c.l.b16 %v123
    %v211 = vunpack.c.l.b16 %v124
    %v212 = vunpack.c.l.b16 %v125
    %v213 = vunpack.c.l.b16 %v126
    %v214 = vunpack.c.l.b16 %v127
    %v215 = vunpack.c.l.b16 %v128
    %v216 = vunpack.c.l.b16 %v129
    %v217 = vpack.c.b16 %v205, %v204
    %v218 = vpack.c.b16 %v207, %v206
    %v219 = vpack.c.b16 %v209, %v208
    %v220 = vpack.c.b16 %v211, %v210
    %v221 = vpack.c.b16 %v213, %v212
    %v222 = vpack.c.b16 %v215, %v214
    %v223 = vpack.c.b16 %v216, %v216
    %vm230 = vcmask 818176
    %v232 = vsel %vm230, %v101, 0
    %vm234 = vcmask 1041408
    %v236 = vsel %vm234, %v223, 0
    %238 = vmatprep.subr.bf16.mxu0 0
    %239 = vmatpush1.bf16.msra.mxu0 %v217
    %240 = vmatprep.subr.bf16.mxu0 0
    %241 = vmatpush1.bf16.msra.mxu0 %v218
    %242 = vmatprep.subr.bf16.mxu0 0
    %243 = vmatpush1.bf16.msra.mxu0 %v219
    %244 = vmatprep.subr.bf16.mxu0 0
    %245 = vmatpush1.bf16.msra.mxu0 %v220
    %246 = vmatprep.subr.bf16.mxu0 0
    %247 = vmatpush1.bf16.msra.mxu0 %v221
    %248 = vmatprep.subr.bf16.mxu0 0
    %249 = vmatpush1.bf16.msra.mxu0 %v222
    %250 = vmatprep.subr.bf16.mxu0 0
    %251 = vmatpush1.bf16.msra.mxu0 %v236
    %252 = vmatprep.subr.bf16.mxu0 0
    %253 = vmatpush1.bf16.msra.mxu0 0
    %254 = vmatprep.subr.bf16.mxu0 0
    %255 = vmatpush1.bf16.msra.mxu0 0
    %256 = vmatprep.subr.bf16.mxu0 0
    %257 = vmatpush1.bf16.msra.mxu0 0
    %258 = vmatprep.subr.bf16.mxu0 0
    %259 = vmatpush1.bf16.msra.mxu0 0
    %260 = vmatprep.subr.bf16.mxu0 0
    %261 = vmatpush1.bf16.msra.mxu0 0
    %262 = vmatprep.subr.bf16.mxu0 0
    %263 = vmatpush1.bf16.msra.mxu0 0
    %264 = vmatprep.subr.bf16.mxu0 0
    %265 = vmatpush1.bf16.msra.mxu0 0
    %266 = vmatprep.subr.bf16.mxu0 0
    %267 = vmatpush1.bf16.msra.mxu0 0
    %268 = vmatprep.subr.bf16.mxu0 0
    %269 = vmatpush1.bf16.msra.mxu0 0
    %270 = vmatprep.mubr.bf16.mxu0 0
    %271 = vmatmul.mubr.bf16.gmra.mrb[0].mxu0 %v232
    %v272 = vpop.f32.mrb[0].mxu0
    %v273 = vadd.f32 %v185, %v272
    %v274 = vpop.f32.mrb[0].mxu0
    %v275 = vpop.f32.mrb[0].mxu0
    %v276 = vadd.f32 %v188, %v275
    %v277 = vpop.f32.mrb[0].mxu0
    %278 = vdwg.mxu0
    %v279 = vld [vmem:[%s5] sm:$0x1]
    %v281 = vlaneseq
    %v282 = vshrl.u32 %v281, 7
    %v283 = vsub.s32 0, %v282
    %v284 = vrot.slane %v279, %v283
    %v286 = vadd.f32 %v273, %v284
    %v287 = vadd.f32 %v276, %v284
    %v288 = vld [vmem:[%s6] sm:$0x1]
    %v289 = vld [vmem:[%s7] sm:$0x1]
    %vm290 = vcmask 261120
    %v291 = vsel %vm290, %v286, 0.0
    %292 = vadd.xlane.f32.xlu0 %v291
    %v293 = vpop.xlane.xlu0 %292
    %v294 = vsel %vm290, %v287, 0.0
    %295 = vadd.xlane.f32.xlu0 %v294
    %v296 = vpop.xlane.xlu0 %295
    %v297 = vrcp.pop 32.0
    %v298 = vmul.f32 %v293, %v297
    %v299 = vmul.f32 %v296, %v297
    %v300 = vsub.f32 %v286, %v298
    %v301 = vsub.f32 %v287, %v299
    %v302 = vmul.f32 %v300, %v300
    %v303 = vmul.f32 %v301, %v301
    %v304 = vsel %vm290, %v302, 0.0
    %305 = vadd.xlane.f32.xlu0 %v304
    %v306 = vpop.xlane.xlu0 %305
    %v307 = vsel %vm290, %v303, 0.0
    %308 = vadd.xlane.f32.xlu0 %v307
    %v309 = vpop.xlane.xlu0 %308
    %v310 = vmul.f32 %v306, %v297
    %v311 = vmul.f32 %v309, %v297
    %v312 = vadd.f32 %v310, 1e-05
    %v313 = vadd.f32 %v311, 1e-05
    %v314 = vrsqrt.pop %v312
    %v315 = vrsqrt.pop %v313
    %v316 = vmul.f32 %v300, %v314
    %v317 = vmul.f32 %v301, %v315
    %v319 = vlaneseq
    %v320 = vshrl.u32 %v319, 7
    %v321 = vsub.s32 0, %v320
    %v322 = vrot.slane %v288, %v321
    %v324 = vmul.f32 %v316, %v322
    %v325 = vmul.f32 %v317, %v322
    %v327 = vlaneseq
    %v328 = vshrl.u32 %v327, 7
    %v329 = vsub.s32 0, %v328
    %v330 = vrot.slane %v289, %v329
    %v332 = vadd.f32 %v324, %v330
    %v333 = vadd.f32 %v325, %v330
    %v334 = vld [vmem:[%s2] sm:$0x3]
    %v335 = vsub.f32 1.0, %v334
    %v336 = vmul.f32 %v335, -1e+09
    %v339 = vunpack.c.l.s4 1966171168
    %v340 = vunpack.c.0.s8 %v339
    %v341 = vlaneseq
    %v342 = vshrl.u32 %v341, 7
    %v343 = vsub.s32 %v340, %v342
    %v344 = vrot.slane %v336, %v343
    %v345 = vcombine.high %v344, %v344
    %v347 = vunpack.c.l.s4 1966171168
    %v348 = vunpack.c.0.s8 %v347
    %v349 = vlaneseq
    %v350 = vshrl.u32 %v349, 7
    %v351 = vsub.s32 %v348, %v350
    %v352 = vrot.slane %v344, %v351
    %v354 = vunpack.c.l.s4 1966171168
    %v355 = vunpack.c.0.s8 %v354
    %v356 = vlaneseq
    %v357 = vshrl.u32 %v356, 7
    %v358 = vsub.s32 %v355, %v357
    %v359 = vrot.slane %v345, %v358
    %v360 = vpack.c.bf16 %v333, %v332
    %v361 = vld [vmem:[%s8] sm:$0xf]
    %v362 = vld [vmem:[%s8 + $0x4] sm:$0xf]
    %v363 = vld [vmem:[%s8 + $0x8] sm:$0xf]
    %v364 = vld [vmem:[%s8 + $0xc] sm:$0xf]
    %v365 = vld [vmem:[%s9] sm:$0x1]
    %v367 = vlaneseq
    %v368 = vshrl.u32 %v367, 7
    %v369 = vsub.s32 0, %v368
    %v370 = vrot.slane %v365, %v369
    %v376 = vunpack.c.l.b16 %v361
    %v377 = vunpack.c.l.b16 %v362
    %v378 = vunpack.c.l.b16 %v363
    %v379 = vunpack.c.l.b16 %v364
    %v380 = vpack.c.b16 %v377, %v376
    %v381 = vpack.c.b16 %v379, %v378
    %v385 = vsel %vm290, %v360, 0
    %387 = vmatprep.subr.bf16.mxu0 0
    %388 = vmatpush1.bf16.msra.mxu0 %v380
    %389 = vmatprep.subr.bf16.mxu0 0
    %390 = vmatpush1.bf16.msra.mxu0 %v381
    %391 = vmatprep.subr.bf16.mxu0 0
    %392 = vmatpush1.bf16.msra.mxu0 0
    %393 = vmatprep.subr.bf16.mxu0 0
    %394 = vmatpush1.bf16.msra.mxu0 0
    %395 = vmatprep.subr.bf16.mxu0 0
    %396 = vmatpush1.bf16.msra.mxu0 0
    %397 = vmatprep.subr.bf16.mxu0 0
    %398 = vmatpush1.bf16.msra.mxu0 0
    %399 = vmatprep.subr.bf16.mxu0 0
    %400 = vmatpush1.bf16.msra.mxu0 0
    %401 = vmatprep.subr.bf16.mxu0 0
    %402 = vmatpush1.bf16.msra.mxu0 0
    %403 = vmatprep.subr.bf16.mxu0 0
    %404 = vmatpush1.bf16.msra.mxu0 0
    %405 = vmatprep.subr.bf16.mxu0 0
    %406 = vmatpush1.bf16.msra.mxu0 0
    %407 = vmatprep.subr.bf16.mxu0 0
    %408 = vmatpush1.bf16.msra.mxu0 0
    %409 = vmatprep.subr.bf16.mxu0 0
    %410 = vmatpush1.bf16.msra.mxu0 0
    %411 = vmatprep.subr.bf16.mxu0 0
    %412 = vmatpush1.bf16.msra.mxu0 0
    %413 = vmatprep.subr.bf16.mxu0 0
    %414 = vmatpush1.bf16.msra.mxu0 0
    %415 = vmatprep.subr.bf16.mxu0 0
    %416 = vmatpush1.bf16.msra.mxu0 0
    %417 = vmatprep.subr.bf16.mxu0 0
    %418 = vmatpush1.bf16.msra.mxu0 0
    %419 = vmatprep.mubr.bf16.mxu0 0
    %420 = vmatmul.mubr.bf16.gmra.mrb[0].mxu0 %v385
    %v421 = vpop.f32.mrb[0].mxu0
    %v422 = vadd.f32 %v370, %v421
    %v423 = vpop.f32.mrb[0].mxu0
    %v424 = vpop.f32.mrb[0].mxu0
    %v425 = vadd.f32 %v370, %v424
    %v426 = vpop.f32.mrb[0].mxu0
    %427 = vdwg.mxu0
    %v428 = vmul.f32 %v422, 0.25
    %v429 = vmul.f32 %v425, 0.25
    %v430 = vld [vmem:[%s10] sm:$0xf]
    %v431 = vld [vmem:[%s10 + $0x4] sm:$0xf]
    %v432 = vld [vmem:[%s10 + $0x8] sm:$0xf]
    %v433 = vld [vmem:[%s10 + $0xc] sm:$0xf]
    %v434 = vld [vmem:[%s11] sm:$0x1]
    %v436 = vlaneseq
    %v437 = vshrl.u32 %v436, 7
    %v438 = vsub.s32 0, %v437
    %v439 = vrot.slane %v434, %v438
    %v445 = vunpack.c.l.b16 %v430
    %v446 = vunpack.c.l.b16 %v431
    %v447 = vunpack.c.l.b16 %v432
    %v448 = vunpack.c.l.b16 %v433
    %v449 = vpack.c.b16 %v446, %v445
    %v450 = vpack.c.b16 %v448, %v447
    %453 = vmatprep.subr.bf16.mxu0 0
    %454 = vmatpush1.bf16.msra.mxu0 %v449
    %455 = vmatprep.subr.bf16.mxu0 0
    %456 = vmatpush1.bf16.msra.mxu0 %v450
    %457 = vmatprep.subr.bf16.mxu0 0
    %458 = vmatpush1.bf16.msra.mxu0 0
    %459 = vmatprep.subr.bf16.mxu0 0
    %460 = vmatpush1.bf16.msra.mxu0 0
    %461 = vmatprep.subr.bf16.mxu0 0
    %462 = vmatpush1.bf16.msra.mxu0 0
    %463 = vmatprep.subr.bf16.mxu0 0
    %464 = vmatpush1.bf16.msra.mxu0 0
    %465 = vmatprep.subr.bf16.mxu0 0
    %466 = vmatpush1.bf16.msra.mxu0 0
    %467 = vmatprep.subr.bf16.mxu0 0
    %468 = vmatpush1.bf16.msra.mxu0 0
    %469 = vmatprep.subr.bf16.mxu0 0
    %470 = vmatpush1.bf16.msra.mxu0 0
    %471 = vmatprep.subr.bf16.mxu0 0
    %472 = vmatpush1.bf16.msra.mxu0 0
    %473 = vmatprep.subr.bf16.mxu0 0
    %474 = vmatpush1.bf16.msra.mxu0 0
    %475 = vmatprep.subr.bf16.mxu0 0
    %476 = vmatpush1.bf16.msra.mxu0 0
    %477 = vmatprep.subr.bf16.mxu0 0
    %478 = vmatpush1.bf16.msra.mxu0 0
    %479 = vmatprep.subr.bf16.mxu0 0
    %480 = vmatpush1.bf16.msra.mxu0 0
    %481 = vmatprep.subr.bf16.mxu0 0
    %482 = vmatpush1.bf16.msra.mxu0 0
    %483 = vmatprep.subr.bf16.mxu0 0
    %484 = vmatpush1.bf16.msra.mxu0 0
    %485 = vmatprep.mubr.bf16.mxu0 0
    %486 = vmatmul.mubr.bf16.gmra.mrb[0].mxu0 %v385
    %v487 = vpop.f32.mrb[0].mxu0
    %v488 = vadd.f32 %v439, %v487
    %v489 = vpop.f32.mrb[0].mxu0
    %v490 = vpop.f32.mrb[0].mxu0
    %v491 = vadd.f32 %v439, %v490
    %v492 = vpop.f32.mrb[0].mxu0
    %493 = vdwg.mxu0
    %v494 = vld [vmem:[%s12] sm:$0xf]
    %v495 = vld [vmem:[%s12 + $0x4] sm:$0xf]
    %v496 = vld [vmem:[%s12 + $0x8] sm:$0xf]
    %v497 = vld [vmem:[%s12 + $0xc] sm:$0xf]
    %v498 = vld [vmem:[%s13] sm:$0x1]
    %v500 = vlaneseq
    %v501 = vshrl.u32 %v500, 7
    %v502 = vsub.s32 0, %v501
    %v503 = vrot.slane %v498, %v502
    %v509 = vunpack.c.l.b16 %v494
    %v510 = vunpack.c.l.b16 %v495
    %v511 = vunpack.c.l.b16 %v496
    %v512 = vunpack.c.l.b16 %v497
    %v513 = vpack.c.b16 %v510, %v509
    %v514 = vpack.c.b16 %v512, %v511
    %517 = vmatprep.subr.bf16.mxu0 0
    %518 = vmatpush1.bf16.msra.mxu0 %v513
    %519 = vmatprep.subr.bf16.mxu0 0
    %520 = vmatpush1.bf16.msra.mxu0 %v514
    %521 = vmatprep.subr.bf16.mxu0 0
    %522 = vmatpush1.bf16.msra.mxu0 0
    %523 = vmatprep.subr.bf16.mxu0 0
    %524 = vmatpush1.bf16.msra.mxu0 0
    %525 = vmatprep.subr.bf16.mxu0 0
    %526 = vmatpush1.bf16.msra.mxu0 0
    %527 = vmatprep.subr.bf16.mxu0 0
    %528 = vmatpush1.bf16.msra.mxu0 0
    %529 = vmatprep.subr.bf16.mxu0 0
    %530 = vmatpush1.bf16.msra.mxu0 0
    %531 = vmatprep.subr.bf16.mxu0 0
    %532 = vmatpush1.bf16.msra.mxu0 0
    %533 = vmatprep.subr.bf16.mxu0 0
    %534 = vmatpush1.bf16.msra.mxu0 0
    %535 = vmatprep.subr.bf16.mxu0 0
    %536 = vmatpush1.bf16.msra.mxu0 0
    %537 = vmatprep.subr.bf16.mxu0 0
    %538 = vmatpush1.bf16.msra.mxu0 0
    %539 = vmatprep.subr.bf16.mxu0 0
    %540 = vmatpush1.bf16.msra.mxu0 0
    %541 = vmatprep.subr.bf16.mxu0 0
    %542 = vmatpush1.bf16.msra.mxu0 0
    %543 = vmatprep.subr.bf16.mxu0 0
    %544 = vmatpush1.bf16.msra.mxu0 0
    %545 = vmatprep.subr.bf16.mxu0 0
    %546 = vmatpush1.bf16.msra.mxu0 0
    %547 = vmatprep.subr.bf16.mxu0 0
    %548 = vmatpush1.bf16.msra.mxu0 0
    %549 = vmatprep.mubr.bf16.mxu0 0
    %550 = vmatmul.mubr.bf16.gmra.mrb[0].mxu0 %v385
    %v551 = vpop.f32.mrb[0].mxu0
    %v552 = vadd.f32 %v503, %v551
    %v553 = vpop.f32.mrb[0].mxu0
    %v554 = vpop.f32.mrb[0].mxu0
    %v555 = vadd.f32 %v503, %v554
    %v556 = vpop.f32.mrb[0].mxu0
    %557 = vdwg.mxu0
    %v558 = vpack.c.bf16 %v428, %v428
    %v559 = vpack.c.bf16 %v429, %v429
    %v560 = vpack.c.bf16 %v488, %v488
    %v561 = vpack.c.bf16 %v491, %v491
    %v562 = vpack.c.bf16 %v552, %v552
    %v563 = vpack.c.bf16 %v555, %v555
    %s564 = scalar_lea.vmem %s8, 16
    %v565 = vld [vmem:[%s564] sm:$0xf]
    %v566 = vld [vmem:[%s564 + $0x4] sm:$0xf]
    %v567 = vld [vmem:[%s564 + $0x8] sm:$0xf]
    %v568 = vld [vmem:[%s564 + $0xc] sm:$0xf]
    %s569 = scalar_lea.vmem %s9, 1
    %v570 = vld [vmem:[%s569] sm:$0x1]
    %v572 = vlaneseq
    %v573 = vshrl.u32 %v572, 7
    %v574 = vsub.s32 0, %v573
    %v575 = vrot.slane %v570, %v574
    %v581 = vunpack.c.l.b16 %v565
    %v582 = vunpack.c.l.b16 %v566
    %v583 = vunpack.c.l.b16 %v567
    %v584 = vunpack.c.l.b16 %v568
    %v585 = vpack.c.b16 %v582, %v581
    %v586 = vpack.c.b16 %v584, %v583
    %589 = vmatprep.subr.bf16.mxu0 0
    %590 = vmatpush1.bf16.msra.mxu0 %v585
    %591 = vmatprep.subr.bf16.mxu0 0
    %592 = vmatpush1.bf16.msra.mxu0 %v586
    %593 = vmatprep.subr.bf16.mxu0 0
    %594 = vmatpush1.bf16.msra.mxu0 0
    %595 = vmatprep.subr.bf16.mxu0 0
    %596 = vmatpush1.bf16.msra.mxu0 0
    %597 = vmatprep.subr.bf16.mxu0 0
    %598 = vmatpush1.bf16.msra.mxu0 0
    %599 = vmatprep.subr.bf16.mxu0 0
    %600 = vmatpush1.bf16.msra.mxu0 0
    %601 = vmatprep.subr.bf16.mxu0 0
    %602 = vmatpush1.bf16.msra.mxu0 0
    %603 = vmatprep.subr.bf16.mxu0 0
    %604 = vmatpush1.bf16.msra.mxu0 0
    %605 = vmatprep.subr.bf16.mxu0 0
    %606 = vmatpush1.bf16.msra.mxu0 0
    %607 = vmatprep.subr.bf16.mxu0 0
    %608 = vmatpush1.bf16.msra.mxu0 0
    %609 = vmatprep.subr.bf16.mxu0 0
    %610 = vmatpush1.bf16.msra.mxu0 0
    %611 = vmatprep.subr.bf16.mxu0 0
    %612 = vmatpush1.bf16.msra.mxu0 0
    %613 = vmatprep.subr.bf16.mxu0 0
    %614 = vmatpush1.bf16.msra.mxu0 0
    %615 = vmatprep.subr.bf16.mxu0 0
    %616 = vmatpush1.bf16.msra.mxu0 0
    %617 = vmatprep.subr.bf16.mxu0 0
    %618 = vmatpush1.bf16.msra.mxu0 0
    %619 = vmatprep.subr.bf16.mxu0 0
    %620 = vmatpush1.bf16.msra.mxu0 0
    %621 = vmatprep.mubr.bf16.mxu0 0
    %622 = vmatmul.mubr.bf16.gmra.mrb[0].mxu0 %v385
    %v623 = vpop.f32.mrb[0].mxu0
    %v624 = vadd.f32 %v575, %v623
    %v625 = vpop.f32.mrb[0].mxu0
    %v626 = vpop.f32.mrb[0].mxu0
    %v627 = vadd.f32 %v575, %v626
    %v628 = vpop.f32.mrb[0].mxu0
    %629 = vdwg.mxu0
    %v630 = vmul.f32 %v624, 0.25
    %v631 = vmul.f32 %v627, 0.25
    %s632 = scalar_lea.vmem %s10, 16
    %v633 = vld [vmem:[%s632] sm:$0xf]
    %v634 = vld [vmem:[%s632 + $0x4] sm:$0xf]
    %v635 = vld [vmem:[%s632 + $0x8] sm:$0xf]
    %v636 = vld [vmem:[%s632 + $0xc] sm:$0xf]
    %s637 = scalar_lea.vmem %s11, 1
    %v638 = vld [vmem:[%s637] sm:$0x1]
    %v640 = vlaneseq
    %v641 = vshrl.u32 %v640, 7
    %v642 = vsub.s32 0, %v641
    %v643 = vrot.slane %v638, %v642
    %v649 = vunpack.c.l.b16 %v633
    %v650 = vunpack.c.l.b16 %v634
    %v651 = vunpack.c.l.b16 %v635
    %v652 = vunpack.c.l.b16 %v636
    %v653 = vpack.c.b16 %v650, %v649
    %v654 = vpack.c.b16 %v652, %v651
    %657 = vmatprep.subr.bf16.mxu0 0
    %658 = vmatpush1.bf16.msra.mxu0 %v653
    %659 = vmatprep.subr.bf16.mxu0 0
    %660 = vmatpush1.bf16.msra.mxu0 %v654
    %661 = vmatprep.subr.bf16.mxu0 0
    %662 = vmatpush1.bf16.msra.mxu0 0
    %663 = vmatprep.subr.bf16.mxu0 0
    %664 = vmatpush1.bf16.msra.mxu0 0
    %665 = vmatprep.subr.bf16.mxu0 0
    %666 = vmatpush1.bf16.msra.mxu0 0
    %667 = vmatprep.subr.bf16.mxu0 0
    %668 = vmatpush1.bf16.msra.mxu0 0
    %669 = vmatprep.subr.bf16.mxu0 0
    %670 = vmatpush1.bf16.msra.mxu0 0
    %671 = vmatprep.subr.bf16.mxu0 0
    %672 = vmatpush1.bf16.msra.mxu0 0
    %673 = vmatprep.subr.bf16.mxu0 0
    %674 = vmatpush1.bf16.msra.mxu0 0
    %675 = vmatprep.subr.bf16.mxu0 0
    %676 = vmatpush1.bf16.msra.mxu0 0
    %677 = vmatprep.subr.bf16.mxu0 0
    %678 = vmatpush1.bf16.msra.mxu0 0
    %679 = vmatprep.subr.bf16.mxu0 0
    %680 = vmatpush1.bf16.msra.mxu0 0
    %681 = vmatprep.subr.bf16.mxu0 0
    %682 = vmatpush1.bf16.msra.mxu0 0
    %683 = vmatprep.subr.bf16.mxu0 0
    %684 = vmatpush1.bf16.msra.mxu0 0
    %685 = vmatprep.subr.bf16.mxu0 0
    %686 = vmatpush1.bf16.msra.mxu0 0
    %687 = vmatprep.subr.bf16.mxu0 0
    %688 = vmatpush1.bf16.msra.mxu0 0
    %689 = vmatprep.mubr.bf16.mxu0 0
    %690 = vmatmul.mubr.bf16.gmra.mrb[0].mxu0 %v385
    %v691 = vpop.f32.mrb[0].mxu0
    %v692 = vadd.f32 %v643, %v691
    %v693 = vpop.f32.mrb[0].mxu0
    %v694 = vpop.f32.mrb[0].mxu0
    %v695 = vadd.f32 %v643, %v694
    %v696 = vpop.f32.mrb[0].mxu0
    %697 = vdwg.mxu0
    %s698 = scalar_lea.vmem %s12, 16
    %v699 = vld [vmem:[%s698] sm:$0xf]
    %v700 = vld [vmem:[%s698 + $0x4] sm:$0xf]
    %v701 = vld [vmem:[%s698 + $0x8] sm:$0xf]
    %v702 = vld [vmem:[%s698 + $0xc] sm:$0xf]
    %s703 = scalar_lea.vmem %s13, 1
    %v704 = vld [vmem:[%s703] sm:$0x1]
    %v706 = vlaneseq
    %v707 = vshrl.u32 %v706, 7
    %v708 = vsub.s32 0, %v707
    %v709 = vrot.slane %v704, %v708
    %v715 = vunpack.c.l.b16 %v699
    %v716 = vunpack.c.l.b16 %v700
    %v717 = vunpack.c.l.b16 %v701
    %v718 = vunpack.c.l.b16 %v702
    %v719 = vpack.c.b16 %v716, %v715
    %v720 = vpack.c.b16 %v718, %v717
    %723 = vmatprep.subr.bf16.mxu0 0
    %724 = vmatpush1.bf16.msra.mxu0 %v719
    %725 = vmatprep.subr.bf16.mxu0 0
    %726 = vmatpush1.bf16.msra.mxu0 %v720
    %727 = vmatprep.subr.bf16.mxu0 0
    %728 = vmatpush1.bf16.msra.mxu0 0
    %729 = vmatprep.subr.bf16.mxu0 0
    %730 = vmatpush1.bf16.msra.mxu0 0
    %731 = vmatprep.subr.bf16.mxu0 0
    %732 = vmatpush1.bf16.msra.mxu0 0
    %733 = vmatprep.subr.bf16.mxu0 0
    %734 = vmatpush1.bf16.msra.mxu0 0
    %735 = vmatprep.subr.bf16.mxu0 0
    %736 = vmatpush1.bf16.msra.mxu0 0
    %737 = vmatprep.subr.bf16.mxu0 0
    %738 = vmatpush1.bf16.msra.mxu0 0
    %739 = vmatprep.subr.bf16.mxu0 0
    %740 = vmatpush1.bf16.msra.mxu0 0
    %741 = vmatprep.subr.bf16.mxu0 0
    %742 = vmatpush1.bf16.msra.mxu0 0
    %743 = vmatprep.subr.bf16.mxu0 0
    %744 = vmatpush1.bf16.msra.mxu0 0
    %745 = vmatprep.subr.bf16.mxu0 0
    %746 = vmatpush1.bf16.msra.mxu0 0
    %747 = vmatprep.subr.bf16.mxu0 0
    %748 = vmatpush1.bf16.msra.mxu0 0
    %749 = vmatprep.subr.bf16.mxu0 0
    %750 = vmatpush1.bf16.msra.mxu0 0
    %751 = vmatprep.subr.bf16.mxu0 0
    %752 = vmatpush1.bf16.msra.mxu0 0
    %753 = vmatprep.subr.bf16.mxu0 0
    %754 = vmatpush1.bf16.msra.mxu0 0
    %755 = vmatprep.mubr.bf16.mxu0 0
    %756 = vmatmul.mubr.bf16.gmra.mrb[0].mxu0 %v385
    %v757 = vpop.f32.mrb[0].mxu0
    %v758 = vadd.f32 %v709, %v757
    %v759 = vpop.f32.mrb[0].mxu0
    %v760 = vpop.f32.mrb[0].mxu0
    %v761 = vadd.f32 %v709, %v760
    %v762 = vpop.f32.mrb[0].mxu0
    %763 = vdwg.mxu0
    %v764 = vpack.c.bf16 %v630, %v630
    %v765 = vpack.c.bf16 %v631, %v631
    %v766 = vpack.c.bf16 %v692, %v692
    %v767 = vpack.c.bf16 %v695, %v695
    %v768 = vpack.c.bf16 %v758, %v758
    %v769 = vpack.c.bf16 %v761, %v761
    %v770 = vlaneseq
    %v771 = vshrl.u32 %v770, 7
    %v772 = vsub.s32 0, %v771
    %v773 = vrot.slane %v352, %v772
    %v774 = vlaneseq
    %v775 = vshrl.u32 %v774, 7
    %v776 = vsub.s32 0, %v775
    %v777 = vrot.slane %v359, %v776
    %vm780 = vcmask 130048
    %v782 = vsel %vm780, %v558, 0
    %v785 = vsel %vm780, %v560, 0
    %787 = vmatprep.subr.bf16.mxu0 0
    %788 = vmatpush1.bf16.xpose.msra.mxu0 %v785
    %789 = vmatprep.subr.bf16.mxu0 0
    %790 = vmatpush1.bf16.xpose.msra.mxu0 0
    %791 = vmatprep.subr.bf16.mxu0 0
    %792 = vmatpush1.bf16.xpose.msra.mxu0 0
    %793 = vmatprep.subr.bf16.mxu0 0
    %794 = vmatpush1.bf16.xpose.msra.mxu0 0
    %795 = vmatprep.subr.bf16.mxu0 0
    %796 = vmatpush1.bf16.xpose.msra.mxu0 0
    %797 = vmatprep.subr.bf16.mxu0 0
    %798 = vmatpush1.bf16.xpose.msra.mxu0 0
    %799 = vmatprep.subr.bf16.mxu0 0
    %800 = vmatpush1.bf16.xpose.msra.mxu0 0
    %801 = vmatprep.subr.bf16.mxu0 0
    %802 = vmatpush1.bf16.xpose.msra.mxu0 0
    %803 = vmatprep.subr.bf16.mxu0 0
    %804 = vmatpush1.bf16.xpose.msra.mxu0 0
    %805 = vmatprep.subr.bf16.mxu0 0
    %806 = vmatpush1.bf16.xpose.msra.mxu0 0
    %807 = vmatprep.subr.bf16.mxu0 0
    %808 = vmatpush1.bf16.xpose.msra.mxu0 0
    %809 = vmatprep.subr.bf16.mxu0 0
    %810 = vmatpush1.bf16.xpose.msra.mxu0 0
    %811 = vmatprep.subr.bf16.mxu0 0
    %812 = vmatpush1.bf16.xpose.msra.mxu0 0
    %813 = vmatprep.subr.bf16.mxu0 0
    %814 = vmatpush1.bf16.xpose.msra.mxu0 0
    %815 = vmatprep.subr.bf16.mxu0 0
    %816 = vmatpush1.bf16.xpose.msra.mxu0 0
    %817 = vmatprep.subr.bf16.mxu0 0
    %818 = vmatpush1.bf16.xpose.msra.mxu0 0
    %819 = vmatprep.mubr.bf16.mxu0 0
    %820 = vmatmul.mubr.bf16.gmra.mrb[0].mxu0 %v782
    %v821 = vpop.f32.mrb[0].mxu0
    %v822 = vadd.f32 %v773, %v821
    %v823 = vpop.f32.mrb[0].mxu0
    %v824 = vpop.f32.mrb[0].mxu0
    %v825 = vpop.f32.mrb[0].mxu0
    %826 = vdwg.mxu0
    %v828 = vsel %vm780, %v559, 0
    %v831 = vsel %vm780, %v561, 0
    %833 = vmatprep.subr.bf16.mxu0 0
    %834 = vmatpush1.bf16.xpose.msra.mxu0 %v831
    %835 = vmatprep.subr.bf16.mxu0 0
    %836 = vmatpush1.bf16.xpose.msra.mxu0 0
    %837 = vmatprep.subr.bf16.mxu0 0
    %838 = vmatpush1.bf16.xpose.msra.mxu0 0
    %839 = vmatprep.subr.bf16.mxu0 0
    %840 = vmatpush1.bf16.xpose.msra.mxu0 0
    %841 = vmatprep.subr.bf16.mxu0 0
    %842 = vmatpush1.bf16.xpose.msra.mxu0 0
    %843 = vmatprep.subr.bf16.mxu0 0
    %844 = vmatpush1.bf16.xpose.msra.mxu0 0
    %845 = vmatprep.subr.bf16.mxu0 0
    %846 = vmatpush1.bf16.xpose.msra.mxu0 0
    %847 = vmatprep.subr.bf16.mxu0 0
    %848 = vmatpush1.bf16.xpose.msra.mxu0 0
    %849 = vmatprep.subr.bf16.mxu0 0
    %850 = vmatpush1.bf16.xpose.msra.mxu0 0
    %851 = vmatprep.subr.bf16.mxu0 0
    %852 = vmatpush1.bf16.xpose.msra.mxu0 0
    %853 = vmatprep.subr.bf16.mxu0 0
    %854 = vmatpush1.bf16.xpose.msra.mxu0 0
    %855 = vmatprep.subr.bf16.mxu0 0
    %856 = vmatpush1.bf16.xpose.msra.mxu0 0
    %857 = vmatprep.subr.bf16.mxu0 0
    %858 = vmatpush1.bf16.xpose.msra.mxu0 0
    %859 = vmatprep.subr.bf16.mxu0 0
    %860 = vmatpush1.bf16.xpose.msra.mxu0 0
    %861 = vmatprep.subr.bf16.mxu0 0
    %862 = vmatpush1.bf16.xpose.msra.mxu0 0
    %863 = vmatprep.subr.bf16.mxu0 0
    %864 = vmatpush1.bf16.xpose.msra.mxu0 0
    %865 = vmatprep.mubr.bf16.mxu0 0
    %866 = vmatmul.mubr.bf16.gmra.mrb[0].mxu0 %v828
    %v867 = vpop.f32.mrb[0].mxu0
    %v868 = vadd.f32 %v777, %v867
    %v869 = vpop.f32.mrb[0].mxu0
    %v870 = vpop.f32.mrb[0].mxu0
    %v871 = vpop.f32.mrb[0].mxu0
    %872 = vdwg.mxu0
    %v874 = vsel %vm780, %v764, 0
    %v877 = vsel %vm780, %v766, 0
    %879 = vmatprep.subr.bf16.mxu0 0
    %880 = vmatpush1.bf16.xpose.msra.mxu0 %v877
    %881 = vmatprep.subr.bf16.mxu0 0
    %882 = vmatpush1.bf16.xpose.msra.mxu0 0
    %883 = vmatprep.subr.bf16.mxu0 0
    %884 = vmatpush1.bf16.xpose.msra.mxu0 0
    %885 = vmatprep.subr.bf16.mxu0 0
    %886 = vmatpush1.bf16.xpose.msra.mxu0 0
    %887 = vmatprep.subr.bf16.mxu0 0
    %888 = vmatpush1.bf16.xpose.msra.mxu0 0
    %889 = vmatprep.subr.bf16.mxu0 0
    %890 = vmatpush1.bf16.xpose.msra.mxu0 0
    %891 = vmatprep.subr.bf16.mxu0 0
    %892 = vmatpush1.bf16.xpose.msra.mxu0 0
    %893 = vmatprep.subr.bf16.mxu0 0
    %894 = vmatpush1.bf16.xpose.msra.mxu0 0
    %895 = vmatprep.subr.bf16.mxu0 0
    %896 = vmatpush1.bf16.xpose.msra.mxu0 0
    %897 = vmatprep.subr.bf16.mxu0 0
    %898 = vmatpush1.bf16.xpose.msra.mxu0 0
    %899 = vmatprep.subr.bf16.mxu0 0
    %900 = vmatpush1.bf16.xpose.msra.mxu0 0
    %901 = vmatprep.subr.bf16.mxu0 0
    %902 = vmatpush1.bf16.xpose.msra.mxu0 0
    %903 = vmatprep.subr.bf16.mxu0 0
    %904 = vmatpush1.bf16.xpose.msra.mxu0 0
    %905 = vmatprep.subr.bf16.mxu0 0
    %906 = vmatpush1.bf16.xpose.msra.mxu0 0
    %907 = vmatprep.subr.bf16.mxu0 0
    %908 = vmatpush1.bf16.xpose.msra.mxu0 0
    %909 = vmatprep.subr.bf16.mxu0 0
    %910 = vmatpush1.bf16.xpose.msra.mxu0 0
    %911 = vmatprep.mubr.bf16.mxu0 0
    %912 = vmatmul.mubr.bf16.gmra.mrb[0].mxu0 %v874
    %v913 = vpop.f32.mrb[0].mxu0
    %v914 = vadd.f32 %v773, %v913
    %v915 = vpop.f32.mrb[0].mxu0
    %v916 = vpop.f32.mrb[0].mxu0
    %v917 = vpop.f32.mrb[0].mxu0
    %918 = vdwg.mxu0
    %v920 = vsel %vm780, %v765, 0
    %v923 = vsel %vm780, %v767, 0
    %925 = vmatprep.subr.bf16.mxu0 0
    %926 = vmatpush1.bf16.xpose.msra.mxu0 %v923
    %927 = vmatprep.subr.bf16.mxu0 0
    %928 = vmatpush1.bf16.xpose.msra.mxu0 0
    %929 = vmatprep.subr.bf16.mxu0 0
    %930 = vmatpush1.bf16.xpose.msra.mxu0 0
    %931 = vmatprep.subr.bf16.mxu0 0
    %932 = vmatpush1.bf16.xpose.msra.mxu0 0
    %933 = vmatprep.subr.bf16.mxu0 0
    %934 = vmatpush1.bf16.xpose.msra.mxu0 0
    %935 = vmatprep.subr.bf16.mxu0 0
    %936 = vmatpush1.bf16.xpose.msra.mxu0 0
    %937 = vmatprep.subr.bf16.mxu0 0
    %938 = vmatpush1.bf16.xpose.msra.mxu0 0
    %939 = vmatprep.subr.bf16.mxu0 0
    %940 = vmatpush1.bf16.xpose.msra.mxu0 0
    %941 = vmatprep.subr.bf16.mxu0 0
    %942 = vmatpush1.bf16.xpose.msra.mxu0 0
    %943 = vmatprep.subr.bf16.mxu0 0
    %944 = vmatpush1.bf16.xpose.msra.mxu0 0
    %945 = vmatprep.subr.bf16.mxu0 0
    %946 = vmatpush1.bf16.xpose.msra.mxu0 0
    %947 = vmatprep.subr.bf16.mxu0 0
    %948 = vmatpush1.bf16.xpose.msra.mxu0 0
    %949 = vmatprep.subr.bf16.mxu0 0
    %950 = vmatpush1.bf16.xpose.msra.mxu0 0
    %951 = vmatprep.subr.bf16.mxu0 0
    %952 = vmatpush1.bf16.xpose.msra.mxu0 0
    %953 = vmatprep.subr.bf16.mxu0 0
    %954 = vmatpush1.bf16.xpose.msra.mxu0 0
    %955 = vmatprep.subr.bf16.mxu0 0
    %956 = vmatpush1.bf16.xpose.msra.mxu0 0
    %957 = vmatprep.mubr.bf16.mxu0 0
    %958 = vmatmul.mubr.bf16.gmra.mrb[0].mxu0 %v920
    %v959 = vpop.f32.mrb[0].mxu0
    %v960 = vadd.f32 %v777, %v959
    %v961 = vpop.f32.mrb[0].mxu0
    %v962 = vpop.f32.mrb[0].mxu0
    %v963 = vpop.f32.mrb[0].mxu0
    %964 = vdwg.mxu0
    %vm965 = vcmask 64512
    %v966 = vsel %vm965, %v822, -inf
    %967 = vmax.xlane.f32.xlu0 %v966
    %v968 = vpop.xlane.xlu0 %967
    %v969 = vsel %vm965, %v868, -inf
    %970 = vmax.xlane.f32.xlu0 %v969
    %v971 = vpop.xlane.xlu0 %970
    %v972 = vsel %vm965, %v914, -inf
    %973 = vmax.xlane.f32.xlu0 %v972
    %v974 = vpop.xlane.xlu0 %973
    %v975 = vsel %vm965, %v960, -inf
    %976 = vmax.xlane.f32.xlu0 %v975
    %v977 = vpop.xlane.xlu0 %976
    %v978 = vsub.f32 %v822, %v968
    %v979 = vsub.f32 %v868, %v971
    %v980 = vsub.f32 %v914, %v974
    %v981 = vsub.f32 %v960, %v977
    %v982 = vmul.f32 %v978, 1.442695
    %v983 = vpow.pop %v982
    %v984 = vmul.f32 %v979, 1.442695
    %v985 = vpow.pop %v984
    %v986 = vmul.f32 %v980, 1.442695
    %v987 = vpow.pop %v986
    %v988 = vmul.f32 %v981, 1.442695
    %v989 = vpow.pop %v988
    %v990 = vsel %vm965, %v983, 0.0
    %991 = vadd.xlane.f32.xlu0 %v990
    %v992 = vpop.xlane.xlu0 %991
    %v993 = vsel %vm965, %v985, 0.0
    %994 = vadd.xlane.f32.xlu0 %v993
    %v995 = vpop.xlane.xlu0 %994
    %v996 = vsel %vm965, %v987, 0.0
    %997 = vadd.xlane.f32.xlu0 %v996
    %v998 = vpop.xlane.xlu0 %997
    %v999 = vsel %vm965, %v989, 0.0
    %1000 = vadd.xlane.f32.xlu0 %v999
    %v1001 = vpop.xlane.xlu0 %1000
    %v1002 = vrcp.pop %v992
    %v1003 = vrcp.pop %v995
    %v1004 = vrcp.pop %v998
    %v1005 = vrcp.pop %v1001
    %v1006 = vmul.f32 %v983, %v1002
    %v1007 = vmul.f32 %v985, %v1003
    %v1008 = vmul.f32 %v987, %v1004
    %v1009 = vmul.f32 %v989, %v1005
    %v1010 = vpack.c.bf16 %v1006, %v1006
    %v1011 = vpack.c.bf16 %v1007, %v1007
    %v1012 = vpack.c.bf16 %v1008, %v1008
    %v1013 = vpack.c.bf16 %v1009, %v1009
    %v1015 = vsel %vm965, %v1010, 0
    %v1018 = vsel %vm146, %v562, 0
    %1020 = vmatprep.subr.bf16.mxu0 0
    %1021 = vmatpush1.bf16.msra.mxu0 %v1018
    %1022 = vmatprep.subr.bf16.mxu0 0
    %1023 = vmatpush1.bf16.msra.mxu0 0
    %1024 = vmatprep.subr.bf16.mxu0 0
    %1025 = vmatpush1.bf16.msra.mxu0 0
    %1026 = vmatprep.subr.bf16.mxu0 0
    %1027 = vmatpush1.bf16.msra.mxu0 0
    %1028 = vmatprep.subr.bf16.mxu0 0
    %1029 = vmatpush1.bf16.msra.mxu0 0
    %1030 = vmatprep.subr.bf16.mxu0 0
    %1031 = vmatpush1.bf16.msra.mxu0 0
    %1032 = vmatprep.subr.bf16.mxu0 0
    %1033 = vmatpush1.bf16.msra.mxu0 0
    %1034 = vmatprep.subr.bf16.mxu0 0
    %1035 = vmatpush1.bf16.msra.mxu0 0
    %1036 = vmatprep.subr.bf16.mxu0 0
    %1037 = vmatpush1.bf16.msra.mxu0 0
    %1038 = vmatprep.subr.bf16.mxu0 0
    %1039 = vmatpush1.bf16.msra.mxu0 0
    %1040 = vmatprep.subr.bf16.mxu0 0
    %1041 = vmatpush1.bf16.msra.mxu0 0
    %1042 = vmatprep.subr.bf16.mxu0 0
    %1043 = vmatpush1.bf16.msra.mxu0 0
    %1044 = vmatprep.subr.bf16.mxu0 0
    %1045 = vmatpush1.bf16.msra.mxu0 0
    %1046 = vmatprep.subr.bf16.mxu0 0
    %1047 = vmatpush1.bf16.msra.mxu0 0
    %1048 = vmatprep.subr.bf16.mxu0 0
    %1049 = vmatpush1.bf16.msra.mxu0 0
    %1050 = vmatprep.subr.bf16.mxu0 0
    %1051 = vmatpush1.bf16.msra.mxu0 0
    %1052 = vmatprep.mubr.bf16.mxu0 0
    %1053 = vmatmul.mubr.bf16.gmra.mrb[0].mxu0 %v1015
    %v1054 = vpop.f32.mrb[0].mxu0
    %v1055 = vadd.f32 0.0, %v1054
    %v1056 = vpop.f32.mrb[0].mxu0
    %v1057 = vpop.f32.mrb[0].mxu0
    %v1058 = vpop.f32.mrb[0].mxu0
    %1059 = vdwg.mxu0
    %v1061 = vsel %vm965, %v1011, 0
    %v1064 = vsel %vm146, %v563, 0
    %1066 = vmatprep.subr.bf16.mxu0 0
    %1067 = vmatpush1.bf16.msra.mxu0 %v1064
    %1068 = vmatprep.subr.bf16.mxu0 0
    %1069 = vmatpush1.bf16.msra.mxu0 0
    %1070 = vmatprep.subr.bf16.mxu0 0
    %1071 = vmatpush1.bf16.msra.mxu0 0
    %1072 = vmatprep.subr.bf16.mxu0 0
    %1073 = vmatpush1.bf16.msra.mxu0 0
    %1074 = vmatprep.subr.bf16.mxu0 0
    %1075 = vmatpush1.bf16.msra.mxu0 0
    %1076 = vmatprep.subr.bf16.mxu0 0
    %1077 = vmatpush1.bf16.msra.mxu0 0
    %1078 = vmatprep.subr.bf16.mxu0 0
    %1079 = vmatpush1.bf16.msra.mxu0 0
    %1080 = vmatprep.subr.bf16.mxu0 0
    %1081 = vmatpush1.bf16.msra.mxu0 0
    %1082 = vmatprep.subr.bf16.mxu0 0
    %1083 = vmatpush1.bf16.msra.mxu0 0
    %1084 = vmatprep.subr.bf16.mxu0 0
    %1085 = vmatpush1.bf16.msra.mxu0 0
    %1086 = vmatprep.subr.bf16.mxu0 0
    %1087 = vmatpush1.bf16.msra.mxu0 0
    %1088 = vmatprep.subr.bf16.mxu0 0
    %1089 = vmatpush1.bf16.msra.mxu0 0
    %1090 = vmatprep.subr.bf16.mxu0 0
    %1091 = vmatpush1.bf16.msra.mxu0 0
    %1092 = vmatprep.subr.bf16.mxu0 0
    %1093 = vmatpush1.bf16.msra.mxu0 0
    %1094 = vmatprep.subr.bf16.mxu0 0
    %1095 = vmatpush1.bf16.msra.mxu0 0
    %1096 = vmatprep.subr.bf16.mxu0 0
    %1097 = vmatpush1.bf16.msra.mxu0 0
    %1098 = vmatprep.mubr.bf16.mxu0 0
    %1099 = vmatmul.mubr.bf16.gmra.mrb[0].mxu0 %v1061
    %v1100 = vpop.f32.mrb[0].mxu0
    %v1101 = vadd.f32 0.0, %v1100
    %v1102 = vpop.f32.mrb[0].mxu0
    %v1103 = vpop.f32.mrb[0].mxu0
    %v1104 = vpop.f32.mrb[0].mxu0
    %1105 = vdwg.mxu0
    %v1107 = vsel %vm965, %v1012, 0
    %v1110 = vsel %vm146, %v768, 0
    %1112 = vmatprep.subr.bf16.mxu0 0
    %1113 = vmatpush1.bf16.msra.mxu0 %v1110
    %1114 = vmatprep.subr.bf16.mxu0 0
    %1115 = vmatpush1.bf16.msra.mxu0 0
    %1116 = vmatprep.subr.bf16.mxu0 0
    %1117 = vmatpush1.bf16.msra.mxu0 0
    %1118 = vmatprep.subr.bf16.mxu0 0
    %1119 = vmatpush1.bf16.msra.mxu0 0
    %1120 = vmatprep.subr.bf16.mxu0 0
    %1121 = vmatpush1.bf16.msra.mxu0 0
    %1122 = vmatprep.subr.bf16.mxu0 0
    %1123 = vmatpush1.bf16.msra.mxu0 0
    %1124 = vmatprep.subr.bf16.mxu0 0
    %1125 = vmatpush1.bf16.msra.mxu0 0
    %1126 = vmatprep.subr.bf16.mxu0 0
    %1127 = vmatpush1.bf16.msra.mxu0 0
    %1128 = vmatprep.subr.bf16.mxu0 0
    %1129 = vmatpush1.bf16.msra.mxu0 0
    %1130 = vmatprep.subr.bf16.mxu0 0
    %1131 = vmatpush1.bf16.msra.mxu0 0
    %1132 = vmatprep.subr.bf16.mxu0 0
    %1133 = vmatpush1.bf16.msra.mxu0 0
    %1134 = vmatprep.subr.bf16.mxu0 0
    %1135 = vmatpush1.bf16.msra.mxu0 0
    %1136 = vmatprep.subr.bf16.mxu0 0
    %1137 = vmatpush1.bf16.msra.mxu0 0
    %1138 = vmatprep.subr.bf16.mxu0 0
    %1139 = vmatpush1.bf16.msra.mxu0 0
    %1140 = vmatprep.subr.bf16.mxu0 0
    %1141 = vmatpush1.bf16.msra.mxu0 0
    %1142 = vmatprep.subr.bf16.mxu0 0
    %1143 = vmatpush1.bf16.msra.mxu0 0
    %1144 = vmatprep.mubr.bf16.mxu0 0
    %1145 = vmatmul.mubr.bf16.gmra.mrb[0].mxu0 %v1107
    %v1146 = vpop.f32.mrb[0].mxu0
    %v1147 = vadd.f32 0.0, %v1146
    %v1148 = vpop.f32.mrb[0].mxu0
    %v1149 = vpop.f32.mrb[0].mxu0
    %v1150 = vpop.f32.mrb[0].mxu0
    %1151 = vdwg.mxu0
    %v1153 = vsel %vm965, %v1013, 0
    %v1156 = vsel %vm146, %v769, 0
    %1158 = vmatprep.subr.bf16.mxu0 0
    %1159 = vmatpush1.bf16.msra.mxu0 %v1156
    %1160 = vmatprep.subr.bf16.mxu0 0
    %1161 = vmatpush1.bf16.msra.mxu0 0
    %1162 = vmatprep.subr.bf16.mxu0 0
    %1163 = vmatpush1.bf16.msra.mxu0 0
    %1164 = vmatprep.subr.bf16.mxu0 0
    %1165 = vmatpush1.bf16.msra.mxu0 0
    %1166 = vmatprep.subr.bf16.mxu0 0
    %1167 = vmatpush1.bf16.msra.mxu0 0
    %1168 = vmatprep.subr.bf16.mxu0 0
    %1169 = vmatpush1.bf16.msra.mxu0 0
    %1170 = vmatprep.subr.bf16.mxu0 0
    %1171 = vmatpush1.bf16.msra.mxu0 0
    %1172 = vmatprep.subr.bf16.mxu0 0
    %1173 = vmatpush1.bf16.msra.mxu0 0
    %1174 = vmatprep.subr.bf16.mxu0 0
    %1175 = vmatpush1.bf16.msra.mxu0 0
    %1176 = vmatprep.subr.bf16.mxu0 0
    %1177 = vmatpush1.bf16.msra.mxu0 0
    %1178 = vmatprep.subr.bf16.mxu0 0
    %1179 = vmatpush1.bf16.msra.mxu0 0
    %1180 = vmatprep.subr.bf16.mxu0 0
    %1181 = vmatpush1.bf16.msra.mxu0 0
    %1182 = vmatprep.subr.bf16.mxu0 0
    %1183 = vmatpush1.bf16.msra.mxu0 0
    %1184 = vmatprep.subr.bf16.mxu0 0
    %1185 = vmatpush1.bf16.msra.mxu0 0
    %1186 = vmatprep.subr.bf16.mxu0 0
    %1187 = vmatpush1.bf16.msra.mxu0 0
    %1188 = vmatprep.subr.bf16.mxu0 0
    %1189 = vmatpush1.bf16.msra.mxu0 0
    %1190 = vmatprep.mubr.bf16.mxu0 0
    %1191 = vmatmul.mubr.bf16.gmra.mrb[0].mxu0 %v1153
    %v1192 = vpop.f32.mrb[0].mxu0
    %v1193 = vadd.f32 0.0, %v1192
    %v1194 = vpop.f32.mrb[0].mxu0
    %v1195 = vpop.f32.mrb[0].mxu0
    %v1196 = vpop.f32.mrb[0].mxu0
    %1197 = vdwg.mxu0
    %v1198 = vld [vmem:[%s15] sm:$0x1]
    %v1199 = vpack.c.bf16 %v1101, %v1055
    %v1200 = vld [vmem:[%s14] sm:$0xf]
    %v1201 = vld [vmem:[%s14 + $0x4] sm:$0xf]
    %v1204 = vunpack.c.l.b16 %v1200
    %v1205 = vunpack.c.l.b16 %v1201
    %v1206 = vpack.c.b16 %v1205, %v1204
    %v1209 = vsel %vm780, %v1199, 0
    %1211 = vmatprep.subr.bf16.mxu0 0
    %1212 = vmatpush1.bf16.msra.mxu0 %v1206
    %1213 = vmatprep.subr.bf16.mxu0 0
    %1214 = vmatpush1.bf16.msra.mxu0 0
    %1215 = vmatprep.subr.bf16.mxu0 0
    %1216 = vmatpush1.bf16.msra.mxu0 0
    %1217 = vmatprep.subr.bf16.mxu0 0
    %1218 = vmatpush1.bf16.msra.mxu0 0
    %1219 = vmatprep.subr.bf16.mxu0 0
    %1220 = vmatpush1.bf16.msra.mxu0 0
    %1221 = vmatprep.subr.bf16.mxu0 0
    %1222 = vmatpush1.bf16.msra.mxu0 0
    %1223 = vmatprep.subr.bf16.mxu0 0
    %1224 = vmatpush1.bf16.msra.mxu0 0
    %1225 = vmatprep.subr.bf16.mxu0 0
    %1226 = vmatpush1.bf16.msra.mxu0 0
    %1227 = vmatprep.subr.bf16.mxu0 0
    %1228 = vmatpush1.bf16.msra.mxu0 0
    %1229 = vmatprep.subr.bf16.mxu0 0
    %1230 = vmatpush1.bf16.msra.mxu0 0
    %1231 = vmatprep.subr.bf16.mxu0 0
    %1232 = vmatpush1.bf16.msra.mxu0 0
    %1233 = vmatprep.subr.bf16.mxu0 0
    %1234 = vmatpush1.bf16.msra.mxu0 0
    %1235 = vmatprep.subr.bf16.mxu0 0
    %1236 = vmatpush1.bf16.msra.mxu0 0
    %1237 = vmatprep.subr.bf16.mxu0 0
    %1238 = vmatpush1.bf16.msra.mxu0 0
    %1239 = vmatprep.subr.bf16.mxu0 0
    %1240 = vmatpush1.bf16.msra.mxu0 0
    %1241 = vmatprep.subr.bf16.mxu0 0
    %1242 = vmatpush1.bf16.msra.mxu0 0
    %1243 = vmatprep.mubr.bf16.mxu0 0
    %1244 = vmatmul.mubr.bf16.gmra.mrb[0].mxu0 %v1209
    %v1245 = vpop.f32.mrb[0].mxu0
    %v1246 = vadd.f32 0.0, %v1245
    %v1247 = vpop.f32.mrb[0].mxu0
    %v1248 = vpop.f32.mrb[0].mxu0
    %v1249 = vadd.f32 0.0, %v1248
    %v1250 = vpop.f32.mrb[0].mxu0
    %1251 = vdwg.mxu0
    %v1253 = vlaneseq
    %v1254 = vshrl.u32 %v1253, 7
    %v1255 = vsub.s32 0, %v1254
    %v1256 = vrot.slane %v1198, %v1255
    %v1258 = vadd.f32 %v1256, %v1246
    %v1259 = vadd.f32 %v1256, %v1249
    %v1260 = vpack.c.bf16 %v1193, %v1147
    %s1261 = scalar_lea.vmem %s14, 8
    %v1262 = vld [vmem:[%s1261] sm:$0xf]
    %v1263 = vld [vmem:[%s1261 + $0x4] sm:$0xf]
    %v1266 = vunpack.c.l.b16 %v1262
    %v1267 = vunpack.c.l.b16 %v1263
    %v1268 = vpack.c.b16 %v1267, %v1266
    %v1271 = vsel %vm780, %v1260, 0
    %1273 = vmatprep.subr.bf16.mxu0 0
    %1274 = vmatpush1.bf16.msra.mxu0 %v1268
    %1275 = vmatprep.subr.bf16.mxu0 0
    %1276 = vmatpush1.bf16.msra.mxu0 0
    %1277 = vmatprep.subr.bf16.mxu0 0
    %1278 = vmatpush1.bf16.msra.mxu0 0
    %1279 = vmatprep.subr.bf16.mxu0 0
    %1280 = vmatpush1.bf16.msra.mxu0 0
    %1281 = vmatprep.subr.bf16.mxu0 0
    %1282 = vmatpush1.bf16.msra.mxu0 0
    %1283 = vmatprep.subr.bf16.mxu0 0
    %1284 = vmatpush1.bf16.msra.mxu0 0
    %1285 = vmatprep.subr.bf16.mxu0 0
    %1286 = vmatpush1.bf16.msra.mxu0 0
    %1287 = vmatprep.subr.bf16.mxu0 0
    %1288 = vmatpush1.bf16.msra.mxu0 0
    %1289 = vmatprep.subr.bf16.mxu0 0
    %1290 = vmatpush1.bf16.msra.mxu0 0
    %1291 = vmatprep.subr.bf16.mxu0 0
    %1292 = vmatpush1.bf16.msra.mxu0 0
    %1293 = vmatprep.subr.bf16.mxu0 0
    %1294 = vmatpush1.bf16.msra.mxu0 0
    %1295 = vmatprep.subr.bf16.mxu0 0
    %1296 = vmatpush1.bf16.msra.mxu0 0
    %1297 = vmatprep.subr.bf16.mxu0 0
    %1298 = vmatpush1.bf16.msra.mxu0 0
    %1299 = vmatprep.subr.bf16.mxu0 0
    %1300 = vmatpush1.bf16.msra.mxu0 0
    %1301 = vmatprep.subr.bf16.mxu0 0
    %1302 = vmatpush1.bf16.msra.mxu0 0
    %1303 = vmatprep.subr.bf16.mxu0 0
    %1304 = vmatpush1.bf16.msra.mxu0 0
    %1305 = vmatprep.mubr.bf16.mxu0 0
    %1306 = vmatmul.mubr.bf16.gmra.mrb[0].mxu0 %v1271
    %v1307 = vpop.f32.mrb[0].mxu0
    %v1308 = vadd.f32 0.0, %v1307
    %v1309 = vpop.f32.mrb[0].mxu0
    %v1310 = vpop.f32.mrb[0].mxu0
    %v1311 = vadd.f32 0.0, %v1310
    %v1312 = vpop.f32.mrb[0].mxu0
    %1313 = vdwg.mxu0
    %v1314 = vadd.f32 %v1258, %v1308
    %v1315 = vadd.f32 %v1259, %v1311
    %v1316 = vadd.f32 %v332, %v1314
    %v1317 = vadd.f32 %v333, %v1315
    %v1318 = vld [vmem:[%s16] sm:$0x1]
    %v1319 = vld [vmem:[%s17] sm:$0x1]
    %v1320 = vsel %vm290, %v1316, 0.0
    %1321 = vadd.xlane.f32.xlu0 %v1320
    %v1322 = vpop.xlane.xlu0 %1321
    %v1323 = vsel %vm290, %v1317, 0.0
    %1324 = vadd.xlane.f32.xlu0 %v1323
    %v1325 = vpop.xlane.xlu0 %1324
    %v1326 = vmul.f32 %v1322, %v297
    %v1327 = vmul.f32 %v1325, %v297
    %v1328 = vsub.f32 %v1316, %v1326
    %v1329 = vsub.f32 %v1317, %v1327
    %v1330 = vmul.f32 %v1328, %v1328
    %v1331 = vmul.f32 %v1329, %v1329
    %v1332 = vsel %vm290, %v1330, 0.0
    %1333 = vadd.xlane.f32.xlu0 %v1332
    %v1334 = vpop.xlane.xlu0 %1333
    %v1335 = vsel %vm290, %v1331, 0.0
    %1336 = vadd.xlane.f32.xlu0 %v1335
    %v1337 = vpop.xlane.xlu0 %1336
    %v1338 = vmul.f32 %v1334, %v297
    %v1339 = vmul.f32 %v1337, %v297
    %v1340 = vadd.f32 %v1338, 1e-05
    %v1341 = vadd.f32 %v1339, 1e-05
    %v1342 = vrsqrt.pop %v1340
    %v1343 = vrsqrt.pop %v1341
    %v1344 = vmul.f32 %v1328, %v1342
    %v1345 = vmul.f32 %v1329, %v1343
    %v1347 = vlaneseq
    %v1348 = vshrl.u32 %v1347, 7
    %v1349 = vsub.s32 0, %v1348
    %v1350 = vrot.slane %v1318, %v1349
    %v1352 = vmul.f32 %v1344, %v1350
    %v1353 = vmul.f32 %v1345, %v1350
    %v1355 = vlaneseq
    %v1356 = vshrl.u32 %v1355, 7
    %v1357 = vsub.s32 0, %v1356
    %v1358 = vrot.slane %v1319, %v1357
    %v1360 = vadd.f32 %v1352, %v1358
    %v1361 = vadd.f32 %v1353, %v1358
    %v1362 = vpack.c.bf16 %v1361, %v1360
    %v1363 = vld [vmem:[%s18] sm:$0xf]
    %v1364 = vld [vmem:[%s18 + $0x4] sm:$0xf]
    %v1365 = vld [vmem:[%s18 + $0x8] sm:$0xf]
    %v1366 = vld [vmem:[%s18 + $0xc] sm:$0xf]
    %v1367 = vld [vmem:[%s19] sm:$0x1]
    %v1369 = vlaneseq
    %v1370 = vshrl.u32 %v1369, 7
    %v1371 = vsub.s32 0, %v1370
    %v1372 = vrot.slane %v1367, %v1371
    %v1378 = vunpack.c.l.b16 %v1363
    %v1379 = vunpack.c.l.b16 %v1364
    %v1380 = vunpack.c.l.b16 %v1365
    %v1381 = vunpack.c.l.b16 %v1366
    %v1382 = vpack.c.b16 %v1379, %v1378
    %v1383 = vpack.c.b16 %v1381, %v1380
    %v1387 = vsel %vm290, %v1362, 0
    %1389 = vmatprep.subr.bf16.mxu0 0
    %1390 = vmatpush1.bf16.msra.mxu0 %v1382
    %1391 = vmatprep.subr.bf16.mxu0 0
    %1392 = vmatpush1.bf16.msra.mxu0 %v1383
    %1393 = vmatprep.subr.bf16.mxu0 0
    %1394 = vmatpush1.bf16.msra.mxu0 0
    %1395 = vmatprep.subr.bf16.mxu0 0
    %1396 = vmatpush1.bf16.msra.mxu0 0
    %1397 = vmatprep.subr.bf16.mxu0 0
    %1398 = vmatpush1.bf16.msra.mxu0 0
    %1399 = vmatprep.subr.bf16.mxu0 0
    %1400 = vmatpush1.bf16.msra.mxu0 0
    %1401 = vmatprep.subr.bf16.mxu0 0
    %1402 = vmatpush1.bf16.msra.mxu0 0
    %1403 = vmatprep.subr.bf16.mxu0 0
    %1404 = vmatpush1.bf16.msra.mxu0 0
    %1405 = vmatprep.subr.bf16.mxu0 0
    %1406 = vmatpush1.bf16.msra.mxu0 0
    %1407 = vmatprep.subr.bf16.mxu0 0
    %1408 = vmatpush1.bf16.msra.mxu0 0
    %1409 = vmatprep.subr.bf16.mxu0 0
    %1410 = vmatpush1.bf16.msra.mxu0 0
    %1411 = vmatprep.subr.bf16.mxu0 0
    %1412 = vmatpush1.bf16.msra.mxu0 0
    %1413 = vmatprep.subr.bf16.mxu0 0
    %1414 = vmatpush1.bf16.msra.mxu0 0
    %1415 = vmatprep.subr.bf16.mxu0 0
    %1416 = vmatpush1.bf16.msra.mxu0 0
    %1417 = vmatprep.subr.bf16.mxu0 0
    %1418 = vmatpush1.bf16.msra.mxu0 0
    %1419 = vmatprep.subr.bf16.mxu0 0
    %1420 = vmatpush1.bf16.msra.mxu0 0
    %1421 = vmatprep.mubr.bf16.mxu0 0
    %1422 = vmatmul.mubr.bf16.gmra.mrb[0].mxu0 %v1387
    %v1423 = vpop.f32.mrb[0].mxu0
    %v1424 = vadd.f32 %v1372, %v1423
    %v1425 = vpop.f32.mrb[0].mxu0
    %v1426 = vpop.f32.mrb[0].mxu0
    %v1427 = vadd.f32 %v1372, %v1426
    %v1428 = vpop.f32.mrb[0].mxu0
    %1429 = vdwg.mxu0
    %v1430 = vmul.f32 %v1424, 0.5
    %v1431 = vmul.f32 %v1427, 0.5
    %v1432 = vmul.f32 %v1424, 0.044715
    %v1433 = vmul.f32 %v1427, 0.044715
    %v1434 = vmul.f32 %v1432, %v1424
    %v1435 = vmul.f32 %v1433, %v1427
    %v1436 = vmul.f32 %v1434, %v1424
    %v1437 = vmul.f32 %v1435, %v1427
    %v1438 = vadd.f32 %v1424, %v1436
    %v1439 = vadd.f32 %v1427, %v1437
    %v1440 = vmul.f32 %v1438, 0.7978846
    %v1441 = vmul.f32 %v1439, 0.7978846
    %v1442 = vtanh.pop %v1440
    %v1443 = vtanh.pop %v1441
    %v1444 = vadd.f32 %v1442, 1.0
    %v1445 = vadd.f32 %v1443, 1.0
    %v1446 = vmul.f32 %v1430, %v1444
    %v1447 = vmul.f32 %v1431, %v1445
    %v1448 = vpack.c.bf16 %v1447, %v1446
    %v1449 = vld [vmem:[%s20] sm:$0xf]
    %v1450 = vld [vmem:[%s20 + $0x4] sm:$0xf]
    %v1451 = vld [vmem:[%s20 + $0x8] sm:$0xf]
    %v1452 = vld [vmem:[%s20 + $0xc] sm:$0xf]
    %v1453 = vld [vmem:[%s20 + $0x10] sm:$0xf]
    %v1454 = vld [vmem:[%s20 + $0x14] sm:$0xf]
    %v1455 = vld [vmem:[%s20 + $0x18] sm:$0xf]
    %v1456 = vld [vmem:[%s20 + $0x1c] sm:$0xf]
    %v1457 = vld [vmem:[%s21] sm:$0x1]
    %v1459 = vlaneseq
    %v1460 = vshrl.u32 %v1459, 7
    %v1461 = vsub.s32 0, %v1460
    %v1462 = vrot.slane %v1457, %v1461
    %v1472 = vunpack.c.l.b16 %v1449
    %v1473 = vunpack.c.l.b16 %v1450
    %v1474 = vunpack.c.l.b16 %v1451
    %v1475 = vunpack.c.l.b16 %v1452
    %v1476 = vunpack.c.l.b16 %v1453
    %v1477 = vunpack.c.l.b16 %v1454
    %v1478 = vunpack.c.l.b16 %v1455
    %v1479 = vunpack.c.l.b16 %v1456
    %v1480 = vpack.c.b16 %v1473, %v1472
    %v1481 = vpack.c.b16 %v1475, %v1474
    %v1482 = vpack.c.b16 %v1477, %v1476
    %v1483 = vpack.c.b16 %v1479, %v1478
    %vm1488 = vcmask 523264
    %v1490 = vsel %vm1488, %v1448, 0
    %1492 = vmatprep.subr.bf16.mxu0 0
    %1493 = vmatpush1.bf16.msra.mxu0 %v1480
    %1494 = vmatprep.subr.bf16.mxu0 0
    %1495 = vmatpush1.bf16.msra.mxu0 %v1481
    %1496 = vmatprep.subr.bf16.mxu0 0
    %1497 = vmatpush1.bf16.msra.mxu0 %v1482
    %1498 = vmatprep.subr.bf16.mxu0 0
    %1499 = vmatpush1.bf16.msra.mxu0 %v1483
    %1500 = vmatprep.subr.bf16.mxu0 0
    %1501 = vmatpush1.bf16.msra.mxu0 0
    %1502 = vmatprep.subr.bf16.mxu0 0
    %1503 = vmatpush1.bf16.msra.mxu0 0
    %1504 = vmatprep.subr.bf16.mxu0 0
    %1505 = vmatpush1.bf16.msra.mxu0 0
    %1506 = vmatprep.subr.bf16.mxu0 0
    %1507 = vmatpush1.bf16.msra.mxu0 0
    %1508 = vmatprep.subr.bf16.mxu0 0
    %1509 = vmatpush1.bf16.msra.mxu0 0
    %1510 = vmatprep.subr.bf16.mxu0 0
    %1511 = vmatpush1.bf16.msra.mxu0 0
    %1512 = vmatprep.subr.bf16.mxu0 0
    %1513 = vmatpush1.bf16.msra.mxu0 0
    %1514 = vmatprep.subr.bf16.mxu0 0
    %1515 = vmatpush1.bf16.msra.mxu0 0
    %1516 = vmatprep.subr.bf16.mxu0 0
    %1517 = vmatpush1.bf16.msra.mxu0 0
    %1518 = vmatprep.subr.bf16.mxu0 0
    %1519 = vmatpush1.bf16.msra.mxu0 0
    %1520 = vmatprep.subr.bf16.mxu0 0
    %1521 = vmatpush1.bf16.msra.mxu0 0
    %1522 = vmatprep.subr.bf16.mxu0 0
    %1523 = vmatpush1.bf16.msra.mxu0 0
    %1524 = vmatprep.mubr.bf16.mxu0 0
    %1525 = vmatmul.mubr.bf16.gmra.mrb[0].mxu0 %v1490
    %v1526 = vpop.f32.mrb[0].mxu0
    %v1527 = vadd.f32 %v1462, %v1526
    %v1528 = vpop.f32.mrb[0].mxu0
    %v1529 = vpop.f32.mrb[0].mxu0
    %v1530 = vadd.f32 %v1462, %v1529
    %v1531 = vpop.f32.mrb[0].mxu0
    %1532 = vdwg.mxu0
    %v1533 = vadd.f32 %v1360, %v1527
    %v1534 = vadd.f32 %v1361, %v1530
    %v1535 = vld [vmem:[%s22] sm:$0x1]
    %v1536 = vld [vmem:[%s23] sm:$0x1]
    %v1537 = vsel %vm290, %v1533, 0.0
    %1538 = vadd.xlane.f32.xlu0 %v1537
    %v1539 = vpop.xlane.xlu0 %1538
    %v1540 = vsel %vm290, %v1534, 0.0
    %1541 = vadd.xlane.f32.xlu0 %v1540
    %v1542 = vpop.xlane.xlu0 %1541
    %v1543 = vmul.f32 %v1539, %v297
    %v1544 = vmul.f32 %v1542, %v297
    %v1545 = vsub.f32 %v1533, %v1543
    %v1546 = vsub.f32 %v1534, %v1544
    %v1547 = vmul.f32 %v1545, %v1545
    %v1548 = vmul.f32 %v1546, %v1546
    %v1549 = vsel %vm290, %v1547, 0.0
    %1550 = vadd.xlane.f32.xlu0 %v1549
    %v1551 = vpop.xlane.xlu0 %1550
    %v1552 = vsel %vm290, %v1548, 0.0
    %1553 = vadd.xlane.f32.xlu0 %v1552
    %v1554 = vpop.xlane.xlu0 %1553
    %v1555 = vmul.f32 %v1551, %v297
    %v1556 = vmul.f32 %v1554, %v297
    %v1557 = vadd.f32 %v1555, 1e-05
    %v1558 = vadd.f32 %v1556, 1e-05
    %v1559 = vrsqrt.pop %v1557
    %v1560 = vrsqrt.pop %v1558
    %v1561 = vmul.f32 %v1545, %v1559
    %v1562 = vmul.f32 %v1546, %v1560
    %v1564 = vlaneseq
    %v1565 = vshrl.u32 %v1564, 7
    %v1566 = vsub.s32 0, %v1565
    %v1567 = vrot.slane %v1535, %v1566
    %v1569 = vmul.f32 %v1561, %v1567
    %v1570 = vmul.f32 %v1562, %v1567
    %v1572 = vlaneseq
    %v1573 = vshrl.u32 %v1572, 7
    %v1574 = vsub.s32 0, %v1573
    %v1575 = vrot.slane %v1536, %v1574
    %v1577 = vadd.f32 %v1569, %v1575
    %v1578 = vadd.f32 %v1570, %v1575
    %v1579 = vpack.c.bf16 %v1578, %v1577
    %s1580 = scalar_lea.vmem %s8, 32
    %v1581 = vld [vmem:[%s1580] sm:$0xf]
    %v1582 = vld [vmem:[%s1580 + $0x4] sm:$0xf]
    %v1583 = vld [vmem:[%s1580 + $0x8] sm:$0xf]
    %v1584 = vld [vmem:[%s1580 + $0xc] sm:$0xf]
    %s1585 = scalar_lea.vmem %s9, 2
    %v1586 = vld [vmem:[%s1585] sm:$0x1]
    %v1588 = vlaneseq
    %v1589 = vshrl.u32 %v1588, 7
    %v1590 = vsub.s32 0, %v1589
    %v1591 = vrot.slane %v1586, %v1590
    %v1597 = vunpack.c.l.b16 %v1581
    %v1598 = vunpack.c.l.b16 %v1582
    %v1599 = vunpack.c.l.b16 %v1583
    %v1600 = vunpack.c.l.b16 %v1584
    %v1601 = vpack.c.b16 %v1598, %v1597
    %v1602 = vpack.c.b16 %v1600, %v1599
    %v1606 = vsel %vm290, %v1579, 0
    %1608 = vmatprep.subr.bf16.mxu0 0
    %1609 = vmatpush1.bf16.msra.mxu0 %v1601
    %1610 = vmatprep.subr.bf16.mxu0 0
    %1611 = vmatpush1.bf16.msra.mxu0 %v1602
    %1612 = vmatprep.subr.bf16.mxu0 0
    %1613 = vmatpush1.bf16.msra.mxu0 0
    %1614 = vmatprep.subr.bf16.mxu0 0
    %1615 = vmatpush1.bf16.msra.mxu0 0
    %1616 = vmatprep.subr.bf16.mxu0 0
    %1617 = vmatpush1.bf16.msra.mxu0 0
    %1618 = vmatprep.subr.bf16.mxu0 0
    %1619 = vmatpush1.bf16.msra.mxu0 0
    %1620 = vmatprep.subr.bf16.mxu0 0
    %1621 = vmatpush1.bf16.msra.mxu0 0
    %1622 = vmatprep.subr.bf16.mxu0 0
    %1623 = vmatpush1.bf16.msra.mxu0 0
    %1624 = vmatprep.subr.bf16.mxu0 0
    %1625 = vmatpush1.bf16.msra.mxu0 0
    %1626 = vmatprep.subr.bf16.mxu0 0
    %1627 = vmatpush1.bf16.msra.mxu0 0
    %1628 = vmatprep.subr.bf16.mxu0 0
    %1629 = vmatpush1.bf16.msra.mxu0 0
    %1630 = vmatprep.subr.bf16.mxu0 0
    %1631 = vmatpush1.bf16.msra.mxu0 0
    %1632 = vmatprep.subr.bf16.mxu0 0
    %1633 = vmatpush1.bf16.msra.mxu0 0
    %1634 = vmatprep.subr.bf16.mxu0 0
    %1635 = vmatpush1.bf16.msra.mxu0 0
    %1636 = vmatprep.subr.bf16.mxu0 0
    %1637 = vmatpush1.bf16.msra.mxu0 0
    %1638 = vmatprep.subr.bf16.mxu0 0
    %1639 = vmatpush1.bf16.msra.mxu0 0
    %1640 = vmatprep.mubr.bf16.mxu0 0
    %1641 = vmatmul.mubr.bf16.gmra.mrb[0].mxu0 %v1606
    %v1642 = vpop.f32.mrb[0].mxu0
    %v1643 = vadd.f32 %v1591, %v1642
    %v1644 = vpop.f32.mrb[0].mxu0
    %v1645 = vpop.f32.mrb[0].mxu0
    %v1646 = vadd.f32 %v1591, %v1645
    %v1647 = vpop.f32.mrb[0].mxu0
    %1648 = vdwg.mxu0
    %v1649 = vmul.f32 %v1643, 0.25
    %v1650 = vmul.f32 %v1646, 0.25
    %s1651 = scalar_lea.vmem %s10, 32
    %v1652 = vld [vmem:[%s1651] sm:$0xf]
    %v1653 = vld [vmem:[%s1651 + $0x4] sm:$0xf]
    %v1654 = vld [vmem:[%s1651 + $0x8] sm:$0xf]
    %v1655 = vld [vmem:[%s1651 + $0xc] sm:$0xf]
    %s1656 = scalar_lea.vmem %s11, 2
    %v1657 = vld [vmem:[%s1656] sm:$0x1]
    %v1659 = vlaneseq
    %v1660 = vshrl.u32 %v1659, 7
    %v1661 = vsub.s32 0, %v1660
    %v1662 = vrot.slane %v1657, %v1661
    %v1668 = vunpack.c.l.b16 %v1652
    %v1669 = vunpack.c.l.b16 %v1653
    %v1670 = vunpack.c.l.b16 %v1654
    %v1671 = vunpack.c.l.b16 %v1655
    %v1672 = vpack.c.b16 %v1669, %v1668
    %v1673 = vpack.c.b16 %v1671, %v1670
    %1676 = vmatprep.subr.bf16.mxu0 0
    %1677 = vmatpush1.bf16.msra.mxu0 %v1672
    %1678 = vmatprep.subr.bf16.mxu0 0
    %1679 = vmatpush1.bf16.msra.mxu0 %v1673
    %1680 = vmatprep.subr.bf16.mxu0 0
    %1681 = vmatpush1.bf16.msra.mxu0 0
    %1682 = vmatprep.subr.bf16.mxu0 0
    %1683 = vmatpush1.bf16.msra.mxu0 0
    %1684 = vmatprep.subr.bf16.mxu0 0
    %1685 = vmatpush1.bf16.msra.mxu0 0
    %1686 = vmatprep.subr.bf16.mxu0 0
    %1687 = vmatpush1.bf16.msra.mxu0 0
    %1688 = vmatprep.subr.bf16.mxu0 0
    %1689 = vmatpush1.bf16.msra.mxu0 0
    %1690 = vmatprep.subr.bf16.mxu0 0
    %1691 = vmatpush1.bf16.msra.mxu0 0
    %1692 = vmatprep.subr.bf16.mxu0 0
    %1693 = vmatpush1.bf16.msra.mxu0 0
    %1694 = vmatprep.subr.bf16.mxu0 0
    %1695 = vmatpush1.bf16.msra.mxu0 0
    %1696 = vmatprep.subr.bf16.mxu0 0
    %1697 = vmatpush1.bf16.msra.mxu0 0
    %1698 = vmatprep.subr.bf16.mxu0 0
    %1699 = vmatpush1.bf16.msra.mxu0 0
    %1700 = vmatprep.subr.bf16.mxu0 0
    %1701 = vmatpush1.bf16.msra.mxu0 0
    %1702 = vmatprep.subr.bf16.mxu0 0
    %1703 = vmatpush1.bf16.msra.mxu0 0
    %1704 = vmatprep.subr.bf16.mxu0 0
    %1705 = vmatpush1.bf16.msra.mxu0 0
    %1706 = vmatprep.subr.bf16.mxu0 0
    %1707 = vmatpush1.bf16.msra.mxu0 0
    %1708 = vmatprep.mubr.bf16.mxu0 0
    %1709 = vmatmul.mubr.bf16.gmra.mrb[0].mxu0 %v1606
    %v1710 = vpop.f32.mrb[0].mxu0
    %v1711 = vadd.f32 %v1662, %v1710
    %v1712 = vpop.f32.mrb[0].mxu0
    %v1713 = vpop.f32.mrb[0].mxu0
    %v1714 = vadd.f32 %v1662, %v1713
    %v1715 = vpop.f32.mrb[0].mxu0
    %1716 = vdwg.mxu0
    %s1717 = scalar_lea.vmem %s12, 32
    %v1718 = vld [vmem:[%s1717] sm:$0xf]
    %v1719 = vld [vmem:[%s1717 + $0x4] sm:$0xf]
    %v1720 = vld [vmem:[%s1717 + $0x8] sm:$0xf]
    %v1721 = vld [vmem:[%s1717 + $0xc] sm:$0xf]
    %s1722 = scalar_lea.vmem %s13, 2
    %v1723 = vld [vmem:[%s1722] sm:$0x1]
    %v1725 = vlaneseq
    %v1726 = vshrl.u32 %v1725, 7
    %v1727 = vsub.s32 0, %v1726
    %v1728 = vrot.slane %v1723, %v1727
    %v1734 = vunpack.c.l.b16 %v1718
    %v1735 = vunpack.c.l.b16 %v1719
    %v1736 = vunpack.c.l.b16 %v1720
    %v1737 = vunpack.c.l.b16 %v1721
    %v1738 = vpack.c.b16 %v1735, %v1734
    %v1739 = vpack.c.b16 %v1737, %v1736
    %1742 = vmatprep.subr.bf16.mxu0 0
    %1743 = vmatpush1.bf16.msra.mxu0 %v1738
    %1744 = vmatprep.subr.bf16.mxu0 0
    %1745 = vmatpush1.bf16.msra.mxu0 %v1739
    %1746 = vmatprep.subr.bf16.mxu0 0
    %1747 = vmatpush1.bf16.msra.mxu0 0
    %1748 = vmatprep.subr.bf16.mxu0 0
    %1749 = vmatpush1.bf16.msra.mxu0 0
    %1750 = vmatprep.subr.bf16.mxu0 0
    %1751 = vmatpush1.bf16.msra.mxu0 0
    %1752 = vmatprep.subr.bf16.mxu0 0
    %1753 = vmatpush1.bf16.msra.mxu0 0
    %1754 = vmatprep.subr.bf16.mxu0 0
    %1755 = vmatpush1.bf16.msra.mxu0 0
    %1756 = vmatprep.subr.bf16.mxu0 0
    %1757 = vmatpush1.bf16.msra.mxu0 0
    %1758 = vmatprep.subr.bf16.mxu0 0
    %1759 = vmatpush1.bf16.msra.mxu0 0
    %1760 = vmatprep.subr.bf16.mxu0 0
    %1761 = vmatpush1.bf16.msra.mxu0 0
    %1762 = vmatprep.subr.bf16.mxu0 0
    %1763 = vmatpush1.bf16.msra.mxu0 0
    %1764 = vmatprep.subr.bf16.mxu0 0
    %1765 = vmatpush1.bf16.msra.mxu0 0
    %1766 = vmatprep.subr.bf16.mxu0 0
    %1767 = vmatpush1.bf16.msra.mxu0 0
    %1768 = vmatprep.subr.bf16.mxu0 0
    %1769 = vmatpush1.bf16.msra.mxu0 0
    %1770 = vmatprep.subr.bf16.mxu0 0
    %1771 = vmatpush1.bf16.msra.mxu0 0
    %1772 = vmatprep.subr.bf16.mxu0 0
    %1773 = vmatpush1.bf16.msra.mxu0 0
    %1774 = vmatprep.mubr.bf16.mxu0 0
    %1775 = vmatmul.mubr.bf16.gmra.mrb[0].mxu0 %v1606
    %v1776 = vpop.f32.mrb[0].mxu0
    %v1777 = vadd.f32 %v1728, %v1776
    %v1778 = vpop.f32.mrb[0].mxu0
    %v1779 = vpop.f32.mrb[0].mxu0
    %v1780 = vadd.f32 %v1728, %v1779
    %v1781 = vpop.f32.mrb[0].mxu0
    %1782 = vdwg.mxu0
    %v1783 = vpack.c.bf16 %v1649, %v1649
    %v1784 = vpack.c.bf16 %v1650, %v1650
    %v1785 = vpack.c.bf16 %v1711, %v1711
    %v1786 = vpack.c.bf16 %v1714, %v1714
    %v1787 = vpack.c.bf16 %v1777, %v1777
    %v1788 = vpack.c.bf16 %v1780, %v1780
    %s1789 = scalar_lea.vmem %s8, 48
    %v1790 = vld [vmem:[%s1789] sm:$0xf]
    %v1791 = vld [vmem:[%s1789 + $0x4] sm:$0xf]
    %v1792 = vld [vmem:[%s1789 + $0x8] sm:$0xf]
    %v1793 = vld [vmem:[%s1789 + $0xc] sm:$0xf]
    %s1794 = scalar_lea.vmem %s9, 3
    %v1795 = vld [vmem:[%s1794] sm:$0x1]
    %v1797 = vlaneseq
    %v1798 = vshrl.u32 %v1797, 7
    %v1799 = vsub.s32 0, %v1798
    %v1800 = vrot.slane %v1795, %v1799
    %v1806 = vunpack.c.l.b16 %v1790
    %v1807 = vunpack.c.l.b16 %v1791
    %v1808 = vunpack.c.l.b16 %v1792
    %v1809 = vunpack.c.l.b16 %v1793
    %v1810 = vpack.c.b16 %v1807, %v1806
    %v1811 = vpack.c.b16 %v1809, %v1808
    %1814 = vmatprep.subr.bf16.mxu0 0
    %1815 = vmatpush1.bf16.msra.mxu0 %v1810
    %1816 = vmatprep.subr.bf16.mxu0 0
    %1817 = vmatpush1.bf16.msra.mxu0 %v1811
    %1818 = vmatprep.subr.bf16.mxu0 0
    %1819 = vmatpush1.bf16.msra.mxu0 0
    %1820 = vmatprep.subr.bf16.mxu0 0
    %1821 = vmatpush1.bf16.msra.mxu0 0
    %1822 = vmatprep.subr.bf16.mxu0 0
    %1823 = vmatpush1.bf16.msra.mxu0 0
    %1824 = vmatprep.subr.bf16.mxu0 0
    %1825 = vmatpush1.bf16.msra.mxu0 0
    %1826 = vmatprep.subr.bf16.mxu0 0
    %1827 = vmatpush1.bf16.msra.mxu0 0
    %1828 = vmatprep.subr.bf16.mxu0 0
    %1829 = vmatpush1.bf16.msra.mxu0 0
    %1830 = vmatprep.subr.bf16.mxu0 0
    %1831 = vmatpush1.bf16.msra.mxu0 0
    %1832 = vmatprep.subr.bf16.mxu0 0
    %1833 = vmatpush1.bf16.msra.mxu0 0
    %1834 = vmatprep.subr.bf16.mxu0 0
    %1835 = vmatpush1.bf16.msra.mxu0 0
    %1836 = vmatprep.subr.bf16.mxu0 0
    %1837 = vmatpush1.bf16.msra.mxu0 0
    %1838 = vmatprep.subr.bf16.mxu0 0
    %1839 = vmatpush1.bf16.msra.mxu0 0
    %1840 = vmatprep.subr.bf16.mxu0 0
    %1841 = vmatpush1.bf16.msra.mxu0 0
    %1842 = vmatprep.subr.bf16.mxu0 0
    %1843 = vmatpush1.bf16.msra.mxu0 0
    %1844 = vmatprep.subr.bf16.mxu0 0
    %1845 = vmatpush1.bf16.msra.mxu0 0
    %1846 = vmatprep.mubr.bf16.mxu0 0
    %1847 = vmatmul.mubr.bf16.gmra.mrb[0].mxu0 %v1606
    %v1848 = vpop.f32.mrb[0].mxu0
    %v1849 = vadd.f32 %v1800, %v1848
    %v1850 = vpop.f32.mrb[0].mxu0
    %v1851 = vpop.f32.mrb[0].mxu0
    %v1852 = vadd.f32 %v1800, %v1851
    %v1853 = vpop.f32.mrb[0].mxu0
    %1854 = vdwg.mxu0
    %v1855 = vmul.f32 %v1849, 0.25
    %v1856 = vmul.f32 %v1852, 0.25
    %s1857 = scalar_lea.vmem %s10, 48
    %v1858 = vld [vmem:[%s1857] sm:$0xf]
    %v1859 = vld [vmem:[%s1857 + $0x4] sm:$0xf]
    %v1860 = vld [vmem:[%s1857 + $0x8] sm:$0xf]
    %v1861 = vld [vmem:[%s1857 + $0xc] sm:$0xf]
    %s1862 = scalar_lea.vmem %s11, 3
    %v1863 = vld [vmem:[%s1862] sm:$0x1]
    %v1865 = vlaneseq
    %v1866 = vshrl.u32 %v1865, 7
    %v1867 = vsub.s32 0, %v1866
    %v1868 = vrot.slane %v1863, %v1867
    %v1874 = vunpack.c.l.b16 %v1858
    %v1875 = vunpack.c.l.b16 %v1859
    %v1876 = vunpack.c.l.b16 %v1860
    %v1877 = vunpack.c.l.b16 %v1861
    %v1878 = vpack.c.b16 %v1875, %v1874
    %v1879 = vpack.c.b16 %v1877, %v1876
    %1882 = vmatprep.subr.bf16.mxu0 0
    %1883 = vmatpush1.bf16.msra.mxu0 %v1878
    %1884 = vmatprep.subr.bf16.mxu0 0
    %1885 = vmatpush1.bf16.msra.mxu0 %v1879
    %1886 = vmatprep.subr.bf16.mxu0 0
    %1887 = vmatpush1.bf16.msra.mxu0 0
    %1888 = vmatprep.subr.bf16.mxu0 0
    %1889 = vmatpush1.bf16.msra.mxu0 0
    %1890 = vmatprep.subr.bf16.mxu0 0
    %1891 = vmatpush1.bf16.msra.mxu0 0
    %1892 = vmatprep.subr.bf16.mxu0 0
    %1893 = vmatpush1.bf16.msra.mxu0 0
    %1894 = vmatprep.subr.bf16.mxu0 0
    %1895 = vmatpush1.bf16.msra.mxu0 0
    %1896 = vmatprep.subr.bf16.mxu0 0
    %1897 = vmatpush1.bf16.msra.mxu0 0
    %1898 = vmatprep.subr.bf16.mxu0 0
    %1899 = vmatpush1.bf16.msra.mxu0 0
    %1900 = vmatprep.subr.bf16.mxu0 0
    %1901 = vmatpush1.bf16.msra.mxu0 0
    %1902 = vmatprep.subr.bf16.mxu0 0
    %1903 = vmatpush1.bf16.msra.mxu0 0
    %1904 = vmatprep.subr.bf16.mxu0 0
    %1905 = vmatpush1.bf16.msra.mxu0 0
    %1906 = vmatprep.subr.bf16.mxu0 0
    %1907 = vmatpush1.bf16.msra.mxu0 0
    %1908 = vmatprep.subr.bf16.mxu0 0
    %1909 = vmatpush1.bf16.msra.mxu0 0
    %1910 = vmatprep.subr.bf16.mxu0 0
    %1911 = vmatpush1.bf16.msra.mxu0 0
    %1912 = vmatprep.subr.bf16.mxu0 0
    %1913 = vmatpush1.bf16.msra.mxu0 0
    %1914 = vmatprep.mubr.bf16.mxu0 0
    %1915 = vmatmul.mubr.bf16.gmra.mrb[0].mxu0 %v1606
    %v1916 = vpop.f32.mrb[0].mxu0
    %v1917 = vadd.f32 %v1868, %v1916
    %v1918 = vpop.f32.mrb[0].mxu0
    %v1919 = vpop.f32.mrb[0].mxu0
    %v1920 = vadd.f32 %v1868, %v1919
    %v1921 = vpop.f32.mrb[0].mxu0
    %1922 = vdwg.mxu0
    %s1923 = scalar_lea.vmem %s12, 48
    %v1924 = vld [vmem:[%s1923] sm:$0xf]
    %v1925 = vld [vmem:[%s1923 + $0x4] sm:$0xf]
    %v1926 = vld [vmem:[%s1923 + $0x8] sm:$0xf]
    %v1927 = vld [vmem:[%s1923 + $0xc] sm:$0xf]
    %s1928 = scalar_lea.vmem %s13, 3
    %v1929 = vld [vmem:[%s1928] sm:$0x1]
    %v1931 = vlaneseq
    %v1932 = vshrl.u32 %v1931, 7
    %v1933 = vsub.s32 0, %v1932
    %v1934 = vrot.slane %v1929, %v1933
    %v1940 = vunpack.c.l.b16 %v1924
    %v1941 = vunpack.c.l.b16 %v1925
    %v1942 = vunpack.c.l.b16 %v1926
    %v1943 = vunpack.c.l.b16 %v1927
    %v1944 = vpack.c.b16 %v1941, %v1940
    %v1945 = vpack.c.b16 %v1943, %v1942
    %1948 = vmatprep.subr.bf16.mxu0 0
    %1949 = vmatpush1.bf16.msra.mxu0 %v1944
    %1950 = vmatprep.subr.bf16.mxu0 0
    %1951 = vmatpush1.bf16.msra.mxu0 %v1945
    %1952 = vmatprep.subr.bf16.mxu0 0
    %1953 = vmatpush1.bf16.msra.mxu0 0
    %1954 = vmatprep.subr.bf16.mxu0 0
    %1955 = vmatpush1.bf16.msra.mxu0 0
    %1956 = vmatprep.subr.bf16.mxu0 0
    %1957 = vmatpush1.bf16.msra.mxu0 0
    %1958 = vmatprep.subr.bf16.mxu0 0
    %1959 = vmatpush1.bf16.msra.mxu0 0
    %1960 = vmatprep.subr.bf16.mxu0 0
    %1961 = vmatpush1.bf16.msra.mxu0 0
    %1962 = vmatprep.subr.bf16.mxu0 0
    %1963 = vmatpush1.bf16.msra.mxu0 0
    %1964 = vmatprep.subr.bf16.mxu0 0
    %1965 = vmatpush1.bf16.msra.mxu0 0
    %1966 = vmatprep.subr.bf16.mxu0 0
    %1967 = vmatpush1.bf16.msra.mxu0 0
    %1968 = vmatprep.subr.bf16.mxu0 0
    %1969 = vmatpush1.bf16.msra.mxu0 0
    %1970 = vmatprep.subr.bf16.mxu0 0
    %1971 = vmatpush1.bf16.msra.mxu0 0
    %1972 = vmatprep.subr.bf16.mxu0 0
    %1973 = vmatpush1.bf16.msra.mxu0 0
    %1974 = vmatprep.subr.bf16.mxu0 0
    %1975 = vmatpush1.bf16.msra.mxu0 0
    %1976 = vmatprep.subr.bf16.mxu0 0
    %1977 = vmatpush1.bf16.msra.mxu0 0
    %1978 = vmatprep.subr.bf16.mxu0 0
    %1979 = vmatpush1.bf16.msra.mxu0 0
    %1980 = vmatprep.mubr.bf16.mxu0 0
    %1981 = vmatmul.mubr.bf16.gmra.mrb[0].mxu0 %v1606
    %v1982 = vpop.f32.mrb[0].mxu0
    %v1983 = vadd.f32 %v1934, %v1982
    %v1984 = vpop.f32.mrb[0].mxu0
    %v1985 = vpop.f32.mrb[0].mxu0
    %v1986 = vadd.f32 %v1934, %v1985
    %v1987 = vpop.f32.mrb[0].mxu0
    %1988 = vdwg.mxu0
    %v1989 = vpack.c.bf16 %v1855, %v1855
    %v1990 = vpack.c.bf16 %v1856, %v1856
    %v1991 = vpack.c.bf16 %v1917, %v1917
    %v1992 = vpack.c.bf16 %v1920, %v1920
    %v1993 = vpack.c.bf16 %v1983, %v1983
    %v1994 = vpack.c.bf16 %v1986, %v1986
    %v1996 = vsel %vm780, %v1783, 0
    %v1999 = vsel %vm780, %v1785, 0
    %2001 = vmatprep.subr.bf16.mxu0 0
    %2002 = vmatpush1.bf16.xpose.msra.mxu0 %v1999
    %2003 = vmatprep.subr.bf16.mxu0 0
    %2004 = vmatpush1.bf16.xpose.msra.mxu0 0
    %2005 = vmatprep.subr.bf16.mxu0 0
    %2006 = vmatpush1.bf16.xpose.msra.mxu0 0
    %2007 = vmatprep.subr.bf16.mxu0 0
    %2008 = vmatpush1.bf16.xpose.msra.mxu0 0
    %2009 = vmatprep.subr.bf16.mxu0 0
    %2010 = vmatpush1.bf16.xpose.msra.mxu0 0
    %2011 = vmatprep.subr.bf16.mxu0 0
    %2012 = vmatpush1.bf16.xpose.msra.mxu0 0
    %2013 = vmatprep.subr.bf16.mxu0 0
    %2014 = vmatpush1.bf16.xpose.msra.mxu0 0
    %2015 = vmatprep.subr.bf16.mxu0 0
    %2016 = vmatpush1.bf16.xpose.msra.mxu0 0
    %2017 = vmatprep.subr.bf16.mxu0 0
    %2018 = vmatpush1.bf16.xpose.msra.mxu0 0
    %2019 = vmatprep.subr.bf16.mxu0 0
    %2020 = vmatpush1.bf16.xpose.msra.mxu0 0
    %2021 = vmatprep.subr.bf16.mxu0 0
    %2022 = vmatpush1.bf16.xpose.msra.mxu0 0
    %2023 = vmatprep.subr.bf16.mxu0 0
    %2024 = vmatpush1.bf16.xpose.msra.mxu0 0
    %2025 = vmatprep.subr.bf16.mxu0 0
    %2026 = vmatpush1.bf16.xpose.msra.mxu0 0
    %2027 = vmatprep.subr.bf16.mxu0 0
    %2028 = vmatpush1.bf16.xpose.msra.mxu0 0
    %2029 = vmatprep.subr.bf16.mxu0 0
    %2030 = vmatpush1.bf16.xpose.msra.mxu0 0
    %2031 = vmatprep.subr.bf16.mxu0 0
    %2032 = vmatpush1.bf16.xpose.msra.mxu0 0
    %2033 = vmatprep.mubr.bf16.mxu0 0
    %2034 = vmatmul.mubr.bf16.gmra.mrb[0].mxu0 %v1996
    %v2035 = vpop.f32.mrb[0].mxu0
    %v2036 = vadd.f32 %v773, %v2035
    %v2037 = vpop.f32.mrb[0].mxu0
    %v2038 = vpop.f32.mrb[0].mxu0
    %v2039 = vpop.f32.mrb[0].mxu0
    %2040 = vdwg.mxu0
    %v2042 = vsel %vm780, %v1784, 0
    %v2045 = vsel %vm780, %v1786, 0
    %2047 = vmatprep.subr.bf16.mxu0 0
    %2048 = vmatpush1.bf16.xpose.msra.mxu0 %v2045
    %2049 = vmatprep.subr.bf16.mxu0 0
    %2050 = vmatpush1.bf16.xpose.msra.mxu0 0
    %2051 = vmatprep.subr.bf16.mxu0 0
    %2052 = vmatpush1.bf16.xpose.msra.mxu0 0
    %2053 = vmatprep.subr.bf16.mxu0 0
    %2054 = vmatpush1.bf16.xpose.msra.mxu0 0
    %2055 = vmatprep.subr.bf16.mxu0 0
    %2056 = vmatpush1.bf16.xpose.msra.mxu0 0
    %2057 = vmatprep.subr.bf16.mxu0 0
    %2058 = vmatpush1.bf16.xpose.msra.mxu0 0
    %2059 = vmatprep.subr.bf16.mxu0 0
    %2060 = vmatpush1.bf16.xpose.msra.mxu0 0
    %2061 = vmatprep.subr.bf16.mxu0 0
    %2062 = vmatpush1.bf16.xpose.msra.mxu0 0
    %2063 = vmatprep.subr.bf16.mxu0 0
    %2064 = vmatpush1.bf16.xpose.msra.mxu0 0
    %2065 = vmatprep.subr.bf16.mxu0 0
    %2066 = vmatpush1.bf16.xpose.msra.mxu0 0
    %2067 = vmatprep.subr.bf16.mxu0 0
    %2068 = vmatpush1.bf16.xpose.msra.mxu0 0
    %2069 = vmatprep.subr.bf16.mxu0 0
    %2070 = vmatpush1.bf16.xpose.msra.mxu0 0
    %2071 = vmatprep.subr.bf16.mxu0 0
    %2072 = vmatpush1.bf16.xpose.msra.mxu0 0
    %2073 = vmatprep.subr.bf16.mxu0 0
    %2074 = vmatpush1.bf16.xpose.msra.mxu0 0
    %2075 = vmatprep.subr.bf16.mxu0 0
    %2076 = vmatpush1.bf16.xpose.msra.mxu0 0
    %2077 = vmatprep.subr.bf16.mxu0 0
    %2078 = vmatpush1.bf16.xpose.msra.mxu0 0
    %2079 = vmatprep.mubr.bf16.mxu0 0
    %2080 = vmatmul.mubr.bf16.gmra.mrb[0].mxu0 %v2042
    %v2081 = vpop.f32.mrb[0].mxu0
    %v2082 = vadd.f32 %v777, %v2081
    %v2083 = vpop.f32.mrb[0].mxu0
    %v2084 = vpop.f32.mrb[0].mxu0
    %v2085 = vpop.f32.mrb[0].mxu0
    %2086 = vdwg.mxu0
    %v2088 = vsel %vm780, %v1989, 0
    %v2091 = vsel %vm780, %v1991, 0
    %2093 = vmatprep.subr.bf16.mxu0 0
    %2094 = vmatpush1.bf16.xpose.msra.mxu0 %v2091
    %2095 = vmatprep.subr.bf16.mxu0 0
    %2096 = vmatpush1.bf16.xpose.msra.mxu0 0
    %2097 = vmatprep.subr.bf16.mxu0 0
    %2098 = vmatpush1.bf16.xpose.msra.mxu0 0
    %2099 = vmatprep.subr.bf16.mxu0 0
    %2100 = vmatpush1.bf16.xpose.msra.mxu0 0
    %2101 = vmatprep.subr.bf16.mxu0 0
    %2102 = vmatpush1.bf16.xpose.msra.mxu0 0
    %2103 = vmatprep.subr.bf16.mxu0 0
    %2104 = vmatpush1.bf16.xpose.msra.mxu0 0
    %2105 = vmatprep.subr.bf16.mxu0 0
    %2106 = vmatpush1.bf16.xpose.msra.mxu0 0
    %2107 = vmatprep.subr.bf16.mxu0 0
    %2108 = vmatpush1.bf16.xpose.msra.mxu0 0
    %2109 = vmatprep.subr.bf16.mxu0 0
    %2110 = vmatpush1.bf16.xpose.msra.mxu0 0
    %2111 = vmatprep.subr.bf16.mxu0 0
    %2112 = vmatpush1.bf16.xpose.msra.mxu0 0
    %2113 = vmatprep.subr.bf16.mxu0 0
    %2114 = vmatpush1.bf16.xpose.msra.mxu0 0
    %2115 = vmatprep.subr.bf16.mxu0 0
    %2116 = vmatpush1.bf16.xpose.msra.mxu0 0
    %2117 = vmatprep.subr.bf16.mxu0 0
    %2118 = vmatpush1.bf16.xpose.msra.mxu0 0
    %2119 = vmatprep.subr.bf16.mxu0 0
    %2120 = vmatpush1.bf16.xpose.msra.mxu0 0
    %2121 = vmatprep.subr.bf16.mxu0 0
    %2122 = vmatpush1.bf16.xpose.msra.mxu0 0
    %2123 = vmatprep.subr.bf16.mxu0 0
    %2124 = vmatpush1.bf16.xpose.msra.mxu0 0
    %2125 = vmatprep.mubr.bf16.mxu0 0
    %2126 = vmatmul.mubr.bf16.gmra.mrb[0].mxu0 %v2088
    %v2127 = vpop.f32.mrb[0].mxu0
    %v2128 = vadd.f32 %v773, %v2127
    %v2129 = vpop.f32.mrb[0].mxu0
    %v2130 = vpop.f32.mrb[0].mxu0
    %v2131 = vpop.f32.mrb[0].mxu0
    %2132 = vdwg.mxu0
    %v2134 = vsel %vm780, %v1990, 0
    %v2137 = vsel %vm780, %v1992, 0
    %2139 = vmatprep.subr.bf16.mxu0 0
    %2140 = vmatpush1.bf16.xpose.msra.mxu0 %v2137
    %2141 = vmatprep.subr.bf16.mxu0 0
    %2142 = vmatpush1.bf16.xpose.msra.mxu0 0
    %2143 = vmatprep.subr.bf16.mxu0 0
    %2144 = vmatpush1.bf16.xpose.msra.mxu0 0
    %2145 = vmatprep.subr.bf16.mxu0 0
    %2146 = vmatpush1.bf16.xpose.msra.mxu0 0
    %2147 = vmatprep.subr.bf16.mxu0 0
    %2148 = vmatpush1.bf16.xpose.msra.mxu0 0
    %2149 = vmatprep.subr.bf16.mxu0 0
    %2150 = vmatpush1.bf16.xpose.msra.mxu0 0
    %2151 = vmatprep.subr.bf16.mxu0 0
    %2152 = vmatpush1.bf16.xpose.msra.mxu0 0
    %2153 = vmatprep.subr.bf16.mxu0 0
    %2154 = vmatpush1.bf16.xpose.msra.mxu0 0
    %2155 = vmatprep.subr.bf16.mxu0 0
    %2156 = vmatpush1.bf16.xpose.msra.mxu0 0
    %2157 = vmatprep.subr.bf16.mxu0 0
    %2158 = vmatpush1.bf16.xpose.msra.mxu0 0
    %2159 = vmatprep.subr.bf16.mxu0 0
    %2160 = vmatpush1.bf16.xpose.msra.mxu0 0
    %2161 = vmatprep.subr.bf16.mxu0 0
    %2162 = vmatpush1.bf16.xpose.msra.mxu0 0
    %2163 = vmatprep.subr.bf16.mxu0 0
    %2164 = vmatpush1.bf16.xpose.msra.mxu0 0
    %2165 = vmatprep.subr.bf16.mxu0 0
    %2166 = vmatpush1.bf16.xpose.msra.mxu0 0
    %2167 = vmatprep.subr.bf16.mxu0 0
    %2168 = vmatpush1.bf16.xpose.msra.mxu0 0
    %2169 = vmatprep.subr.bf16.mxu0 0
    %2170 = vmatpush1.bf16.xpose.msra.mxu0 0
    %2171 = vmatprep.mubr.bf16.mxu0 0
    %2172 = vmatmul.mubr.bf16.gmra.mrb[0].mxu0 %v2134
    %v2173 = vpop.f32.mrb[0].mxu0
    %v2174 = vadd.f32 %v777, %v2173
    %v2175 = vpop.f32.mrb[0].mxu0
    %v2176 = vpop.f32.mrb[0].mxu0
    %v2177 = vpop.f32.mrb[0].mxu0
    %2178 = vdwg.mxu0
    %v2179 = vsel %vm965, %v2036, -inf
    %2180 = vmax.xlane.f32.xlu0 %v2179
    %v2181 = vpop.xlane.xlu0 %2180
    %v2182 = vsel %vm965, %v2082, -inf
    %2183 = vmax.xlane.f32.xlu0 %v2182
    %v2184 = vpop.xlane.xlu0 %2183
    %v2185 = vsel %vm965, %v2128, -inf
    %2186 = vmax.xlane.f32.xlu0 %v2185
    %v2187 = vpop.xlane.xlu0 %2186
    %v2188 = vsel %vm965, %v2174, -inf
    %2189 = vmax.xlane.f32.xlu0 %v2188
    %v2190 = vpop.xlane.xlu0 %2189
    %v2191 = vsub.f32 %v2036, %v2181
    %v2192 = vsub.f32 %v2082, %v2184
    %v2193 = vsub.f32 %v2128, %v2187
    %v2194 = vsub.f32 %v2174, %v2190
    %v2195 = vmul.f32 %v2191, 1.442695
    %v2196 = vpow.pop %v2195
    %v2197 = vmul.f32 %v2192, 1.442695
    %v2198 = vpow.pop %v2197
    %v2199 = vmul.f32 %v2193, 1.442695
    %v2200 = vpow.pop %v2199
    %v2201 = vmul.f32 %v2194, 1.442695
    %v2202 = vpow.pop %v2201
    %v2203 = vsel %vm965, %v2196, 0.0
    %2204 = vadd.xlane.f32.xlu0 %v2203
    %v2205 = vpop.xlane.xlu0 %2204
    %v2206 = vsel %vm965, %v2198, 0.0
    %2207 = vadd.xlane.f32.xlu0 %v2206
    %v2208 = vpop.xlane.xlu0 %2207
    %v2209 = vsel %vm965, %v2200, 0.0
    %2210 = vadd.xlane.f32.xlu0 %v2209
    %v2211 = vpop.xlane.xlu0 %2210
    %v2212 = vsel %vm965, %v2202, 0.0
    %2213 = vadd.xlane.f32.xlu0 %v2212
    %v2214 = vpop.xlane.xlu0 %2213
    %v2215 = vrcp.pop %v2205
    %v2216 = vrcp.pop %v2208
    %v2217 = vrcp.pop %v2211
    %v2218 = vrcp.pop %v2214
    %v2219 = vmul.f32 %v2196, %v2215
    %v2220 = vmul.f32 %v2198, %v2216
    %v2221 = vmul.f32 %v2200, %v2217
    %v2222 = vmul.f32 %v2202, %v2218
    %v2223 = vpack.c.bf16 %v2219, %v2219
    %v2224 = vpack.c.bf16 %v2220, %v2220
    %v2225 = vpack.c.bf16 %v2221, %v2221
    %v2226 = vpack.c.bf16 %v2222, %v2222
    %v2228 = vsel %vm965, %v2223, 0
    %v2231 = vsel %vm146, %v1787, 0
    %2233 = vmatprep.subr.bf16.mxu0 0
    %2234 = vmatpush1.bf16.msra.mxu0 %v2231
    %2235 = vmatprep.subr.bf16.mxu0 0
    %2236 = vmatpush1.bf16.msra.mxu0 0
    %2237 = vmatprep.subr.bf16.mxu0 0
    %2238 = vmatpush1.bf16.msra.mxu0 0
    %2239 = vmatprep.subr.bf16.mxu0 0
    %2240 = vmatpush1.bf16.msra.mxu0 0
    %2241 = vmatprep.subr.bf16.mxu0 0
    %2242 = vmatpush1.bf16.msra.mxu0 0
    %2243 = vmatprep.subr.bf16.mxu0 0
    %2244 = vmatpush1.bf16.msra.mxu0 0
    %2245 = vmatprep.subr.bf16.mxu0 0
    %2246 = vmatpush1.bf16.msra.mxu0 0
    %2247 = vmatprep.subr.bf16.mxu0 0
    %2248 = vmatpush1.bf16.msra.mxu0 0
    %2249 = vmatprep.subr.bf16.mxu0 0
    %2250 = vmatpush1.bf16.msra.mxu0 0
    %2251 = vmatprep.subr.bf16.mxu0 0
    %2252 = vmatpush1.bf16.msra.mxu0 0
    %2253 = vmatprep.subr.bf16.mxu0 0
    %2254 = vmatpush1.bf16.msra.mxu0 0
    %2255 = vmatprep.subr.bf16.mxu0 0
    %2256 = vmatpush1.bf16.msra.mxu0 0
    %2257 = vmatprep.subr.bf16.mxu0 0
    %2258 = vmatpush1.bf16.msra.mxu0 0
    %2259 = vmatprep.subr.bf16.mxu0 0
    %2260 = vmatpush1.bf16.msra.mxu0 0
    %2261 = vmatprep.subr.bf16.mxu0 0
    %2262 = vmatpush1.bf16.msra.mxu0 0
    %2263 = vmatprep.subr.bf16.mxu0 0
    %2264 = vmatpush1.bf16.msra.mxu0 0
    %2265 = vmatprep.mubr.bf16.mxu0 0
    %2266 = vmatmul.mubr.bf16.gmra.mrb[0].mxu0 %v2228
    %v2267 = vpop.f32.mrb[0].mxu0
    %v2268 = vadd.f32 0.0, %v2267
    %v2269 = vpop.f32.mrb[0].mxu0
    %v2270 = vpop.f32.mrb[0].mxu0
    %v2271 = vpop.f32.mrb[0].mxu0
    %2272 = vdwg.mxu0
    %v2274 = vsel %vm965, %v2224, 0
    %v2277 = vsel %vm146, %v1788, 0
    %2279 = vmatprep.subr.bf16.mxu0 0
    %2280 = vmatpush1.bf16.msra.mxu0 %v2277
    %2281 = vmatprep.subr.bf16.mxu0 0
    %2282 = vmatpush1.bf16.msra.mxu0 0
    %2283 = vmatprep.subr.bf16.mxu0 0
    %2284 = vmatpush1.bf16.msra.mxu0 0
    %2285 = vmatprep.subr.bf16.mxu0 0
    %2286 = vmatpush1.bf16.msra.mxu0 0
    %2287 = vmatprep.subr.bf16.mxu0 0
    %2288 = vmatpush1.bf16.msra.mxu0 0
    %2289 = vmatprep.subr.bf16.mxu0 0
    %2290 = vmatpush1.bf16.msra.mxu0 0
    %2291 = vmatprep.subr.bf16.mxu0 0
    %2292 = vmatpush1.bf16.msra.mxu0 0
    %2293 = vmatprep.subr.bf16.mxu0 0
    %2294 = vmatpush1.bf16.msra.mxu0 0
    %2295 = vmatprep.subr.bf16.mxu0 0
    %2296 = vmatpush1.bf16.msra.mxu0 0
    %2297 = vmatprep.subr.bf16.mxu0 0
    %2298 = vmatpush1.bf16.msra.mxu0 0
    %2299 = vmatprep.subr.bf16.mxu0 0
    %2300 = vmatpush1.bf16.msra.mxu0 0
    %2301 = vmatprep.subr.bf16.mxu0 0
    %2302 = vmatpush1.bf16.msra.mxu0 0
    %2303 = vmatprep.subr.bf16.mxu0 0
    %2304 = vmatpush1.bf16.msra.mxu0 0
    %2305 = vmatprep.subr.bf16.mxu0 0
    %2306 = vmatpush1.bf16.msra.mxu0 0
    %2307 = vmatprep.subr.bf16.mxu0 0
    %2308 = vmatpush1.bf16.msra.mxu0 0
    %2309 = vmatprep.subr.bf16.mxu0 0
    %2310 = vmatpush1.bf16.msra.mxu0 0
    %2311 = vmatprep.mubr.bf16.mxu0 0
    %2312 = vmatmul.mubr.bf16.gmra.mrb[0].mxu0 %v2274
    %v2313 = vpop.f32.mrb[0].mxu0
    %v2314 = vadd.f32 0.0, %v2313
    %v2315 = vpop.f32.mrb[0].mxu0
    %v2316 = vpop.f32.mrb[0].mxu0
    %v2317 = vpop.f32.mrb[0].mxu0
    %2318 = vdwg.mxu0
    %v2320 = vsel %vm965, %v2225, 0
    %v2323 = vsel %vm146, %v1993, 0
    %2325 = vmatprep.subr.bf16.mxu0 0
    %2326 = vmatpush1.bf16.msra.mxu0 %v2323
    %2327 = vmatprep.subr.bf16.mxu0 0
    %2328 = vmatpush1.bf16.msra.mxu0 0
    %2329 = vmatprep.subr.bf16.mxu0 0
    %2330 = vmatpush1.bf16.msra.mxu0 0
    %2331 = vmatprep.subr.bf16.mxu0 0
    %2332 = vmatpush1.bf16.msra.mxu0 0
    %2333 = vmatprep.subr.bf16.mxu0 0
    %2334 = vmatpush1.bf16.msra.mxu0 0
    %2335 = vmatprep.subr.bf16.mxu0 0
    %2336 = vmatpush1.bf16.msra.mxu0 0
    %2337 = vmatprep.subr.bf16.mxu0 0
    %2338 = vmatpush1.bf16.msra.mxu0 0
    %2339 = vmatprep.subr.bf16.mxu0 0
    %2340 = vmatpush1.bf16.msra.mxu0 0
    %2341 = vmatprep.subr.bf16.mxu0 0
    %2342 = vmatpush1.bf16.msra.mxu0 0
    %2343 = vmatprep.subr.bf16.mxu0 0
    %2344 = vmatpush1.bf16.msra.mxu0 0
    %2345 = vmatprep.subr.bf16.mxu0 0
    %2346 = vmatpush1.bf16.msra.mxu0 0
    %2347 = vmatprep.subr.bf16.mxu0 0
    %2348 = vmatpush1.bf16.msra.mxu0 0
    %2349 = vmatprep.subr.bf16.mxu0 0
    %2350 = vmatpush1.bf16.msra.mxu0 0
    %2351 = vmatprep.subr.bf16.mxu0 0
    %2352 = vmatpush1.bf16.msra.mxu0 0
    %2353 = vmatprep.subr.bf16.mxu0 0
    %2354 = vmatpush1.bf16.msra.mxu0 0
    %2355 = vmatprep.subr.bf16.mxu0 0
    %2356 = vmatpush1.bf16.msra.mxu0 0
    %2357 = vmatprep.mubr.bf16.mxu0 0
    %2358 = vmatmul.mubr.bf16.gmra.mrb[0].mxu0 %v2320
    %v2359 = vpop.f32.mrb[0].mxu0
    %v2360 = vadd.f32 0.0, %v2359
    %v2361 = vpop.f32.mrb[0].mxu0
    %v2362 = vpop.f32.mrb[0].mxu0
    %v2363 = vpop.f32.mrb[0].mxu0
    %2364 = vdwg.mxu0
    %v2366 = vsel %vm965, %v2226, 0
    %v2369 = vsel %vm146, %v1994, 0
    %2371 = vmatprep.subr.bf16.mxu0 0
    %2372 = vmatpush1.bf16.msra.mxu0 %v2369
    %2373 = vmatprep.subr.bf16.mxu0 0
    %2374 = vmatpush1.bf16.msra.mxu0 0
    %2375 = vmatprep.subr.bf16.mxu0 0
    %2376 = vmatpush1.bf16.msra.mxu0 0
    %2377 = vmatprep.subr.bf16.mxu0 0
    %2378 = vmatpush1.bf16.msra.mxu0 0
    %2379 = vmatprep.subr.bf16.mxu0 0
    %2380 = vmatpush1.bf16.msra.mxu0 0
    %2381 = vmatprep.subr.bf16.mxu0 0
    %2382 = vmatpush1.bf16.msra.mxu0 0
    %2383 = vmatprep.subr.bf16.mxu0 0
    %2384 = vmatpush1.bf16.msra.mxu0 0
    %2385 = vmatprep.subr.bf16.mxu0 0
    %2386 = vmatpush1.bf16.msra.mxu0 0
    %2387 = vmatprep.subr.bf16.mxu0 0
    %2388 = vmatpush1.bf16.msra.mxu0 0
    %2389 = vmatprep.subr.bf16.mxu0 0
    %2390 = vmatpush1.bf16.msra.mxu0 0
    %2391 = vmatprep.subr.bf16.mxu0 0
    %2392 = vmatpush1.bf16.msra.mxu0 0
    %2393 = vmatprep.subr.bf16.mxu0 0
    %2394 = vmatpush1.bf16.msra.mxu0 0
    %2395 = vmatprep.subr.bf16.mxu0 0
    %2396 = vmatpush1.bf16.msra.mxu0 0
    %2397 = vmatprep.subr.bf16.mxu0 0
    %2398 = vmatpush1.bf16.msra.mxu0 0
    %2399 = vmatprep.subr.bf16.mxu0 0
    %2400 = vmatpush1.bf16.msra.mxu0 0
    %2401 = vmatprep.subr.bf16.mxu0 0
    %2402 = vmatpush1.bf16.msra.mxu0 0
    %2403 = vmatprep.mubr.bf16.mxu0 0
    %2404 = vmatmul.mubr.bf16.gmra.mrb[0].mxu0 %v2366
    %v2405 = vpop.f32.mrb[0].mxu0
    %v2406 = vadd.f32 0.0, %v2405
    %v2407 = vpop.f32.mrb[0].mxu0
    %v2408 = vpop.f32.mrb[0].mxu0
    %v2409 = vpop.f32.mrb[0].mxu0
    %2410 = vdwg.mxu0
    %s2411 = scalar_lea.vmem %s15, 1
    %v2412 = vld [vmem:[%s2411] sm:$0x1]
    %v2413 = vpack.c.bf16 %v2314, %v2268
    %s2414 = scalar_lea.vmem %s14, 16
    %v2415 = vld [vmem:[%s2414] sm:$0xf]
    %v2416 = vld [vmem:[%s2414 + $0x4] sm:$0xf]
    %v2419 = vunpack.c.l.b16 %v2415
    %v2420 = vunpack.c.l.b16 %v2416
    %v2421 = vpack.c.b16 %v2420, %v2419
    %v2424 = vsel %vm780, %v2413, 0
    %2426 = vmatprep.subr.bf16.mxu0 0
    %2427 = vmatpush1.bf16.msra.mxu0 %v2421
    %2428 = vmatprep.subr.bf16.mxu0 0
    %2429 = vmatpush1.bf16.msra.mxu0 0
    %2430 = vmatprep.subr.bf16.mxu0 0
    %2431 = vmatpush1.bf16.msra.mxu0 0
    %2432 = vmatprep.subr.bf16.mxu0 0
    %2433 = vmatpush1.bf16.msra.mxu0 0
    %2434 = vmatprep.subr.bf16.mxu0 0
    %2435 = vmatpush1.bf16.msra.mxu0 0
    %2436 = vmatprep.subr.bf16.mxu0 0
    %2437 = vmatpush1.bf16.msra.mxu0 0
    %2438 = vmatprep.subr.bf16.mxu0 0
    %2439 = vmatpush1.bf16.msra.mxu0 0
    %2440 = vmatprep.subr.bf16.mxu0 0
    %2441 = vmatpush1.bf16.msra.mxu0 0
    %2442 = vmatprep.subr.bf16.mxu0 0
    %2443 = vmatpush1.bf16.msra.mxu0 0
    %2444 = vmatprep.subr.bf16.mxu0 0
    %2445 = vmatpush1.bf16.msra.mxu0 0
    %2446 = vmatprep.subr.bf16.mxu0 0
    %2447 = vmatpush1.bf16.msra.mxu0 0
    %2448 = vmatprep.subr.bf16.mxu0 0
    %2449 = vmatpush1.bf16.msra.mxu0 0
    %2450 = vmatprep.subr.bf16.mxu0 0
    %2451 = vmatpush1.bf16.msra.mxu0 0
    %2452 = vmatprep.subr.bf16.mxu0 0
    %2453 = vmatpush1.bf16.msra.mxu0 0
    %2454 = vmatprep.subr.bf16.mxu0 0
    %2455 = vmatpush1.bf16.msra.mxu0 0
    %2456 = vmatprep.subr.bf16.mxu0 0
    %2457 = vmatpush1.bf16.msra.mxu0 0
    %2458 = vmatprep.mubr.bf16.mxu0 0
    %2459 = vmatmul.mubr.bf16.gmra.mrb[0].mxu0 %v2424
    %v2460 = vpop.f32.mrb[0].mxu0
    %v2461 = vadd.f32 0.0, %v2460
    %v2462 = vpop.f32.mrb[0].mxu0
    %v2463 = vpop.f32.mrb[0].mxu0
    %v2464 = vadd.f32 0.0, %v2463
    %v2465 = vpop.f32.mrb[0].mxu0
    %2466 = vdwg.mxu0
    %v2468 = vlaneseq
    %v2469 = vshrl.u32 %v2468, 7
    %v2470 = vsub.s32 0, %v2469
    %v2471 = vrot.slane %v2412, %v2470
    %v2473 = vadd.f32 %v2471, %v2461
    %v2474 = vadd.f32 %v2471, %v2464
    %v2475 = vpack.c.bf16 %v2406, %v2360
    %s2476 = scalar_lea.vmem %s14, 24
    %v2477 = vld [vmem:[%s2476] sm:$0xf]
    %v2478 = vld [vmem:[%s2476 + $0x4] sm:$0xf]
    %v2481 = vunpack.c.l.b16 %v2477
    %v2482 = vunpack.c.l.b16 %v2478
    %v2483 = vpack.c.b16 %v2482, %v2481
    %v2486 = vsel %vm780, %v2475, 0
    %2488 = vmatprep.subr.bf16.mxu0 0
    %2489 = vmatpush1.bf16.msra.mxu0 %v2483
    %2490 = vmatprep.subr.bf16.mxu0 0
    %2491 = vmatpush1.bf16.msra.mxu0 0
    %2492 = vmatprep.subr.bf16.mxu0 0
    %2493 = vmatpush1.bf16.msra.mxu0 0
    %2494 = vmatprep.subr.bf16.mxu0 0
    %2495 = vmatpush1.bf16.msra.mxu0 0
    %2496 = vmatprep.subr.bf16.mxu0 0
    %2497 = vmatpush1.bf16.msra.mxu0 0
    %2498 = vmatprep.subr.bf16.mxu0 0
    %2499 = vmatpush1.bf16.msra.mxu0 0
    %2500 = vmatprep.subr.bf16.mxu0 0
    %2501 = vmatpush1.bf16.msra.mxu0 0
    %2502 = vmatprep.subr.bf16.mxu0 0
    %2503 = vmatpush1.bf16.msra.mxu0 0
    %2504 = vmatprep.subr.bf16.mxu0 0
    %2505 = vmatpush1.bf16.msra.mxu0 0
    %2506 = vmatprep.subr.bf16.mxu0 0
    %2507 = vmatpush1.bf16.msra.mxu0 0
    %2508 = vmatprep.subr.bf16.mxu0 0
    %2509 = vmatpush1.bf16.msra.mxu0 0
    %2510 = vmatprep.subr.bf16.mxu0 0
    %2511 = vmatpush1.bf16.msra.mxu0 0
    %2512 = vmatprep.subr.bf16.mxu0 0
    %2513 = vmatpush1.bf16.msra.mxu0 0
    %2514 = vmatprep.subr.bf16.mxu0 0
    %2515 = vmatpush1.bf16.msra.mxu0 0
    %2516 = vmatprep.subr.bf16.mxu0 0
    %2517 = vmatpush1.bf16.msra.mxu0 0
    %2518 = vmatprep.subr.bf16.mxu0 0
    %2519 = vmatpush1.bf16.msra.mxu0 0
    %2520 = vmatprep.mubr.bf16.mxu0 0
    %2521 = vmatmul.mubr.bf16.gmra.mrb[0].mxu0 %v2486
    %v2522 = vpop.f32.mrb[0].mxu0
    %v2523 = vadd.f32 0.0, %v2522
    %v2524 = vpop.f32.mrb[0].mxu0
    %v2525 = vpop.f32.mrb[0].mxu0
    %v2526 = vadd.f32 0.0, %v2525
    %v2527 = vpop.f32.mrb[0].mxu0
    %2528 = vdwg.mxu0
    %v2529 = vadd.f32 %v2473, %v2523
    %v2530 = vadd.f32 %v2474, %v2526
    %v2531 = vadd.f32 %v1577, %v2529
    %v2532 = vadd.f32 %v1578, %v2530
    %s2533 = scalar_lea.vmem %s16, 1
    %v2534 = vld [vmem:[%s2533] sm:$0x1]
    %s2535 = scalar_lea.vmem %s17, 1
    %v2536 = vld [vmem:[%s2535] sm:$0x1]
    %v2537 = vsel %vm290, %v2531, 0.0
    %2538 = vadd.xlane.f32.xlu0 %v2537
    %v2539 = vpop.xlane.xlu0 %2538
    %v2540 = vsel %vm290, %v2532, 0.0
    %2541 = vadd.xlane.f32.xlu0 %v2540
    %v2542 = vpop.xlane.xlu0 %2541
    %v2543 = vmul.f32 %v2539, %v297
    %v2544 = vmul.f32 %v2542, %v297
    %v2545 = vsub.f32 %v2531, %v2543
    %v2546 = vsub.f32 %v2532, %v2544
    %v2547 = vmul.f32 %v2545, %v2545
    %v2548 = vmul.f32 %v2546, %v2546
    %v2549 = vsel %vm290, %v2547, 0.0
    %2550 = vadd.xlane.f32.xlu0 %v2549
    %v2551 = vpop.xlane.xlu0 %2550
    %v2552 = vsel %vm290, %v2548, 0.0
    %2553 = vadd.xlane.f32.xlu0 %v2552
    %v2554 = vpop.xlane.xlu0 %2553
    %v2555 = vmul.f32 %v2551, %v297
    %v2556 = vmul.f32 %v2554, %v297
    %v2557 = vadd.f32 %v2555, 1e-05
    %v2558 = vadd.f32 %v2556, 1e-05
    %v2559 = vrsqrt.pop %v2557
    %v2560 = vrsqrt.pop %v2558
    %v2561 = vmul.f32 %v2545, %v2559
    %v2562 = vmul.f32 %v2546, %v2560
    %v2564 = vlaneseq
    %v2565 = vshrl.u32 %v2564, 7
    %v2566 = vsub.s32 0, %v2565
    %v2567 = vrot.slane %v2534, %v2566
    %v2569 = vmul.f32 %v2561, %v2567
    %v2570 = vmul.f32 %v2562, %v2567
    %v2572 = vlaneseq
    %v2573 = vshrl.u32 %v2572, 7
    %v2574 = vsub.s32 0, %v2573
    %v2575 = vrot.slane %v2536, %v2574
    %v2577 = vadd.f32 %v2569, %v2575
    %v2578 = vadd.f32 %v2570, %v2575
    %v2579 = vpack.c.bf16 %v2578, %v2577
    %s2580 = scalar_lea.vmem %s18, 16
    %v2581 = vld [vmem:[%s2580] sm:$0xf]
    %v2582 = vld [vmem:[%s2580 + $0x4] sm:$0xf]
    %v2583 = vld [vmem:[%s2580 + $0x8] sm:$0xf]
    %v2584 = vld [vmem:[%s2580 + $0xc] sm:$0xf]
    %s2585 = scalar_lea.vmem %s19, 1
    %v2586 = vld [vmem:[%s2585] sm:$0x1]
    %v2588 = vlaneseq
    %v2589 = vshrl.u32 %v2588, 7
    %v2590 = vsub.s32 0, %v2589
    %v2591 = vrot.slane %v2586, %v2590
    %v2597 = vunpack.c.l.b16 %v2581
    %v2598 = vunpack.c.l.b16 %v2582
    %v2599 = vunpack.c.l.b16 %v2583
    %v2600 = vunpack.c.l.b16 %v2584
    %v2601 = vpack.c.b16 %v2598, %v2597
    %v2602 = vpack.c.b16 %v2600, %v2599
    %v2606 = vsel %vm290, %v2579, 0
    %2608 = vmatprep.subr.bf16.mxu0 0
    %2609 = vmatpush1.bf16.msra.mxu0 %v2601
    %2610 = vmatprep.subr.bf16.mxu0 0
    %2611 = vmatpush1.bf16.msra.mxu0 %v2602
    %2612 = vmatprep.subr.bf16.mxu0 0
    %2613 = vmatpush1.bf16.msra.mxu0 0
    %2614 = vmatprep.subr.bf16.mxu0 0
    %2615 = vmatpush1.bf16.msra.mxu0 0
    %2616 = vmatprep.subr.bf16.mxu0 0
    %2617 = vmatpush1.bf16.msra.mxu0 0
    %2618 = vmatprep.subr.bf16.mxu0 0
    %2619 = vmatpush1.bf16.msra.mxu0 0
    %2620 = vmatprep.subr.bf16.mxu0 0
    %2621 = vmatpush1.bf16.msra.mxu0 0
    %2622 = vmatprep.subr.bf16.mxu0 0
    %2623 = vmatpush1.bf16.msra.mxu0 0
    %2624 = vmatprep.subr.bf16.mxu0 0
    %2625 = vmatpush1.bf16.msra.mxu0 0
    %2626 = vmatprep.subr.bf16.mxu0 0
    %2627 = vmatpush1.bf16.msra.mxu0 0
    %2628 = vmatprep.subr.bf16.mxu0 0
    %2629 = vmatpush1.bf16.msra.mxu0 0
    %2630 = vmatprep.subr.bf16.mxu0 0
    %2631 = vmatpush1.bf16.msra.mxu0 0
    %2632 = vmatprep.subr.bf16.mxu0 0
    %2633 = vmatpush1.bf16.msra.mxu0 0
    %2634 = vmatprep.subr.bf16.mxu0 0
    %2635 = vmatpush1.bf16.msra.mxu0 0
    %2636 = vmatprep.subr.bf16.mxu0 0
    %2637 = vmatpush1.bf16.msra.mxu0 0
    %2638 = vmatprep.subr.bf16.mxu0 0
    %2639 = vmatpush1.bf16.msra.mxu0 0
    %2640 = vmatprep.mubr.bf16.mxu0 0
    %2641 = vmatmul.mubr.bf16.gmra.mrb[0].mxu0 %v2606
    %v2642 = vpop.f32.mrb[0].mxu0
    %v2643 = vadd.f32 %v2591, %v2642
    %v2644 = vpop.f32.mrb[0].mxu0
    %v2645 = vpop.f32.mrb[0].mxu0
    %v2646 = vadd.f32 %v2591, %v2645
    %v2647 = vpop.f32.mrb[0].mxu0
    %2648 = vdwg.mxu0
    %v2649 = vmul.f32 %v2643, 0.5
    %v2650 = vmul.f32 %v2646, 0.5
    %v2651 = vmul.f32 %v2643, 0.044715
    %v2652 = vmul.f32 %v2646, 0.044715
    %v2653 = vmul.f32 %v2651, %v2643
    %v2654 = vmul.f32 %v2652, %v2646
    %v2655 = vmul.f32 %v2653, %v2643
    %v2656 = vmul.f32 %v2654, %v2646
    %v2657 = vadd.f32 %v2643, %v2655
    %v2658 = vadd.f32 %v2646, %v2656
    %v2659 = vmul.f32 %v2657, 0.7978846
    %v2660 = vmul.f32 %v2658, 0.7978846
    %v2661 = vtanh.pop %v2659
    %v2662 = vtanh.pop %v2660
    %v2663 = vadd.f32 %v2661, 1.0
    %v2664 = vadd.f32 %v2662, 1.0
    %v2665 = vmul.f32 %v2649, %v2663
    %v2666 = vmul.f32 %v2650, %v2664
    %v2667 = vpack.c.bf16 %v2666, %v2665
    %s2668 = scalar_lea.vmem %s20, 32
    %v2669 = vld [vmem:[%s2668] sm:$0xf]
    %v2670 = vld [vmem:[%s2668 + $0x4] sm:$0xf]
    %v2671 = vld [vmem:[%s2668 + $0x8] sm:$0xf]
    %v2672 = vld [vmem:[%s2668 + $0xc] sm:$0xf]
    %v2673 = vld [vmem:[%s2668 + $0x10] sm:$0xf]
    %v2674 = vld [vmem:[%s2668 + $0x14] sm:$0xf]
    %v2675 = vld [vmem:[%s2668 + $0x18] sm:$0xf]
    %v2676 = vld [vmem:[%s2668 + $0x1c] sm:$0xf]
    %s2677 = scalar_lea.vmem %s21, 1
    %v2678 = vld [vmem:[%s2677] sm:$0x1]
    %v2680 = vlaneseq
    %v2681 = vshrl.u32 %v2680, 7
    %v2682 = vsub.s32 0, %v2681
    %v2683 = vrot.slane %v2678, %v2682
    %v2693 = vunpack.c.l.b16 %v2669
    %v2694 = vunpack.c.l.b16 %v2670
    %v2695 = vunpack.c.l.b16 %v2671
    %v2696 = vunpack.c.l.b16 %v2672
    %v2697 = vunpack.c.l.b16 %v2673
    %v2698 = vunpack.c.l.b16 %v2674
    %v2699 = vunpack.c.l.b16 %v2675
    %v2700 = vunpack.c.l.b16 %v2676
    %v2701 = vpack.c.b16 %v2694, %v2693
    %v2702 = vpack.c.b16 %v2696, %v2695
    %v2703 = vpack.c.b16 %v2698, %v2697
    %v2704 = vpack.c.b16 %v2700, %v2699
    %v2710 = vsel %vm1488, %v2667, 0
    %2712 = vmatprep.subr.bf16.mxu0 0
    %2713 = vmatpush1.bf16.msra.mxu0 %v2701
    %2714 = vmatprep.subr.bf16.mxu0 0
    %2715 = vmatpush1.bf16.msra.mxu0 %v2702
    %2716 = vmatprep.subr.bf16.mxu0 0
    %2717 = vmatpush1.bf16.msra.mxu0 %v2703
    %2718 = vmatprep.subr.bf16.mxu0 0
    %2719 = vmatpush1.bf16.msra.mxu0 %v2704
    %2720 = vmatprep.subr.bf16.mxu0 0
    %2721 = vmatpush1.bf16.msra.mxu0 0
    %2722 = vmatprep.subr.bf16.mxu0 0
    %2723 = vmatpush1.bf16.msra.mxu0 0
    %2724 = vmatprep.subr.bf16.mxu0 0
    %2725 = vmatpush1.bf16.msra.mxu0 0
    %2726 = vmatprep.subr.bf16.mxu0 0
    %2727 = vmatpush1.bf16.msra.mxu0 0
    %2728 = vmatprep.subr.bf16.mxu0 0
    %2729 = vmatpush1.bf16.msra.mxu0 0
    %2730 = vmatprep.subr.bf16.mxu0 0
    %2731 = vmatpush1.bf16.msra.mxu0 0
    %2732 = vmatprep.subr.bf16.mxu0 0
    %2733 = vmatpush1.bf16.msra.mxu0 0
    %2734 = vmatprep.subr.bf16.mxu0 0
    %2735 = vmatpush1.bf16.msra.mxu0 0
    %2736 = vmatprep.subr.bf16.mxu0 0
    %2737 = vmatpush1.bf16.msra.mxu0 0
    %2738 = vmatprep.subr.bf16.mxu0 0
    %2739 = vmatpush1.bf16.msra.mxu0 0
    %2740 = vmatprep.subr.bf16.mxu0 0
    %2741 = vmatpush1.bf16.msra.mxu0 0
    %2742 = vmatprep.subr.bf16.mxu0 0
    %2743 = vmatpush1.bf16.msra.mxu0 0
    %2744 = vmatprep.mubr.bf16.mxu0 0
    %2745 = vmatmul.mubr.bf16.gmra.mrb[0].mxu0 %v2710
    %v2746 = vpop.f32.mrb[0].mxu0
    %v2747 = vadd.f32 %v2683, %v2746
    %v2748 = vpop.f32.mrb[0].mxu0
    %v2749 = vpop.f32.mrb[0].mxu0
    %v2750 = vadd.f32 %v2683, %v2749
    %v2751 = vpop.f32.mrb[0].mxu0
    %2752 = vdwg.mxu0
    %v2753 = vadd.f32 %v2577, %v2747
    %v2754 = vadd.f32 %v2578, %v2750
    %s2755 = scalar_lea.vmem %s22, 1
    %v2756 = vld [vmem:[%s2755] sm:$0x1]
    %s2757 = scalar_lea.vmem %s23, 1
    %v2758 = vld [vmem:[%s2757] sm:$0x1]
    %v2759 = vsel %vm290, %v2753, 0.0
    %2760 = vadd.xlane.f32.xlu0 %v2759
    %v2761 = vpop.xlane.xlu0 %2760
    %v2762 = vsel %vm290, %v2754, 0.0
    %2763 = vadd.xlane.f32.xlu0 %v2762
    %v2764 = vpop.xlane.xlu0 %2763
    %v2765 = vmul.f32 %v2761, %v297
    %v2766 = vmul.f32 %v2764, %v297
    %v2767 = vsub.f32 %v2753, %v2765
    %v2768 = vsub.f32 %v2754, %v2766
    %v2769 = vmul.f32 %v2767, %v2767
    %v2770 = vmul.f32 %v2768, %v2768
    %v2771 = vsel %vm290, %v2769, 0.0
    %2772 = vadd.xlane.f32.xlu0 %v2771
    %v2773 = vpop.xlane.xlu0 %2772
    %v2774 = vsel %vm290, %v2770, 0.0
    %2775 = vadd.xlane.f32.xlu0 %v2774
    %v2776 = vpop.xlane.xlu0 %2775
    %v2777 = vmul.f32 %v2773, %v297
    %v2778 = vmul.f32 %v2776, %v297
    %v2779 = vadd.f32 %v2777, 1e-05
    %v2780 = vadd.f32 %v2778, 1e-05
    %v2781 = vrsqrt.pop %v2779
    %v2782 = vrsqrt.pop %v2780
    %v2783 = vmul.f32 %v2767, %v2781
    %v2784 = vmul.f32 %v2768, %v2782
    %v2786 = vlaneseq
    %v2787 = vshrl.u32 %v2786, 7
    %v2788 = vsub.s32 0, %v2787
    %v2789 = vrot.slane %v2756, %v2788
    %v2791 = vmul.f32 %v2783, %v2789
    %v2792 = vmul.f32 %v2784, %v2789
    %v2794 = vlaneseq
    %v2795 = vshrl.u32 %v2794, 7
    %v2796 = vsub.s32 0, %v2795
    %v2797 = vrot.slane %v2758, %v2796
    %v2799 = vadd.f32 %v2791, %v2797
    %v2800 = vadd.f32 %v2792, %v2797
    %v2801 = vsel %vm290, %v2799, 0.0
    %v2802 = vrot.slane %v2801, 4
    %v2803 = vadd.f32 %v2801, %v2802
    %v2804 = vrot.slane %v2803, 2
    %v2805 = vadd.f32 %v2803, %v2804
    %v2806 = vrot.slane %v2805, 1
    %v2807 = vadd.f32 %v2805, %v2806
    %v2808 = vsel %vm290, %v2800, 0.0
    %v2809 = vrot.slane %v2808, 4
    %v2810 = vadd.f32 %v2808, %v2809
    %v2811 = vrot.slane %v2810, 2
    %v2812 = vadd.f32 %v2810, %v2811
    %v2813 = vrot.slane %v2812, 1
    %v2814 = vadd.f32 %v2812, %v2813
    %v2815 = vmul.f32 %v2807, 0.125
    %v2816 = vmul.f32 %v2814, 0.125
    %v2817 = vpack.c.bf16 %v2815, %v2815
    %v2818 = vpack.c.bf16 %v2816, %v2816
    %v2819 = vld [vmem:[%s24] sm:$0xf]
    %v2820 = vld [vmem:[%s24 + $0x4] sm:$0xf]
    %v2821 = vld [vmem:[%s24 + $0x8] sm:$0xf]
    %v2822 = vld [vmem:[%s24 + $0xc] sm:$0xf]
    %v2823 = vld [vmem:[%s25] sm:$0x1]
    %v2825 = vlaneseq
    %v2826 = vshrl.u32 %v2825, 7
    %v2827 = vsub.s32 0, %v2826
    %v2828 = vrot.slane %v2823, %v2827
    %v2832 = vunpack.c.l.b16 %v2817
    %v2833 = vunpack.c.l.b16 %v2818
    %vm2834 = vcmask 1041409
    %v2835 = vsel %vm2834, %v2833, %v2832
    %v2836 = vpack.c.b16 %v2835, %v2835
    %v2841 = vunpack.c.l.b16 %v2819
    %v2842 = vunpack.c.l.b16 %v2820
    %v2843 = vunpack.c.l.b16 %v2821
    %v2844 = vunpack.c.l.b16 %v2822
    %v2845 = vpack.c.b16 %v2842, %v2841
    %v2846 = vpack.c.b16 %v2844, %v2843
    %v2850 = vsel %vm290, %v2836, 0
    %2852 = vmatprep.subr.bf16.mxu0 0
    %2853 = vmatpush1.bf16.msra.mxu0 %v2845
    %2854 = vmatprep.subr.bf16.mxu0 0
    %2855 = vmatpush1.bf16.msra.mxu0 %v2846
    %2856 = vmatprep.subr.bf16.mxu0 0
    %2857 = vmatpush1.bf16.msra.mxu0 0
    %2858 = vmatprep.subr.bf16.mxu0 0
    %2859 = vmatpush1.bf16.msra.mxu0 0
    %2860 = vmatprep.subr.bf16.mxu0 0
    %2861 = vmatpush1.bf16.msra.mxu0 0
    %2862 = vmatprep.subr.bf16.mxu0 0
    %2863 = vmatpush1.bf16.msra.mxu0 0
    %2864 = vmatprep.subr.bf16.mxu0 0
    %2865 = vmatpush1.bf16.msra.mxu0 0
    %2866 = vmatprep.subr.bf16.mxu0 0
    %2867 = vmatpush1.bf16.msra.mxu0 0
    %2868 = vmatprep.subr.bf16.mxu0 0
    %2869 = vmatpush1.bf16.msra.mxu0 0
    %2870 = vmatprep.subr.bf16.mxu0 0
    %2871 = vmatpush1.bf16.msra.mxu0 0
    %2872 = vmatprep.subr.bf16.mxu0 0
    %2873 = vmatpush1.bf16.msra.mxu0 0
    %2874 = vmatprep.subr.bf16.mxu0 0
    %2875 = vmatpush1.bf16.msra.mxu0 0
    %2876 = vmatprep.subr.bf16.mxu0 0
    %2877 = vmatpush1.bf16.msra.mxu0 0
    %2878 = vmatprep.subr.bf16.mxu0 0
    %2879 = vmatpush1.bf16.msra.mxu0 0
    %2880 = vmatprep.subr.bf16.mxu0 0
    %2881 = vmatpush1.bf16.msra.mxu0 0
    %2882 = vmatprep.subr.bf16.mxu0 0
    %2883 = vmatpush1.bf16.msra.mxu0 0
    %2884 = vmatprep.mubr.bf16.mxu0 0
    %2885 = vmatmul.mubr.bf16.gmra.mrb[0].mxu0 %v2850
    %v2886 = vpop.f32.mrb[0].mxu0
    %v2887 = vadd.f32 %v2828, %v2886
    %v2888 = vpop.f32.mrb[0].mxu0
    %v2889 = vpop.f32.mrb[0].mxu0
    %v2890 = vpop.f32.mrb[0].mxu0
    %2891 = vdwg.mxu0
    %vm2892 = vcmask 17408
    %2893 = vst.msk [vmem:[#allocation2] sm:$0x3] %vm2892, %v2887
    // Predicated region
    $region106: #{roberta_classifier_forward.1} parent=1 // pred_check
      _
    $region107: #{roberta_classifier_forward.1} parent=1 // pred_check_branch
      %2895 = sbr.rel (0) target = $region109
    $region108: #{roberta_classifier_forward.1} parent=1 // pred_region
      %s2897 = ssub.s32 32, 32
      %2898 = vsyncadd [#allocation3], %s2897
      %s2900 = sshll.u32 [#allocation2], 4
      %s2901 = int_to_ptr.vmem [resolvable:$true] %s2900
      %2903 = dma.vmem_to_hbm [thread:$0]  %s2901, 32, %s26, [#allocation3]
    $region109: #{roberta_classifier_forward.1} parent=1 // pred_fallthru
      _
    // Predicated region
    $region110: #{roberta_classifier_forward.1} parent=1 // pred_check
      _
    $region111: #{roberta_classifier_forward.1} parent=1 // pred_check_branch
      %2905 = sbr.rel (0) target = $region113
    $region112: #{roberta_classifier_forward.1} parent=1 // pred_region
      %2906 = dma.done [#allocation3], 32
    $region113: #{roberta_classifier_forward.1} parent=1 // pred_fallthru
      _
    %2907 = vsyncpa [#allocation3], 1

</llo_original>
